<compile_context>
chip_gen: v5e
topology: v5e:2x2
jax: 0.10.0
libtpu: 0.0.40
codegen_flags: <defaults>
</compile_context>

<pallas_src>
import functools

import jax
import jax.numpy as jnp
from jax.experimental import pallas as pl
from jax.experimental.pallas import tpu as pltpu


# ----------------------------------------------------------------------------
# helpers
# ----------------------------------------------------------------------------
_MN_TILES = (512, 256, 128)       # matmul M / N tile candidates
_K_TILES = (1024, 512, 256, 128)  # matmul K tile candidates
_EW_TILES = (256, 128)            # elementwise / BN kernel M tile candidates


def _pick_tile(dim, candidates):
    """Largest candidate that divides `dim`, else the full dim (always legal)."""
    for c in candidates:
        if dim >= c and dim % c == 0:
            return c
    return dim


def _act(y, act):
    if act == "relu":
        return jnp.maximum(y, 0.0)
    if act == "leaky":
        return jnp.where(y >= 0.0, y, 0.2 * y)
    if act == "tanh":
        return jnp.tanh(y)
    return y


# ----------------------------------------------------------------------------
# Pallas kernels
# ----------------------------------------------------------------------------
def _gemm_kernel(*refs, act, use_bias):
    """Tiled GEMM with f32 accumulator; bias + activation fused on last K step."""
    if use_bias:
        x_ref, w_ref, b_ref, o_ref, acc_ref = refs
    else:
        x_ref, w_ref, o_ref, acc_ref = refs
        b_ref = None
    k = pl.program_id(2)

    @pl.when(k == 0)
    def _():
        acc_ref[...] = jnp.zeros_like(acc_ref)

    acc_ref[...] += jnp.dot(x_ref[...], w_ref[...],
                            preferred_element_type=jnp.float32)

    @pl.when(k == pl.num_programs(2) - 1)
    def _():
        y = acc_ref[...]
        if use_bias:
            y = y + b_ref[...]
        o_ref[...] = _act(y, act)


def matmul(x, w, b=None, *, act="none"):
    """out = act(x @ w [+ b]); bf16 MXU operands, f32 accumulate/output."""
    M, K = x.shape
    K2, N = w.shape
    assert K == K2
    tm = _pick_tile(M, _MN_TILES)
    tn = _pick_tile(N, _MN_TILES)
    tk = _pick_tile(K, _K_TILES)

    use_bias = b is not None
    in_specs = [
        pl.BlockSpec((tm, tk), lambda i, j, k: (i, k)),
        pl.BlockSpec((tk, tn), lambda i, j, k: (k, j)),
    ]
    args = [x.astype(jnp.bfloat16), w.astype(jnp.bfloat16)]
    if use_bias:
        in_specs.append(pl.BlockSpec((1, tn), lambda i, j, k: (0, j)))
        args.append(b.reshape(1, N).astype(jnp.float32))

    kernel = functools.partial(_gemm_kernel, act=act, use_bias=use_bias)
    return pl.pallas_call(
        kernel,
        out_shape=jax.ShapeDtypeStruct((M, N), jnp.float32),
        grid=(M // tm, N // tn, K // tk),
        in_specs=in_specs,
        out_specs=pl.BlockSpec((tm, tn), lambda i, j, k: (i, j)),
        scratch_shapes=[pltpu.VMEM((tm, tn), jnp.float32)],
        compiler_params=pltpu.CompilerParams(
            dimension_semantics=("parallel", "parallel", "arbitrary")),
    )(*args)


def _bn_sums_kernel(y_ref, s_ref):
    """Accumulate per-column [sum; sum of squares] over the M grid axis."""
    @pl.when(pl.program_id(0) == 0)
    def _():
        s_ref[...] = jnp.zeros_like(s_ref)

    y = y_ref[...]
    part = jnp.concatenate(
        [jnp.sum(y, axis=0, keepdims=True),
         jnp.sum(y * y, axis=0, keepdims=True)], axis=0)
    s_ref[...] += part


def bn_sums(y):
    M, N = y.shape
    tm = _pick_tile(M, _EW_TILES)
    return pl.pallas_call(
        _bn_sums_kernel,
        out_shape=jax.ShapeDtypeStruct((2, N), jnp.float32),
        grid=(M // tm,),
        in_specs=[pl.BlockSpec((tm, N), lambda i: (i, 0))],
        out_specs=pl.BlockSpec((2, N), lambda i: (0, 0)),
        compiler_params=pltpu.CompilerParams(
            dimension_semantics=("arbitrary",)),
    )(y)


def _bn_apply_kernel(y_ref, s_ref, o_ref, *, act):
    y = (y_ref[...] - s_ref[0:1, :]) * s_ref[1:2, :]
    o_ref[...] = _act(y, act)


def bn_apply(y, stats, act):
    M, N = y.shape
    tm = _pick_tile(M, _EW_TILES)
    return pl.pallas_call(
        functools.partial(_bn_apply_kernel, act=act),
        out_shape=jax.ShapeDtypeStruct((M, N), jnp.float32),
        grid=(M // tm,),
        in_specs=[pl.BlockSpec((tm, N), lambda i: (i, 0)),
                  pl.BlockSpec((2, N), lambda i: (0, 0))],
        out_specs=pl.BlockSpec((tm, N), lambda i: (i, 0)),
        compiler_params=pltpu.CompilerParams(
            dimension_semantics=("parallel",)),
    )(y, stats)


def bn_act_multi(parts, act, eps=1e-5):
    """Training-mode BatchNorm (gamma=1, beta=0) + activation over the union of
    `parts` (list of (M_i, N) arrays sharing channels N). Two-pass: Pallas sum
    reduction per part, tiny (2,N) combine in JAX, Pallas normalize/activate."""
    sums = [bn_sums(p) for p in parts]
    s = sums[0]
    for t in sums[1:]:
        s = s + t
    m_total = float(sum(p.shape[0] for p in parts))
    mean = s[0:1, :] / m_total
    var = s[1:2, :] / m_total - mean * mean          # biased var (torch training)
    rstd = jax.lax.rsqrt(var + eps)
    stats = jnp.concatenate([mean, rstd], axis=0)    # (2, N)
    return [bn_apply(p, stats, act) for p in parts]


def _reparam_gemm_kernel(mu_ref, lv_ref, eps_ref, w_ref, b_ref, o_ref, *, act):
    # z = mu + eps * exp(0.5*logvar), fused straight into the d1 GEMM prologue.
    z = mu_ref[...] + eps_ref[...] * jnp.exp(0.5 * lv_ref[...])
    y = jnp.dot(z.astype(jnp.bfloat16), w_ref[...],
                preferred_element_type=jnp.float32)
    o_ref[...] = _act(y + b_ref[...], act)


def reparam_gemm(mu, logvar, eps, w, b, *, act):
    B, Z = mu.shape
    Z2, N = w.shape
    assert Z == Z2
    tn = _pick_tile(N, _MN_TILES)
    return pl.pallas_call(
        functools.partial(_reparam_gemm_kernel, act=act),
        out_shape=jax.ShapeDtypeStruct((B, N), jnp.float32),
        grid=(N // tn,),
        in_specs=[pl.BlockSpec((B, Z), lambda j: (0, 0)),
                  pl.BlockSpec((B, Z), lambda j: (0, 0)),
                  pl.BlockSpec((B, Z), lambda j: (0, 0)),
                  pl.BlockSpec((Z, tn), lambda j: (0, j)),
                  pl.BlockSpec((1, tn), lambda j: (0, j))],
        out_specs=pl.BlockSpec((B, tn), lambda j: (0, j)),
        compiler_params=pltpu.CompilerParams(
            dimension_semantics=("parallel",)),
    )(mu.astype(jnp.float32), logvar.astype(jnp.float32),
      eps.astype(jnp.float32), w.astype(jnp.bfloat16),
      b.reshape(1, N).astype(jnp.float32))


# ----------------------------------------------------------------------------
# JAX glue: NHWC im2col, conv / transposed-conv wrappers (data movement only)
# ----------------------------------------------------------------------------
def _im2col_nhwc(x, k, stride, pad):
    """x: (B,H,W,C) -> (B*OH*OW, k*k*C) patches; column order (kh, kw, C)."""
    B, H, W, C = x.shape
    xp = jnp.pad(x, ((0, 0), (pad, pad), (pad, pad), (0, 0)))
    OH = (H + 2 * pad - k) // stride + 1
    OW = (W + 2 * pad - k) // stride + 1
    cols = []
    for kh in range(k):
        for kw in range(k):
            cols.append(xp[:, kh:kh + stride * OH:stride,
                           kw:kw + stride * OW:stride, :])
    p = jnp.concatenate(cols, axis=-1)               # (B, OH, OW, k*k*C)
    return p.reshape(B * OH * OW, k * k * C), OH, OW


def conv2d_nhwc(x, w, b, *, stride, pad, bn, act):
    """PyTorch-semantics Conv2d on NHWC. w: (Cout, Cin, K, K)."""
    Cout, Cin, K, _ = w.shape
    B = x.shape[0]
    patches, OH, OW = _im2col_nhwc(x, K, stride, pad)
    wmat = jnp.transpose(w, (2, 3, 1, 0)).reshape(K * K * Cin, Cout)
    if bn:
        # bias is exactly cancelled by the BN mean subtraction -> skip it.
        y = matmul(patches, wmat, None, act="none")
        y = bn_act_multi([y], act)[0]
    else:
        y = matmul(patches, wmat, b, act=act)
    return y.reshape(B, OH, OW, Cout)


def conv_transpose2d_nhwc(x, w, b, *, bn, act):
    """PyTorch ConvTranspose2d(K=4, stride=2, pad=1) on NHWC, decomposed into the
    4 output sub-pixel phases (each a 2x2-tap GEMM on the undilated input)."""
    B, H, W, Cin = x.shape
    Cin_w, Cout, K, _ = w.shape
    assert K == 4 and Cin == Cin_w
    xp = jnp.pad(x, ((0, 0), (1, 1), (1, 1), (0, 0)))

    phases = []
    for py in range(2):
        for px in range(2):
            cols = []
            for a in range(2):
                for c in range(2):
                    cols.append(xp[:, py + a:py + a + H, px + c:px + c + W, :])
            patches = jnp.concatenate(cols, axis=-1).reshape(B * H * W, 4 * Cin)
            # taps (a, c) use kernel positions kh = 3 - py - 2a, kw = 3 - px - 2c
            wsub = w[:, :, [3 - py, 1 - py], :][:, :, :, [3 - px, 1 - px]]
            wmat = jnp.transpose(wsub, (2, 3, 0, 1)).reshape(4 * Cin, Cout)
            if bn:
                phases.append(matmul(patches, wmat, None, act="none"))
            else:
                phases.append(matmul(patches, wmat, b, act=act))

    if bn:
        phases = bn_act_multi(phases, act)   # stats over all 4 phases == full output

    ys = [p.reshape(B, H, W, Cout) for p in phases]          # order py*2+px
    y = jnp.stack(ys, axis=3).reshape(B, H, W, 2, 2, Cout)
    y = jnp.transpose(y, (0, 1, 3, 2, 4, 5)).reshape(B, 2 * H, 2 * W, Cout)
    return y


# ----------------------------------------------------------------------------
# VAE parameters + forward (matches VAE.forward in training mode)
# ----------------------------------------------------------------------------
def init_vae_params(key, zsize, layer_count, channels, d=128):
    params = {}
    keys = iter(jax.random.split(key, 4 * layer_count + 8))
    mul, inputs = 1, channels
    for i in range(layer_count):
        cout = d * mul
        params[f"conv{i + 1}_w"] = 0.02 * jax.random.normal(
            next(keys), (cout, inputs, 4, 4), jnp.float32)
        params[f"conv{i + 1}_b"] = jnp.zeros((cout,), jnp.float32)
        inputs, mul = cout, mul * 2
    d_max = inputs
    params["fc1_w"] = 0.02 * jax.random.normal(next(keys), (zsize, d_max * 16), jnp.float32)
    params["fc1_b"] = jnp.zeros((zsize,), jnp.float32)
    params["fc2_w"] = 0.02 * jax.random.normal(next(keys), (zsize, d_max * 16), jnp.float32)
    params["fc2_b"] = jnp.zeros((zsize,), jnp.float32)
    params["d1_w"] = 0.02 * jax.random.normal(next(keys), (d_max * 16, zsize), jnp.float32)
    params["d1_b"] = jnp.zeros((d_max * 16,), jnp.float32)
    mul = inputs // d // 2
    for i in range(1, layer_count):
        cout = d * mul
        params[f"deconv{i + 1}_w"] = 0.02 * jax.random.normal(
            next(keys), (inputs, cout, 4, 4), jnp.float32)
        params[f"deconv{i + 1}_b"] = jnp.zeros((cout,), jnp.float32)
        inputs, mul = cout, mul // 2
    params[f"deconv{layer_count + 1}_w"] = 0.02 * jax.random.normal(
        next(keys), (inputs, channels, 4, 4), jnp.float32)
    params[f"deconv{layer_count + 1}_b"] = jnp.zeros((channels,), jnp.float32)
    return params, d_max


def vae_forward(params, x, eps, *, zsize, layer_count, d_max):
    B = x.shape[0]
    # ---- encode (NHWC internally) ----
    h = jnp.transpose(x, (0, 2, 3, 1))
    for i in range(layer_count):
        h = conv2d_nhwc(h, params[f"conv{i + 1}_w"], params[f"conv{i + 1}_b"],
                        stride=2, pad=1, bn=True, act="relu")
    # torch .view flattens NCHW -> flatten in (C, H, W) order (tiny transpose).
    h = jnp.transpose(h, (0, 3, 1, 2)).reshape(B, d_max * 16)
    # fused fc1 + fc2 (single read of h)
    w_cat = jnp.concatenate([params["fc1_w"].T, params["fc2_w"].T], axis=1)
    b_cat = jnp.concatenate([params["fc1_b"], params["fc2_b"]], axis=0)
    hz = matmul(h, w_cat, b_cat, act="none")
    mu, logvar = hz[:, :zsize], hz[:, zsize:]
    mu_s = jnp.squeeze(mu)          # matches torch .squeeze() (drops dim if B==1)
    logvar_s = jnp.squeeze(logvar)
    # ---- reparameterize (training mode) + d1 + leaky, fused into one kernel ----
    xr = reparam_gemm(mu.reshape(-1, zsize), logvar.reshape(-1, zsize),
                      eps.reshape(-1, zsize), params["d1_w"].T, params["d1_b"],
                      act="leaky")
    xr = jnp.transpose(xr.reshape(-1, d_max, 4, 4), (0, 2, 3, 1))   # NHWC
    # ---- decode ----
    for i in range(1, layer_count):
        xr = conv_transpose2d_nhwc(xr, params[f"deconv{i + 1}_w"],
                                   params[f"deconv{i + 1}_b"],
                                   bn=True, act="leaky")
    xr = conv_transpose2d_nhwc(xr, params[f"deconv{layer_count + 1}_w"],
                               params[f"deconv{layer_count + 1}_b"],
                               bn=False, act="tanh")
    return jnp.transpose(xr, (0, 3, 1, 2)), mu_s, logvar_s


if __name__ == "__main__":
    zsize, layer_count, channels, B = 32, 2, 3, 2
    H = 4 * (2 ** layer_count)          # input spatial implied by fc1 (d_max*4*4)
    key = jax.random.PRNGKey(0)
    k_param, k_x, k_eps = jax.random.split(key, 3)
    params, d_max = init_vae_params(k_param, zsize, layer_count, channels)
    x = jax.random.normal(k_x, (B, channels, H, H), jnp.float32)
    eps = jax.random.normal(k_eps, (B, zsize), jnp.float32)

    fwd = jax.jit(functools.partial(vae_forward, zsize=zsize,
                                    layer_count=layer_count, d_max=d_max))
    recon, mu, logvar = fwd(params, x, eps)
    jax.block_until_ready((recon, mu, logvar))
    assert recon.shape == (B, channels, H, H)
    assert mu.shape == (B, zsize) and logvar.shape == (B, zsize)
    print("KERNEL_OK")
</pallas_src>

<mosaic_0001>
module attributes {stable_mosaic.version = 11 : i64} {
  func.func @_bn_sums_kernel(%arg0: i32, %arg1: memref<128x128xf32, #tpu.memory_space<vmem>>, %arg2: memref<2x128xf32, #tpu.memory_space<vmem>>) attributes {dimension_semantics = [#tpu.dimension_semantics<arbitrary>], iteration_bounds = array<i64: 1>, scalar_prefetch = 0 : i64, scratch_operands = 0 : i64, tpu.core_type = #tpu.core_type<tc>, window_params = [{transform_indices = @transform_0, window_bounds = array<i64: 128, 128>}, {pipeline_mode = #tpu.pipeline_mode<synchronous>, transform_indices = @transform_1, window_bounds = array<i64: 2, 128>}]} {
    %c0_i32 = arith.constant 0 : i32
    %0 = arith.cmpi eq, %arg0, %c0_i32 : i32
    %1 = arith.extui %0 : i1 to i32
    %c0_i32_0 = arith.constant 0 : i32
    %2 = arith.cmpi ne, %1, %c0_i32_0 : i32
    scf.if %2 {
      %cst_7 = arith.constant 0.000000e+00 : f32
      %13 = vector.broadcast %cst_7 : f32 to vector<2x128xf32>
      %c0_8 = arith.constant 0 : index
      %c0_9 = arith.constant 0 : index
      %14 = vector.load %arg2[%c0_8, %c0_9] : memref<2x128xf32, #tpu.memory_space<vmem>>, vector<2x128xf32>
      tpu.vector_store %arg2[%c0_8, %c0_9], %13 {strides = array<i32>} : memref<2x128xf32, #tpu.memory_space<vmem>>, vector<2x128xf32>,
    } else {
    }
    %c0 = arith.constant 0 : index
    %c0_1 = arith.constant 0 : index
    %3 = vector.load %arg1[%c0, %c0_1] : memref<128x128xf32, #tpu.memory_space<vmem>>, vector<128x128xf32>
    %cst = arith.constant dense<0.000000e+00> : vector<128xf32>
    %4 = vector.multi_reduction <add>, %3, %cst [0] : vector<128x128xf32> to vector<128xf32>
    %5 = vector.shape_cast %4 : vector<128xf32> to vector<1x128xf32>
    %6 = arith.mulf %3, %3 : vector<128x128xf32>
    %cst_2 = arith.constant dense<0.000000e+00> : vector<128xf32>
    %7 = vector.multi_reduction <add>, %6, %cst_2 [0] : vector<128x128xf32> to vector<128xf32>
    %8 = vector.shape_cast %7 : vector<128xf32> to vector<1x128xf32>
    %9 = tpu.concatenate %5, %8 in 0 : vector<1x128xf32>, vector<1x128xf32> -> vector<2x128xf32>
    %c0_3 = arith.constant 0 : index
    %c0_4 = arith.constant 0 : index
    %10 = vector.load %arg2[%c0_3, %c0_4] : memref<2x128xf32, #tpu.memory_space<vmem>>, vector<2x128xf32>
    %11 = arith.addf %10, %9 : vector<2x128xf32>
    %c0_5 = arith.constant 0 : index
    %c0_6 = arith.constant 0 : index
    %12 = vector.load %arg2[%c0_5, %c0_6] : memref<2x128xf32, #tpu.memory_space<vmem>>, vector<2x128xf32>
    tpu.vector_store %arg2[%c0_5, %c0_6], %11 {strides = array<i32>} : memref<2x128xf32, #tpu.memory_space<vmem>>, vector<2x128xf32>,
    return
  }
  func.func @transform_0(%arg0: i32) -> (i32, i32) {
    %c0_i32 = arith.constant 0 : i32
    %c0_i32_0 = arith.constant 0 : i32
    return %arg0, %c0_i32 : i32, i32
  }
  func.func @transform_1(%arg0: i32) -> (i32, i32) {
    %c0_i32 = arith.constant 0 : i32
    %c0_i32_0 = arith.constant 0 : i32
    %c0_i32_1 = arith.constant 0 : i32
    return %c0_i32, %c0_i32_0 : i32, i32
  }
}

module attributes {stable_mosaic.version = 11 : i64} {
  func.func @_gemm_kernel(%arg0: i32, %arg1: i32, %arg2: i32, %arg3: memref<128x48xbf16, #tpu.memory_space<vmem>>, %arg4: memref<48x128xbf16, #tpu.memory_space<vmem>>, %arg5: memref<128x128xf32, #tpu.memory_space<vmem>>, %arg6: memref<128x128xf32, #tpu.memory_space<vmem>>) attributes {dimension_semantics = [#tpu.dimension_semantics<parallel>, #tpu.dimension_semantics<parallel>, #tpu.dimension_semantics<arbitrary>], iteration_bounds = array<i64: 1, 1, 1>, scalar_prefetch = 0 : i64, scratch_operands = 1 : i64, tpu.core_type = #tpu.core_type<tc>, window_params = [{transform_indices = @transform_0, window_bounds = array<i64: 128, 48>}, {transform_indices = @transform_1, window_bounds = array<i64: 48, 128>}, {transform_indices = @transform_2, window_bounds = array<i64: 128, 128>}]} {
    %c0_i32 = arith.constant 0 : i32
    %0 = arith.cmpi eq, %arg2, %c0_i32 : i32
    %1 = arith.extui %0 : i1 to i32
    %c0_i32_0 = arith.constant 0 : i32
    %2 = arith.cmpi ne, %1, %c0_i32_0 : i32
    scf.if %2 {
      %cst_10 = arith.constant 0.000000e+00 : f32
      %12 = vector.broadcast %cst_10 : f32 to vector<128x128xf32>
      %c0_11 = arith.constant 0 : index
      %c0_12 = arith.constant 0 : index
      %13 = vector.load %arg6[%c0_11, %c0_12] : memref<128x128xf32, #tpu.memory_space<vmem>>, vector<128x128xf32>
      tpu.vector_store %arg6[%c0_11, %c0_12], %12 {strides = array<i32>} : memref<128x128xf32, #tpu.memory_space<vmem>>, vector<128x128xf32>,
    } else {
    }
    %c0 = arith.constant 0 : index
    %c0_1 = arith.constant 0 : index
    %3 = vector.load %arg6[%c0, %c0_1] : memref<128x128xf32, #tpu.memory_space<vmem>>, vector<128x128xf32>
    %c0_2 = arith.constant 0 : index
    %c0_3 = arith.constant 0 : index
    %4 = vector.load %arg3[%c0_2, %c0_3] : memref<128x48xbf16, #tpu.memory_space<vmem>>, vector<128x48xbf16>
    %c0_4 = arith.constant 0 : index
    %c0_5 = arith.constant 0 : index
    %5 = vector.load %arg4[%c0_4, %c0_5] : memref<48x128xbf16, #tpu.memory_space<vmem>>, vector<48x128xbf16>
    %cst = arith.constant dense<0.000000e+00> : vector<128x128xf32>
    %6 = tpu.matmul %4, %5, %cst {dimension_numbers = #tpu.dot_dimension_numbers<[1], [0], [0], [1], [0, 0, 1, 1], [], []>} : vector<128x48xbf16>, vector<48x128xbf16>, vector<128x128xf32> -> vector<128x128xf32>
    %7 = arith.addf %3, %6 : vector<128x128xf32>
    %c0_6 = arith.constant 0 : index
    %c0_7 = arith.constant 0 : index
    %8 = vector.load %arg6[%c0_6, %c0_7] : memref<128x128xf32, #tpu.memory_space<vmem>>, vector<128x128xf32>
    tpu.vector_store %arg6[%c0_6, %c0_7], %7 {strides = array<i32>} : memref<128x128xf32, #tpu.memory_space<vmem>>, vector<128x128xf32>,
    %c0_i32_8 = arith.constant 0 : i32
    %9 = arith.cmpi eq, %arg2, %c0_i32_8 : i32
    %10 = arith.extui %9 : i1 to i32
    %c0_i32_9 = arith.constant 0 : i32
    %11 = arith.cmpi ne, %10, %c0_i32_9 : i32
    scf.if %11 {
      %c0_10 = arith.constant 0 : index
      %c0_11 = arith.constant 0 : index
      %12 = vector.load %arg6[%c0_10, %c0_11] : memref<128x128xf32, #tpu.memory_space<vmem>>, vector<128x128xf32>
      %c0_12 = arith.constant 0 : index
      %c0_13 = arith.constant 0 : index
      %13 = vector.load %arg5[%c0_12, %c0_13] : memref<128x128xf32, #tpu.memory_space<vmem>>, vector<128x128xf32>
      tpu.vector_store %arg5[%c0_12, %c0_13], %12 {strides = array<i32>} : memref<128x128xf32, #tpu.memory_space<vmem>>, vector<128x128xf32>,
    } else {
    }
    return
  }
  func.func @transform_0(%arg0: i32, %arg1: i32, %arg2: i32) -> (i32, i32) {
    %c0_i32 = arith.constant 0 : i32
    return %arg0, %arg2 : i32, i32
  }
  func.func @transform_1(%arg0: i32, %arg1: i32, %arg2: i32) -> (i32, i32) {
    %c0_i32 = arith.constant 0 : i32
    return %arg2, %arg1 : i32, i32
  }
  func.func @transform_2(%arg0: i32, %arg1: i32, %arg2: i32) -> (i32, i32) {
    %c0_i32 = arith.constant 0 : i32
    return %arg0, %arg1 : i32, i32
  }
}

module attributes {stable_mosaic.version = 11 : i64} {
  func.func @_bn_apply_kernel(%arg0: i32, %arg1: memref<128x128xf32, #tpu.memory_space<vmem>>, %arg2: memref<2x128xf32, #tpu.memory_space<vmem>>, %arg3: memref<128x128xf32, #tpu.memory_space<vmem>>) attributes {dimension_semantics = [#tpu.dimension_semantics<parallel>], iteration_bounds = array<i64: 1>, scalar_prefetch = 0 : i64, scratch_operands = 0 : i64, tpu.core_type = #tpu.core_type<tc>, window_params = [{transform_indices = @transform_0, window_bounds = array<i64: 128, 128>}, {pipeline_mode = #tpu.pipeline_mode<synchronous>, transform_indices = @transform_1, window_bounds = array<i64: 2, 128>}, {transform_indices = @transform_2, window_bounds = array<i64: 128, 128>}]} {
    %c0 = arith.constant 0 : index
    %c0_0 = arith.constant 0 : index
    %0 = vector.load %arg1[%c0, %c0_0] : memref<128x128xf32, #tpu.memory_space<vmem>>, vector<128x128xf32>
    %c0_1 = arith.constant 0 : index
    %c0_2 = arith.constant 0 : index
    %1 = vector.load %arg2[%c0_1, %c0_2] : memref<2x128xf32, #tpu.memory_space<vmem>>, vector<1x128xf32>
    %2 = vector.broadcast %1 : vector<1x128xf32> to vector<128x128xf32>
    %3 = arith.subf %0, %2 : vector<128x128xf32>
    %c1 = arith.constant 1 : index
    %c0_3 = arith.constant 0 : index
    %4 = vector.load %arg2[%c1, %c0_3] : memref<2x128xf32, #tpu.memory_space<vmem>>, vector<1x128xf32>
    %5 = vector.broadcast %4 : vector<1x128xf32> to vector<128x128xf32>
    %6 = arith.mulf %3, %5 : vector<128x128xf32>
    %cst = arith.constant 0.000000e+00 : f32
    %7 = vector.broadcast %cst : f32 to vector<128x128xf32>
    %8 = arith.maximumf %6, %7 : vector<128x128xf32>
    %c0_4 = arith.constant 0 : index
    %c0_5 = arith.constant 0 : index
    %9 = vector.load %arg3[%c0_4, %c0_5] : memref<128x128xf32, #tpu.memory_space<vmem>>, vector<128x128xf32>
    tpu.vector_store %arg3[%c0_4, %c0_5], %8 {strides = array<i32>} : memref<128x128xf32, #tpu.memory_space<vmem>>, vector<128x128xf32>,
    return
  }
  func.func @transform_0(%arg0: i32) -> (i32, i32) {
    %c0_i32 = arith.constant 0 : i32
    %c0_i32_0 = arith.constant 0 : i32
    return %arg0, %c0_i32 : i32, i32
  }
  func.func @transform_1(%arg0: i32) -> (i32, i32) {
    %c0_i32 = arith.constant 0 : i32
    %c0_i32_0 = arith.constant 0 : i32
    %c0_i32_1 = arith.constant 0 : i32
    return %c0_i32, %c0_i32_0 : i32, i32
  }
  func.func @transform_2(%arg0: i32) -> (i32, i32) {
    %c0_i32 = arith.constant 0 : i32
    %c0_i32_0 = arith.constant 0 : i32
    return %arg0, %c0_i32 : i32, i32
  }
}

module attributes {stable_mosaic.version = 11 : i64} {
  func.func @_gemm_kernel(%arg0: i32, %arg1: i32, %arg2: i32, %arg3: memref<32x1024xbf16, #tpu.memory_space<vmem>>, %arg4: memref<1024x256xbf16, #tpu.memory_space<vmem>>, %arg5: memref<32x256xf32, #tpu.memory_space<vmem>>, %arg6: memref<32x256xf32, #tpu.memory_space<vmem>>) attributes {dimension_semantics = [#tpu.dimension_semantics<parallel>, #tpu.dimension_semantics<parallel>, #tpu.dimension_semantics<arbitrary>], iteration_bounds = array<i64: 1, 1, 2>, scalar_prefetch = 0 : i64, scratch_operands = 1 : i64, tpu.core_type = #tpu.core_type<tc>, window_params = [{transform_indices = @transform_0, window_bounds = array<i64: 32, 1024>}, {transform_indices = @transform_1, window_bounds = array<i64: 1024, 256>}, {transform_indices = @transform_2, window_bounds = array<i64: 32, 256>}]} {
    %c0_i32 = arith.constant 0 : i32
    %0 = arith.cmpi eq, %arg2, %c0_i32 : i32
    %1 = arith.extui %0 : i1 to i32
    %c0_i32_0 = arith.constant 0 : i32
    %2 = arith.cmpi ne, %1, %c0_i32_0 : i32
    scf.if %2 {
      %cst_9 = arith.constant 0.000000e+00 : f32
      %12 = vector.broadcast %cst_9 : f32 to vector<32x256xf32>
      %c0_10 = arith.constant 0 : index
      %c0_11 = arith.constant 0 : index
      %13 = vector.load %arg6[%c0_10, %c0_11] : memref<32x256xf32, #tpu.memory_space<vmem>>, vector<32x256xf32>
      tpu.vector_store %arg6[%c0_10, %c0_11], %12 {strides = array<i32>} : memref<32x256xf32, #tpu.memory_space<vmem>>, vector<32x256xf32>,
    } else {
    }
    %c0 = arith.constant 0 : index
    %c0_1 = arith.constant 0 : index
    %3 = vector.load %arg6[%c0, %c0_1] : memref<32x256xf32, #tpu.memory_space<vmem>>, vector<32x256xf32>
    %c0_2 = arith.constant 0 : index
    %c0_3 = arith.constant 0 : index
    %4 = vector.load %arg3[%c0_2, %c0_3] : memref<32x1024xbf16, #tpu.memory_space<vmem>>, vector<32x1024xbf16>
    %c0_4 = arith.constant 0 : index
    %c0_5 = arith.constant 0 : index
    %5 = vector.load %arg4[%c0_4, %c0_5] : memref<1024x256xbf16, #tpu.memory_space<vmem>>, vector<1024x256xbf16>
    %cst = arith.constant dense<0.000000e+00> : vector<32x256xf32>
    %6 = tpu.matmul %4, %5, %cst {dimension_numbers = #tpu.dot_dimension_numbers<[1], [0], [0], [1], [0, 0, 1, 1], [], []>} : vector<32x1024xbf16>, vector<1024x256xbf16>, vector<32x256xf32> -> vector<32x256xf32>
    %7 = arith.addf %3, %6 : vector<32x256xf32>
    %c0_6 = arith.constant 0 : index
    %c0_7 = arith.constant 0 : index
    %8 = vector.load %arg6[%c0_6, %c0_7] : memref<32x256xf32, #tpu.memory_space<vmem>>, vector<32x256xf32>
    tpu.vector_store %arg6[%c0_6, %c0_7], %7 {strides = array<i32>} : memref<32x256xf32, #tpu.memory_space<vmem>>, vector<32x256xf32>,
    %c1_i32 = arith.constant 1 : i32
    %9 = arith.cmpi eq, %arg2, %c1_i32 : i32
    %10 = arith.extui %9 : i1 to i32
    %c0_i32_8 = arith.constant 0 : i32
    %11 = arith.cmpi ne, %10, %c0_i32_8 : i32
    scf.if %11 {
      %c0_9 = arith.constant 0 : index
      %c0_10 = arith.constant 0 : index
      %12 = vector.load %arg6[%c0_9, %c0_10] : memref<32x256xf32, #tpu.memory_space<vmem>>, vector<32x256xf32>
      %c0_11 = arith.constant 0 : index
      %c0_12 = arith.constant 0 : index
      %13 = vector.load %arg5[%c0_11, %c0_12] : memref<32x256xf32, #tpu.memory_space<vmem>>, vector<32x256xf32>
      tpu.vector_store %arg5[%c0_11, %c0_12], %12 {strides = array<i32>} : memref<32x256xf32, #tpu.memory_space<vmem>>, vector<32x256xf32>,
    } else {
    }
    return
  }
  func.func @transform_0(%arg0: i32, %arg1: i32, %arg2: i32) -> (i32, i32) {
    %c0_i32 = arith.constant 0 : i32
    return %arg0, %arg2 : i32, i32
  }
  func.func @transform_1(%arg0: i32, %arg1: i32, %arg2: i32) -> (i32, i32) {
    %c0_i32 = arith.constant 0 : i32
    return %arg2, %arg1 : i32, i32
  }
  func.func @transform_2(%arg0: i32, %arg1: i32, %arg2: i32) -> (i32, i32) {
    %c0_i32 = arith.constant 0 : i32
    return %arg0, %arg1 : i32, i32
  }
}

module attributes {stable_mosaic.version = 11 : i64} {
  func.func @_bn_sums_kernel(%arg0: i32, %arg1: memref<32x256xf32, #tpu.memory_space<vmem>>, %arg2: memref<2x256xf32, #tpu.memory_space<vmem>>) attributes {dimension_semantics = [#tpu.dimension_semantics<arbitrary>], iteration_bounds = array<i64: 1>, scalar_prefetch = 0 : i64, scratch_operands = 0 : i64, tpu.core_type = #tpu.core_type<tc>, window_params = [{transform_indices = @transform_0, window_bounds = array<i64: 32, 256>}, {pipeline_mode = #tpu.pipeline_mode<synchronous>, transform_indices = @transform_1, window_bounds = array<i64: 2, 256>}]} {
    %c0_i32 = arith.constant 0 : i32
    %0 = arith.cmpi eq, %arg0, %c0_i32 : i32
    %1 = arith.extui %0 : i1 to i32
    %c0_i32_0 = arith.constant 0 : i32
    %2 = arith.cmpi ne, %1, %c0_i32_0 : i32
    scf.if %2 {
      %cst_7 = arith.constant 0.000000e+00 : f32
      %13 = vector.broadcast %cst_7 : f32 to vector<2x256xf32>
      %c0_8 = arith.constant 0 : index
      %c0_9 = arith.constant 0 : index
      %14 = vector.load %arg2[%c0_8, %c0_9] : memref<2x256xf32, #tpu.memory_space<vmem>>, vector<2x256xf32>
      tpu.vector_store %arg2[%c0_8, %c0_9], %13 {strides = array<i32>} : memref<2x256xf32, #tpu.memory_space<vmem>>, vector<2x256xf32>,
    } else {
    }
    %c0 = arith.constant 0 : index
    %c0_1 = arith.constant 0 : index
    %3 = vector.load %arg1[%c0, %c0_1] : memref<32x256xf32, #tpu.memory_space<vmem>>, vector<32x256xf32>
    %cst = arith.constant dense<0.000000e+00> : vector<256xf32>
    %4 = vector.multi_reduction <add>, %3, %cst [0] : vector<32x256xf32> to vector<256xf32>
    %5 = vector.shape_cast %4 : vector<256xf32> to vector<1x256xf32>
    %6 = arith.mulf %3, %3 : vector<32x256xf32>
    %cst_2 = arith.constant dense<0.000000e+00> : vector<256xf32>
    %7 = vector.multi_reduction <add>, %6, %cst_2 [0] : vector<32x256xf32> to vector<256xf32>
    %8 = vector.shape_cast %7 : vector<256xf32> to vector<1x256xf32>
    %9 = tpu.concatenate %5, %8 in 0 : vector<1x256xf32>, vector<1x256xf32> -> vector<2x256xf32>
    %c0_3 = arith.constant 0 : index
    %c0_4 = arith.constant 0 : index
    %10 = vector.load %arg2[%c0_3, %c0_4] : memref<2x256xf32, #tpu.memory_space<vmem>>, vector<2x256xf32>
    %11 = arith.addf %10, %9 : vector<2x256xf32>
    %c0_5 = arith.constant 0 : index
    %c0_6 = arith.constant 0 : index
    %12 = vector.load %arg2[%c0_5, %c0_6] : memref<2x256xf32, #tpu.memory_space<vmem>>, vector<2x256xf32>
    tpu.vector_store %arg2[%c0_5, %c0_6], %11 {strides = array<i32>} : memref<2x256xf32, #tpu.memory_space<vmem>>, vector<2x256xf32>,
    return
  }
  func.func @transform_0(%arg0: i32) -> (i32, i32) {
    %c0_i32 = arith.constant 0 : i32
    %c0_i32_0 = arith.constant 0 : i32
    return %arg0, %c0_i32 : i32, i32
  }
  func.func @transform_1(%arg0: i32) -> (i32, i32) {
    %c0_i32 = arith.constant 0 : i32
    %c0_i32_0 = arith.constant 0 : i32
    %c0_i32_1 = arith.constant 0 : i32
    return %c0_i32, %c0_i32_0 : i32, i32
  }
}

module attributes {stable_mosaic.version = 11 : i64} {
  func.func @_bn_apply_kernel(%arg0: i32, %arg1: memref<32x256xf32, #tpu.memory_space<vmem>>, %arg2: memref<2x256xf32, #tpu.memory_space<vmem>>, %arg3: memref<32x256xf32, #tpu.memory_space<vmem>>) attributes {dimension_semantics = [#tpu.dimension_semantics<parallel>], iteration_bounds = array<i64: 1>, scalar_prefetch = 0 : i64, scratch_operands = 0 : i64, tpu.core_type = #tpu.core_type<tc>, window_params = [{transform_indices = @transform_0, window_bounds = array<i64: 32, 256>}, {pipeline_mode = #tpu.pipeline_mode<synchronous>, transform_indices = @transform_1, window_bounds = array<i64: 2, 256>}, {transform_indices = @transform_2, window_bounds = array<i64: 32, 256>}]} {
    %c0 = arith.constant 0 : index
    %c0_0 = arith.constant 0 : index
    %0 = vector.load %arg1[%c0, %c0_0] : memref<32x256xf32, #tpu.memory_space<vmem>>, vector<32x256xf32>
    %c0_1 = arith.constant 0 : index
    %c0_2 = arith.constant 0 : index
    %1 = vector.load %arg2[%c0_1, %c0_2] : memref<2x256xf32, #tpu.memory_space<vmem>>, vector<1x256xf32>
    %2 = vector.broadcast %1 : vector<1x256xf32> to vector<32x256xf32>
    %3 = arith.subf %0, %2 : vector<32x256xf32>
    %c1 = arith.constant 1 : index
    %c0_3 = arith.constant 0 : index
    %4 = vector.load %arg2[%c1, %c0_3] : memref<2x256xf32, #tpu.memory_space<vmem>>, vector<1x256xf32>
    %5 = vector.broadcast %4 : vector<1x256xf32> to vector<32x256xf32>
    %6 = arith.mulf %3, %5 : vector<32x256xf32>
    %cst = arith.constant 0.000000e+00 : f32
    %7 = vector.broadcast %cst : f32 to vector<32x256xf32>
    %8 = arith.maximumf %6, %7 : vector<32x256xf32>
    %c0_4 = arith.constant 0 : index
    %c0_5 = arith.constant 0 : index
    %9 = vector.load %arg3[%c0_4, %c0_5] : memref<32x256xf32, #tpu.memory_space<vmem>>, vector<32x256xf32>
    tpu.vector_store %arg3[%c0_4, %c0_5], %8 {strides = array<i32>} : memref<32x256xf32, #tpu.memory_space<vmem>>, vector<32x256xf32>,
    return
  }
  func.func @transform_0(%arg0: i32) -> (i32, i32) {
    %c0_i32 = arith.constant 0 : i32
    %c0_i32_0 = arith.constant 0 : i32
    return %arg0, %c0_i32 : i32, i32
  }
  func.func @transform_1(%arg0: i32) -> (i32, i32) {
    %c0_i32 = arith.constant 0 : i32
    %c0_i32_0 = arith.constant 0 : i32
    %c0_i32_1 = arith.constant 0 : i32
    return %c0_i32, %c0_i32_0 : i32, i32
  }
  func.func @transform_2(%arg0: i32) -> (i32, i32) {
    %c0_i32 = arith.constant 0 : i32
    %c0_i32_0 = arith.constant 0 : i32
    return %arg0, %c0_i32 : i32, i32
  }
}

module attributes {stable_mosaic.version = 11 : i64} {
  func.func @_gemm_kernel(%arg0: i32, %arg1: i32, %arg2: i32, %arg3: memref<2x1024xbf16, #tpu.memory_space<vmem>>, %arg4: memref<1024x64xbf16, #tpu.memory_space<vmem>>, %arg5: memref<1x64xf32, #tpu.memory_space<vmem>>, %arg6: memref<2x64xf32, #tpu.memory_space<vmem>>, %arg7: memref<2x64xf32, #tpu.memory_space<vmem>>) attributes {dimension_semantics = [#tpu.dimension_semantics<parallel>, #tpu.dimension_semantics<parallel>, #tpu.dimension_semantics<arbitrary>], iteration_bounds = array<i64: 1, 1, 4>, scalar_prefetch = 0 : i64, scratch_operands = 1 : i64, tpu.core_type = #tpu.core_type<tc>, window_params = [{transform_indices = @transform_0, window_bounds = array<i64: 2, 1024>}, {transform_indices = @transform_1, window_bounds = array<i64: 1024, 64>}, {transform_indices = @transform_2, window_bounds = array<i64: 1, 64>}, {transform_indices = @transform_3, window_bounds = array<i64: 2, 64>}]} {
    %c0_i32 = arith.constant 0 : i32
    %0 = arith.cmpi eq, %arg2, %c0_i32 : i32
    %1 = arith.extui %0 : i1 to i32
    %c0_i32_0 = arith.constant 0 : i32
    %2 = arith.cmpi ne, %1, %c0_i32_0 : i32
    scf.if %2 {
      %cst_9 = arith.constant 0.000000e+00 : f32
      %12 = vector.broadcast %cst_9 : f32 to vector<2x64xf32>
      %c0_10 = arith.constant 0 : index
      %c0_11 = arith.constant 0 : index
      %13 = vector.load %arg7[%c0_10, %c0_11] : memref<2x64xf32, #tpu.memory_space<vmem>>, vector<2x64xf32>
      tpu.vector_store %arg7[%c0_10, %c0_11], %12 {strides = array<i32>} : memref<2x64xf32, #tpu.memory_space<vmem>>, vector<2x64xf32>,
    } else {
    }
    %c0 = arith.constant 0 : index
    %c0_1 = arith.constant 0 : index
    %3 = vector.load %arg7[%c0, %c0_1] : memref<2x64xf32, #tpu.memory_space<vmem>>, vector<2x64xf32>
    %c0_2 = arith.constant 0 : index
    %c0_3 = arith.constant 0 : index
    %4 = vector.load %arg3[%c0_2, %c0_3] : memref<2x1024xbf16, #tpu.memory_space<vmem>>, vector<2x1024xbf16>
    %c0_4 = arith.constant 0 : index
    %c0_5 = arith.constant 0 : index
    %5 = vector.load %arg4[%c0_4, %c0_5] : memref<1024x64xbf16, #tpu.memory_space<vmem>>, vector<1024x64xbf16>
    %cst = arith.constant dense<0.000000e+00> : vector<2x64xf32>
    %6 = tpu.matmul %4, %5, %cst {dimension_numbers = #tpu.dot_dimension_numbers<[1], [0], [0], [1], [0, 0, 1, 1], [], []>} : vector<2x1024xbf16>, vector<1024x64xbf16>, vector<2x64xf32> -> vector<2x64xf32>
    %7 = arith.addf %3, %6 : vector<2x64xf32>
    %c0_6 = arith.constant 0 : index
    %c0_7 = arith.constant 0 : index
    %8 = vector.load %arg7[%c0_6, %c0_7] : memref<2x64xf32, #tpu.memory_space<vmem>>, vector<2x64xf32>
    tpu.vector_store %arg7[%c0_6, %c0_7], %7 {strides = array<i32>} : memref<2x64xf32, #tpu.memory_space<vmem>>, vector<2x64xf32>,
    %c3_i32 = arith.constant 3 : i32
    %9 = arith.cmpi eq, %arg2, %c3_i32 : i32
    %10 = arith.extui %9 : i1 to i32
    %c0_i32_8 = arith.constant 0 : i32
    %11 = arith.cmpi ne, %10, %c0_i32_8 : i32
    scf.if %11 {
      %c0_9 = arith.constant 0 : index
      %c0_10 = arith.constant 0 : index
      %12 = vector.load %arg7[%c0_9, %c0_10] : memref<2x64xf32, #tpu.memory_space<vmem>>, vector<2x64xf32>
      %c0_11 = arith.constant 0 : index
      %c0_12 = arith.constant 0 : index
      %13 = vector.load %arg5[%c0_11, %c0_12] : memref<1x64xf32, #tpu.memory_space<vmem>>, vector<1x64xf32>
      %14 = vector.broadcast %13 : vector<1x64xf32> to vector<2x64xf32>
      %15 = arith.addf %12, %14 : vector<2x64xf32>
      %c0_13 = arith.constant 0 : index
      %c0_14 = arith.constant 0 : index
      %16 = vector.load %arg6[%c0_13, %c0_14] : memref<2x64xf32, #tpu.memory_space<vmem>>, vector<2x64xf32>
      tpu.vector_store %arg6[%c0_13, %c0_14], %15 {strides = array<i32>} : memref<2x64xf32, #tpu.memory_space<vmem>>, vector<2x64xf32>,
    } else {
    }
    return
  }
  func.func @transform_0(%arg0: i32, %arg1: i32, %arg2: i32) -> (i32, i32) {
    %c0_i32 = arith.constant 0 : i32
    return %arg0, %arg2 : i32, i32
  }
  func.func @transform_1(%arg0: i32, %arg1: i32, %arg2: i32) -> (i32, i32) {
    %c0_i32 = arith.constant 0 : i32
    return %arg2, %arg1 : i32, i32
  }
  func.func @transform_2(%arg0: i32, %arg1: i32, %arg2: i32) -> (i32, i32) {
    %c0_i32 = arith.constant 0 : i32
    %c0_i32_0 = arith.constant 0 : i32
    return %c0_i32, %arg1 : i32, i32
  }
  func.func @transform_3(%arg0: i32, %arg1: i32, %arg2: i32) -> (i32, i32) {
    %c0_i32 = arith.constant 0 : i32
    return %arg0, %arg1 : i32, i32
  }
}

module attributes {stable_mosaic.version = 11 : i64} {
  func.func @_reparam_gemm_kernel(%arg0: i32, %arg1: memref<2x32xf32, #tpu.memory_space<vmem>>, %arg2: memref<2x32xf32, #tpu.memory_space<vmem>>, %arg3: memref<2x32xf32, #tpu.memory_space<vmem>>, %arg4: memref<32x512xbf16, #tpu.memory_space<vmem>>, %arg5: memref<1x512xf32, #tpu.memory_space<vmem>>, %arg6: memref<2x512xf32, #tpu.memory_space<vmem>>) attributes {dimension_semantics = [#tpu.dimension_semantics<parallel>], iteration_bounds = array<i64: 8>, scalar_prefetch = 0 : i64, scratch_operands = 0 : i64, tpu.core_type = #tpu.core_type<tc>, window_params = [{pipeline_mode = #tpu.pipeline_mode<synchronous>, transform_indices = @transform_0, window_bounds = array<i64: 2, 32>}, {pipeline_mode = #tpu.pipeline_mode<synchronous>, transform_indices = @transform_1, window_bounds = array<i64: 2, 32>}, {pipeline_mode = #tpu.pipeline_mode<synchronous>, transform_indices = @transform_2, window_bounds = array<i64: 2, 32>}, {transform_indices = @transform_3, window_bounds = array<i64: 32, 512>}, {transform_indices = @transform_4, window_bounds = array<i64: 1, 512>}, {transform_indices = @transform_5, window_bounds = array<i64: 2, 512>}]} {
    %c0 = arith.constant 0 : index
    %c0_0 = arith.constant 0 : index
    %0 = vector.load %arg1[%c0, %c0_0] : memref<2x32xf32, #tpu.memory_space<vmem>>, vector<2x32xf32>
    %c0_1 = arith.constant 0 : index
    %c0_2 = arith.constant 0 : index
    %1 = vector.load %arg3[%c0_1, %c0_2] : memref<2x32xf32, #tpu.memory_space<vmem>>, vector<2x32xf32>
    %c0_3 = arith.constant 0 : index
    %c0_4 = arith.constant 0 : index
    %2 = vector.load %arg2[%c0_3, %c0_4] : memref<2x32xf32, #tpu.memory_space<vmem>>, vector<2x32xf32>
    %cst = arith.constant 5.000000e-01 : f32
    %3 = vector.broadcast %cst : f32 to vector<2x32xf32>
    %4 = arith.mulf %3, %2 : vector<2x32xf32>
    %5 = math.exp %4 : vector<2x32xf32>
    %6 = arith.mulf %1, %5 : vector<2x32xf32>
    %7 = arith.addf %0, %6 : vector<2x32xf32>
    %8 = arith.truncf %7 : vector<2x32xf32> to vector<2x32xbf16>
    %c0_5 = arith.constant 0 : index
    %c0_6 = arith.constant 0 : index
    %9 = vector.load %arg4[%c0_5, %c0_6] : memref<32x512xbf16, #tpu.memory_space<vmem>>, vector<32x512xbf16>
    %cst_7 = arith.constant dense<0.000000e+00> : vector<2x512xf32>
    %10 = tpu.matmul %8, %9, %cst_7 {dimension_numbers = #tpu.dot_dimension_numbers<[1], [0], [0], [1], [0, 0, 1, 1], [], []>} : vector<2x32xbf16>, vector<32x512xbf16>, vector<2x512xf32> -> vector<2x512xf32>
    %c0_8 = arith.constant 0 : index
    %c0_9 = arith.constant 0 : index
    %11 = vector.load %arg5[%c0_8, %c0_9] : memref<1x512xf32, #tpu.memory_space<vmem>>, vector<1x512xf32>
    %12 = vector.broadcast %11 : vector<1x512xf32> to vector<2x512xf32>
    %13 = arith.addf %10, %12 : vector<2x512xf32>
    %cst_10 = arith.constant 0.000000e+00 : f32
    %14 = vector.broadcast %cst_10 : f32 to vector<2x512xf32>
    %15 = arith.cmpf oge, %13, %14 : vector<2x512xf32>
    %cst_11 = arith.constant 2.000000e-01 : f32
    %16 = vector.broadcast %cst_11 : f32 to vector<2x512xf32>
    %17 = arith.mulf %16, %13 : vector<2x512xf32>
    %18 = arith.select %15, %13, %17 : vector<2x512xi1>, vector<2x512xf32>
    %c0_12 = arith.constant 0 : index
    %c0_13 = arith.constant 0 : index
    %19 = vector.load %arg6[%c0_12, %c0_13] : memref<2x512xf32, #tpu.memory_space<vmem>>, vector<2x512xf32>
    tpu.vector_store %arg6[%c0_12, %c0_13], %18 {strides = array<i32>} : memref<2x512xf32, #tpu.memory_space<vmem>>, vector<2x512xf32>,
    return
  }
  func.func @transform_0(%arg0: i32) -> (i32, i32) {
    %c0_i32 = arith.constant 0 : i32
    %c0_i32_0 = arith.constant 0 : i32
    %c0_i32_1 = arith.constant 0 : i32
    return %c0_i32, %c0_i32_0 : i32, i32
  }
  func.func @transform_1(%arg0: i32) -> (i32, i32) {
    %c0_i32 = arith.constant 0 : i32
    %c0_i32_0 = arith.constant 0 : i32
    %c0_i32_1 = arith.constant 0 : i32
    return %c0_i32, %c0_i32_0 : i32, i32
  }
  func.func @transform_2(%arg0: i32) -> (i32, i32) {
    %c0_i32 = arith.constant 0 : i32
    %c0_i32_0 = arith.constant 0 : i32
    %c0_i32_1 = arith.constant 0 : i32
    return %c0_i32, %c0_i32_0 : i32, i32
  }
  func.func @transform_3(%arg0: i32) -> (i32, i32) {
    %c0_i32 = arith.constant 0 : i32
    %c0_i32_0 = arith.constant 0 : i32
    return %c0_i32, %arg0 : i32, i32
  }
  func.func @transform_4(%arg0: i32) -> (i32, i32) {
    %c0_i32 = arith.constant 0 : i32
    %c0_i32_0 = arith.constant 0 : i32
    return %c0_i32, %arg0 : i32, i32
  }
  func.func @transform_5(%arg0: i32) -> (i32, i32) {
    %c0_i32 = arith.constant 0 : i32
    %c0_i32_0 = arith.constant 0 : i32
    return %c0_i32, %arg0 : i32, i32
  }
}

module attributes {stable_mosaic.version = 11 : i64} {
  func.func @_gemm_kernel(%arg0: i32, %arg1: i32, %arg2: i32, %arg3: memref<32x1024xbf16, #tpu.memory_space<vmem>>, %arg4: memref<1024x128xbf16, #tpu.memory_space<vmem>>, %arg5: memref<32x128xf32, #tpu.memory_space<vmem>>, %arg6: memref<32x128xf32, #tpu.memory_space<vmem>>) attributes {dimension_semantics = [#tpu.dimension_semantics<parallel>, #tpu.dimension_semantics<parallel>, #tpu.dimension_semantics<arbitrary>], iteration_bounds = array<i64: 1, 1, 1>, scalar_prefetch = 0 : i64, scratch_operands = 1 : i64, tpu.core_type = #tpu.core_type<tc>, window_params = [{transform_indices = @transform_0, window_bounds = array<i64: 32, 1024>}, {transform_indices = @transform_1, window_bounds = array<i64: 1024, 128>}, {transform_indices = @transform_2, window_bounds = array<i64: 32, 128>}]} {
    %c0_i32 = arith.constant 0 : i32
    %0 = arith.cmpi eq, %arg2, %c0_i32 : i32
    %1 = arith.extui %0 : i1 to i32
    %c0_i32_0 = arith.constant 0 : i32
    %2 = arith.cmpi ne, %1, %c0_i32_0 : i32
    scf.if %2 {
      %cst_10 = arith.constant 0.000000e+00 : f32
      %12 = vector.broadcast %cst_10 : f32 to vector<32x128xf32>
      %c0_11 = arith.constant 0 : index
      %c0_12 = arith.constant 0 : index
      %13 = vector.load %arg6[%c0_11, %c0_12] : memref<32x128xf32, #tpu.memory_space<vmem>>, vector<32x128xf32>
      tpu.vector_store %arg6[%c0_11, %c0_12], %12 {strides = array<i32>} : memref<32x128xf32, #tpu.memory_space<vmem>>, vector<32x128xf32>,
    } else {
    }
    %c0 = arith.constant 0 : index
    %c0_1 = arith.constant 0 : index
    %3 = vector.load %arg6[%c0, %c0_1] : memref<32x128xf32, #tpu.memory_space<vmem>>, vector<32x128xf32>
    %c0_2 = arith.constant 0 : index
    %c0_3 = arith.constant 0 : index
    %4 = vector.load %arg3[%c0_2, %c0_3] : memref<32x1024xbf16, #tpu.memory_space<vmem>>, vector<32x1024xbf16>
    %c0_4 = arith.constant 0 : index
    %c0_5 = arith.constant 0 : index
    %5 = vector.load %arg4[%c0_4, %c0_5] : memref<1024x128xbf16, #tpu.memory_space<vmem>>, vector<1024x128xbf16>
    %cst = arith.constant dense<0.000000e+00> : vector<32x128xf32>
    %6 = tpu.matmul %4, %5, %cst {dimension_numbers = #tpu.dot_dimension_numbers<[1], [0], [0], [1], [0, 0, 1, 1], [], []>} : vector<32x1024xbf16>, vector<1024x128xbf16>, vector<32x128xf32> -> vector<32x128xf32>
    %7 = arith.addf %3, %6 : vector<32x128xf32>
    %c0_6 = arith.constant 0 : index
    %c0_7 = arith.constant 0 : index
    %8 = vector.load %arg6[%c0_6, %c0_7] : memref<32x128xf32, #tpu.memory_space<vmem>>, vector<32x128xf32>
    tpu.vector_store %arg6[%c0_6, %c0_7], %7 {strides = array<i32>} : memref<32x128xf32, #tpu.memory_space<vmem>>, vector<32x128xf32>,
    %c0_i32_8 = arith.constant 0 : i32
    %9 = arith.cmpi eq, %arg2, %c0_i32_8 : i32
    %10 = arith.extui %9 : i1 to i32
    %c0_i32_9 = arith.constant 0 : i32
    %11 = arith.cmpi ne, %10, %c0_i32_9 : i32
    scf.if %11 {
      %c0_10 = arith.constant 0 : index
      %c0_11 = arith.constant 0 : index
      %12 = vector.load %arg6[%c0_10, %c0_11] : memref<32x128xf32, #tpu.memory_space<vmem>>, vector<32x128xf32>
      %c0_12 = arith.constant 0 : index
      %c0_13 = arith.constant 0 : index
      %13 = vector.load %arg5[%c0_12, %c0_13] : memref<32x128xf32, #tpu.memory_space<vmem>>, vector<32x128xf32>
      tpu.vector_store %arg5[%c0_12, %c0_13], %12 {strides = array<i32>} : memref<32x128xf32, #tpu.memory_space<vmem>>, vector<32x128xf32>,
    } else {
    }
    return
  }
  func.func @transform_0(%arg0: i32, %arg1: i32, %arg2: i32) -> (i32, i32) {
    %c0_i32 = arith.constant 0 : i32
    return %arg0, %arg2 : i32, i32
  }
  func.func @transform_1(%arg0: i32, %arg1: i32, %arg2: i32) -> (i32, i32) {
    %c0_i32 = arith.constant 0 : i32
    return %arg2, %arg1 : i32, i32
  }
  func.func @transform_2(%arg0: i32, %arg1: i32, %arg2: i32) -> (i32, i32) {
    %c0_i32 = arith.constant 0 : i32
    return %arg0, %arg1 : i32, i32
  }
}

module attributes {stable_mosaic.version = 11 : i64} {
  func.func @_bn_sums_kernel(%arg0: i32, %arg1: memref<32x128xf32, #tpu.memory_space<vmem>>, %arg2: memref<2x128xf32, #tpu.memory_space<vmem>>) attributes {dimension_semantics = [#tpu.dimension_semantics<arbitrary>], iteration_bounds = array<i64: 1>, scalar_prefetch = 0 : i64, scratch_operands = 0 : i64, tpu.core_type = #tpu.core_type<tc>, window_params = [{transform_indices = @transform_0, window_bounds = array<i64: 32, 128>}, {pipeline_mode = #tpu.pipeline_mode<synchronous>, transform_indices = @transform_1, window_bounds = array<i64: 2, 128>}]} {
    %c0_i32 = arith.constant 0 : i32
    %0 = arith.cmpi eq, %arg0, %c0_i32 : i32
    %1 = arith.extui %0 : i1 to i32
    %c0_i32_0 = arith.constant 0 : i32
    %2 = arith.cmpi ne, %1, %c0_i32_0 : i32
    scf.if %2 {
      %cst_7 = arith.constant 0.000000e+00 : f32
      %13 = vector.broadcast %cst_7 : f32 to vector<2x128xf32>
      %c0_8 = arith.constant 0 : index
      %c0_9 = arith.constant 0 : index
      %14 = vector.load %arg2[%c0_8, %c0_9] : memref<2x128xf32, #tpu.memory_space<vmem>>, vector<2x128xf32>
      tpu.vector_store %arg2[%c0_8, %c0_9], %13 {strides = array<i32>} : memref<2x128xf32, #tpu.memory_space<vmem>>, vector<2x128xf32>,
    } else {
    }
    %c0 = arith.constant 0 : index
    %c0_1 = arith.constant 0 : index
    %3 = vector.load %arg1[%c0, %c0_1] : memref<32x128xf32, #tpu.memory_space<vmem>>, vector<32x128xf32>
    %cst = arith.constant dense<0.000000e+00> : vector<128xf32>
    %4 = vector.multi_reduction <add>, %3, %cst [0] : vector<32x128xf32> to vector<128xf32>
    %5 = vector.shape_cast %4 : vector<128xf32> to vector<1x128xf32>
    %6 = arith.mulf %3, %3 : vector<32x128xf32>
    %cst_2 = arith.constant dense<0.000000e+00> : vector<128xf32>
    %7 = vector.multi_reduction <add>, %6, %cst_2 [0] : vector<32x128xf32> to vector<128xf32>
    %8 = vector.shape_cast %7 : vector<128xf32> to vector<1x128xf32>
    %9 = tpu.concatenate %5, %8 in 0 : vector<1x128xf32>, vector<1x128xf32> -> vector<2x128xf32>
    %c0_3 = arith.constant 0 : index
    %c0_4 = arith.constant 0 : index
    %10 = vector.load %arg2[%c0_3, %c0_4] : memref<2x128xf32, #tpu.memory_space<vmem>>, vector<2x128xf32>
    %11 = arith.addf %10, %9 : vector<2x128xf32>
    %c0_5 = arith.constant 0 : index
    %c0_6 = arith.constant 0 : index
    %12 = vector.load %arg2[%c0_5, %c0_6] : memref<2x128xf32, #tpu.memory_space<vmem>>, vector<2x128xf32>
    tpu.vector_store %arg2[%c0_5, %c0_6], %11 {strides = array<i32>} : memref<2x128xf32, #tpu.memory_space<vmem>>, vector<2x128xf32>,
    return
  }
  func.func @transform_0(%arg0: i32) -> (i32, i32) {
    %c0_i32 = arith.constant 0 : i32
    %c0_i32_0 = arith.constant 0 : i32
    return %arg0, %c0_i32 : i32, i32
  }
  func.func @transform_1(%arg0: i32) -> (i32, i32) {
    %c0_i32 = arith.constant 0 : i32
    %c0_i32_0 = arith.constant 0 : i32
    %c0_i32_1 = arith.constant 0 : i32
    return %c0_i32, %c0_i32_0 : i32, i32
  }
}

module attributes {stable_mosaic.version = 11 : i64} {
  func.func @_bn_apply_kernel(%arg0: i32, %arg1: memref<32x128xf32, #tpu.memory_space<vmem>>, %arg2: memref<2x128xf32, #tpu.memory_space<vmem>>, %arg3: memref<32x128xf32, #tpu.memory_space<vmem>>) attributes {dimension_semantics = [#tpu.dimension_semantics<parallel>], iteration_bounds = array<i64: 1>, scalar_prefetch = 0 : i64, scratch_operands = 0 : i64, tpu.core_type = #tpu.core_type<tc>, window_params = [{transform_indices = @transform_0, window_bounds = array<i64: 32, 128>}, {pipeline_mode = #tpu.pipeline_mode<synchronous>, transform_indices = @transform_1, window_bounds = array<i64: 2, 128>}, {transform_indices = @transform_2, window_bounds = array<i64: 32, 128>}]} {
    %c0 = arith.constant 0 : index
    %c0_0 = arith.constant 0 : index
    %0 = vector.load %arg1[%c0, %c0_0] : memref<32x128xf32, #tpu.memory_space<vmem>>, vector<32x128xf32>
    %c0_1 = arith.constant 0 : index
    %c0_2 = arith.constant 0 : index
    %1 = vector.load %arg2[%c0_1, %c0_2] : memref<2x128xf32, #tpu.memory_space<vmem>>, vector<1x128xf32>
    %2 = vector.broadcast %1 : vector<1x128xf32> to vector<32x128xf32>
    %3 = arith.subf %0, %2 : vector<32x128xf32>
    %c1 = arith.constant 1 : index
    %c0_3 = arith.constant 0 : index
    %4 = vector.load %arg2[%c1, %c0_3] : memref<2x128xf32, #tpu.memory_space<vmem>>, vector<1x128xf32>
    %5 = vector.broadcast %4 : vector<1x128xf32> to vector<32x128xf32>
    %6 = arith.mulf %3, %5 : vector<32x128xf32>
    %cst = arith.constant 0.000000e+00 : f32
    %7 = vector.broadcast %cst : f32 to vector<32x128xf32>
    %8 = arith.cmpf oge, %6, %7 : vector<32x128xf32>
    %cst_4 = arith.constant 2.000000e-01 : f32
    %9 = vector.broadcast %cst_4 : f32 to vector<32x128xf32>
    %10 = arith.mulf %9, %6 : vector<32x128xf32>
    %11 = arith.select %8, %6, %10 : vector<32x128xi1>, vector<32x128xf32>
    %c0_5 = arith.constant 0 : index
    %c0_6 = arith.constant 0 : index
    %12 = vector.load %arg3[%c0_5, %c0_6] : memref<32x128xf32, #tpu.memory_space<vmem>>, vector<32x128xf32>
    tpu.vector_store %arg3[%c0_5, %c0_6], %11 {strides = array<i32>} : memref<32x128xf32, #tpu.memory_space<vmem>>, vector<32x128xf32>,
    return
  }
  func.func @transform_0(%arg0: i32) -> (i32, i32) {
    %c0_i32 = arith.constant 0 : i32
    %c0_i32_0 = arith.constant 0 : i32
    return %arg0, %c0_i32 : i32, i32
  }
  func.func @transform_1(%arg0: i32) -> (i32, i32) {
    %c0_i32 = arith.constant 0 : i32
    %c0_i32_0 = arith.constant 0 : i32
    %c0_i32_1 = arith.constant 0 : i32
    return %c0_i32, %c0_i32_0 : i32, i32
  }
  func.func @transform_2(%arg0: i32) -> (i32, i32) {
    %c0_i32 = arith.constant 0 : i32
    %c0_i32_0 = arith.constant 0 : i32
    return %arg0, %c0_i32 : i32, i32
  }
}

module attributes {stable_mosaic.version = 11 : i64} {
  func.func @_gemm_kernel(%arg0: i32, %arg1: i32, %arg2: i32, %arg3: memref<128x512xbf16, #tpu.memory_space<vmem>>, %arg4: memref<512x3xbf16, #tpu.memory_space<vmem>>, %arg5: memref<1x3xf32, #tpu.memory_space<vmem>>, %arg6: memref<128x3xf32, #tpu.memory_space<vmem>>, %arg7: memref<128x3xf32, #tpu.memory_space<vmem>>) attributes {dimension_semantics = [#tpu.dimension_semantics<parallel>, #tpu.dimension_semantics<parallel>, #tpu.dimension_semantics<arbitrary>], iteration_bounds = array<i64: 1, 1, 1>, scalar_prefetch = 0 : i64, scratch_operands = 1 : i64, tpu.core_type = #tpu.core_type<tc>, window_params = [{transform_indices = @transform_0, window_bounds = array<i64: 128, 512>}, {transform_indices = @transform_1, window_bounds = array<i64: 512, 3>}, {transform_indices = @transform_2, window_bounds = array<i64: 1, 3>}, {transform_indices = @transform_3, window_bounds = array<i64: 128, 3>}]} {
    %c0_i32 = arith.constant 0 : i32
    %0 = arith.cmpi eq, %arg2, %c0_i32 : i32
    %1 = arith.extui %0 : i1 to i32
    %c0_i32_0 = arith.constant 0 : i32
    %2 = arith.cmpi ne, %1, %c0_i32_0 : i32
    scf.if %2 {
      %cst_10 = arith.constant 0.000000e+00 : f32
      %12 = vector.broadcast %cst_10 : f32 to vector<128x3xf32>
      %c0_11 = arith.constant 0 : index
      %c0_12 = arith.constant 0 : index
      %13 = vector.load %arg7[%c0_11, %c0_12] : memref<128x3xf32, #tpu.memory_space<vmem>>, vector<128x3xf32>
      tpu.vector_store %arg7[%c0_11, %c0_12], %12 {strides = array<i32>} : memref<128x3xf32, #tpu.memory_space<vmem>>, vector<128x3xf32>,
    } else {
    }
    %c0 = arith.constant 0 : index
    %c0_1 = arith.constant 0 : index
    %3 = vector.load %arg7[%c0, %c0_1] : memref<128x3xf32, #tpu.memory_space<vmem>>, vector<128x3xf32>
    %c0_2 = arith.constant 0 : index
    %c0_3 = arith.constant 0 : index
    %4 = vector.load %arg3[%c0_2, %c0_3] : memref<128x512xbf16, #tpu.memory_space<vmem>>, vector<128x512xbf16>
    %c0_4 = arith.constant 0 : index
    %c0_5 = arith.constant 0 : index
    %5 = vector.load %arg4[%c0_4, %c0_5] : memref<512x3xbf16, #tpu.memory_space<vmem>>, vector<512x3xbf16>
    %cst = arith.constant dense<0.000000e+00> : vector<128x3xf32>
    %6 = tpu.matmul %4, %5, %cst {dimension_numbers = #tpu.dot_dimension_numbers<[1], [0], [0], [1], [0, 0, 1, 1], [], []>} : vector<128x512xbf16>, vector<512x3xbf16>, vector<128x3xf32> -> vector<128x3xf32>
    %7 = arith.addf %3, %6 : vector<128x3xf32>
    %c0_6 = arith.constant 0 : index
    %c0_7 = arith.constant 0 : index
    %8 = vector.load %arg7[%c0_6, %c0_7] : memref<128x3xf32, #tpu.memory_space<vmem>>, vector<128x3xf32>
    tpu.vector_store %arg7[%c0_6, %c0_7], %7 {strides = array<i32>} : memref<128x3xf32, #tpu.memory_space<vmem>>, vector<128x3xf32>,
    %c0_i32_8 = arith.constant 0 : i32
    %9 = arith.cmpi eq, %arg2, %c0_i32_8 : i32
    %10 = arith.extui %9 : i1 to i32
    %c0_i32_9 = arith.constant 0 : i32
    %11 = arith.cmpi ne, %10, %c0_i32_9 : i32
    scf.if %11 {
      %c0_10 = arith.constant 0 : index
      %c0_11 = arith.constant 0 : index
      %12 = vector.load %arg7[%c0_10, %c0_11] : memref<128x3xf32, #tpu.memory_space<vmem>>, vector<128x3xf32>
      %c0_12 = arith.constant 0 : index
      %c0_13 = arith.constant 0 : index
      %13 = vector.load %arg5[%c0_12, %c0_13] : memref<1x3xf32, #tpu.memory_space<vmem>>, vector<1x3xf32>
      %14 = vector.broadcast %13 : vector<1x3xf32> to vector<128x3xf32>
      %15 = arith.addf %12, %14 : vector<128x3xf32>
      %16 = math.tanh %15 : vector<128x3xf32>
      %c0_14 = arith.constant 0 : index
      %c0_15 = arith.constant 0 : index
      %17 = vector.load %arg6[%c0_14, %c0_15] : memref<128x3xf32, #tpu.memory_space<vmem>>, vector<128x3xf32>
      tpu.vector_store %arg6[%c0_14, %c0_15], %16 {strides = array<i32>} : memref<128x3xf32, #tpu.memory_space<vmem>>, vector<128x3xf32>,
    } else {
    }
    return
  }
  func.func @transform_0(%arg0: i32, %arg1: i32, %arg2: i32) -> (i32, i32) {
    %c0_i32 = arith.constant 0 : i32
    return %arg0, %arg2 : i32, i32
  }
  func.func @transform_1(%arg0: i32, %arg1: i32, %arg2: i32) -> (i32, i32) {
    %c0_i32 = arith.constant 0 : i32
    return %arg2, %arg1 : i32, i32
  }
  func.func @transform_2(%arg0: i32, %arg1: i32, %arg2: i32) -> (i32, i32) {
    %c0_i32 = arith.constant 0 : i32
    %c0_i32_0 = arith.constant 0 : i32
    return %c0_i32, %arg1 : i32, i32
  }
  func.func @transform_3(%arg0: i32, %arg1: i32, %arg2: i32) -> (i32, i32) {
    %c0_i32 = arith.constant 0 : i32
    return %arg0, %arg1 : i32, i32
  }
}

</mosaic_0001>

<llo_original>
// kernel: vae_forward.25
$region0: #{vae_forward.25}
  #allocation0 [shape = 'u32[]', space=smem, size = 0x4, offset = 0x4, fixed_abs, tag = 'smem constant byte address 0x4 - core index']
  #allocation1 [shape = 'u32[72,128]{1,0:T(1,128)}', space=vmem, size = 0x9000, scoped, tag = 'internal scratch']
  %s0 = inlined_call_operand.vmem [shape: f32[128,128], index: 0, kind: input, shape index: {}]
  %s1 = inlined_call_operand.vmem [shape: f32[2,128], index: 1, kind: output, shape index: {}]
  %s2 = sld [smem:[#allocation0]]
  $region18: #{vae_forward.25} parent=0
    _
  %s4 = ssub.s32 1, %s2
  %s5 = scalar_select 0, %s4, %s2
  // Predicated region
  $region2: #{vae_forward.25} parent=0 // pred_check
    _
  $region3: #{vae_forward.25} parent=0 // pred_check_branch
    %7 = sbr.rel (0) target = $region5
  $region4: #{vae_forward.25} parent=0 // pred_region
    _
  $region5: #{vae_forward.25} parent=0 // pred_fallthru
    _
  %p8 = scmp.eq.s32.totalorder 0, 0
  // Predicated region
  $region6: #{vae_forward.25} parent=0 // pred_check
    %p9 = pneg %p8
  $region7: #{vae_forward.25} parent=0 // pred_check_branch
    %11 = sbr.rel (%p9) target = $region9
  $region8: #{vae_forward.25} parent=0 // pred_region
    %12 = vst [vmem:[%s1] sm:$0x3] 0.0
  $region9: #{vae_forward.25} parent=0 // pred_fallthru
    _
  %v13 = vld [vmem:[%s0] sm:$0xff]
  %v14 = vld [vmem:[%s0 + $0x8] sm:$0xff]
  %v15 = vld [vmem:[%s0 + $0x10] sm:$0xff]
  %v16 = vld [vmem:[%s0 + $0x18] sm:$0xff]
  %v17 = vld [vmem:[%s0 + $0x20] sm:$0xff]
  %v18 = vld [vmem:[%s0 + $0x28] sm:$0xff]
  %v19 = vld [vmem:[%s0 + $0x30] sm:$0xff]
  %v20 = vld [vmem:[%s0 + $0x38] sm:$0xff]
  %v21 = vld [vmem:[%s0 + $0x40] sm:$0xff]
  %v22 = vld [vmem:[%s0 + $0x48] sm:$0xff]
  %v23 = vld [vmem:[%s0 + $0x50] sm:$0xff]
  %v24 = vld [vmem:[%s0 + $0x58] sm:$0xff]
  %v25 = vld [vmem:[%s0 + $0x60] sm:$0xff]
  %v26 = vld [vmem:[%s0 + $0x68] sm:$0xff]
  %v27 = vld [vmem:[%s0 + $0x70] sm:$0xff]
  %v28 = vld [vmem:[%s0 + $0x78] sm:$0xff]
  %v29 = vadd.f32 %v13, %v14
  %v30 = vadd.f32 %v29, %v15
  %v31 = vadd.f32 %v30, %v16
  %v32 = vadd.f32 %v31, %v17
  %v33 = vadd.f32 %v32, %v18
  %v34 = vadd.f32 %v33, %v19
  %v35 = vadd.f32 %v34, %v20
  %v36 = vadd.f32 %v35, %v21
  %v37 = vadd.f32 %v36, %v22
  %v38 = vadd.f32 %v37, %v23
  %v39 = vadd.f32 %v38, %v24
  %v40 = vadd.f32 %v39, %v25
  %v41 = vadd.f32 %v40, %v26
  %v42 = vadd.f32 %v41, %v27
  %v43 = vadd.f32 %v42, %v28
  %v44 = vrot.slane %v43, 4
  %v45 = vadd.f32 %v43, %v44
  %v46 = vrot.slane %v45, 2
  %v47 = vadd.f32 %v45, %v46
  %v48 = vrot.slane %v47, 1
  %v49 = vadd.f32 %v47, %v48
  %v50 = vmul.f32 %v13, %v13
  %v51 = vmul.f32 %v14, %v14
  %v52 = vmul.f32 %v15, %v15
  %v53 = vmul.f32 %v16, %v16
  %v54 = vmul.f32 %v17, %v17
  %v55 = vmul.f32 %v18, %v18
  %v56 = vmul.f32 %v19, %v19
  %v57 = vmul.f32 %v20, %v20
  %v58 = vmul.f32 %v21, %v21
  %v59 = vmul.f32 %v22, %v22
  %v60 = vmul.f32 %v23, %v23
  %v61 = vmul.f32 %v24, %v24
  %v62 = vmul.f32 %v25, %v25
  %v63 = vmul.f32 %v26, %v26
  %v64 = vmul.f32 %v27, %v27
  %v65 = vmul.f32 %v28, %v28
  %v66 = vadd.f32 %v50, %v51
  %v67 = vadd.f32 %v66, %v52
  %v68 = vadd.f32 %v67, %v53
  %v69 = vadd.f32 %v68, %v54
  %v70 = vadd.f32 %v69, %v55
  %v71 = vadd.f32 %v70, %v56
  %v72 = vadd.f32 %v71, %v57
  %v73 = vadd.f32 %v72, %v58
  %v74 = vadd.f32 %v73, %v59
  %v75 = vadd.f32 %v74, %v60
  %v76 = vadd.f32 %v75, %v61
  %v77 = vadd.f32 %v76, %v62
  %v78 = vadd.f32 %v77, %v63
  %v79 = vadd.f32 %v78, %v64
  %v80 = vadd.f32 %v79, %v65
  %v81 = vrot.slane %v80, 4
  %v82 = vadd.f32 %v80, %v81
  %v83 = vrot.slane %v82, 2
  %v84 = vadd.f32 %v82, %v83
  %v85 = vrot.slane %v84, 1
  %v86 = vadd.f32 %v84, %v85
  %vm87 = vcmask 1040384
  %v88 = vsel %vm87, %v49, %v86
  %v89 = vld [vmem:[%s1] sm:$0x3]
  %v90 = vadd.f32 %v89, %v88
  %91 = vst [vmem:[%s1] sm:$0x3] %v90
  // Predicated region
  $region10: #{vae_forward.25} parent=0 // pred_check
    _
  $region11: #{vae_forward.25} parent=0 // pred_check_branch
    %93 = sbr.rel (0) target = $region13
  $region12: #{vae_forward.25} parent=0 // pred_region
    _
  $region13: #{vae_forward.25} parent=0 // pred_fallthru
    _
  // Predicated region
  $region14: #{vae_forward.25} parent=0 // pred_check
    _
  $region15: #{vae_forward.25} parent=0 // pred_check_branch
    %95 = sbr.rel (0) target = $region17
  $region16: #{vae_forward.25} parent=0 // pred_region
    _
  $region17: #{vae_forward.25} parent=0 // pred_fallthru
    _

// kernel: vae_forward.26
$region0: #{vae_forward.26}
  #allocation0 [shape = 'u32[]', space=smem, size = 0x4, offset = 0x4, fixed_abs, tag = 'smem constant byte address 0x4 - core index']
  #allocation1 [shape = 'u32[72,128]{1,0:T(1,128)}', space=vmem, size = 0x9000, scoped, tag = 'internal scratch']
  %s0 = inlined_call_operand.vmem [shape: f32[128,128], index: 0, kind: input, shape index: {}]
  %s1 = inlined_call_operand.vmem [shape: f32[2,128], index: 1, kind: input, shape index: {}]
  %s2 = inlined_call_operand.vmem [shape: f32[128,128], index: 2, kind: output, shape index: {}]
  %s3 = sld [smem:[#allocation0]]
  $region18: #{vae_forward.26} parent=0
    _
  %s5 = ssub.s32 1, %s3
  %s6 = scalar_select 0, %s5, %s3
  // Predicated region
  $region2: #{vae_forward.26} parent=0 // pred_check
    _
  $region3: #{vae_forward.26} parent=0 // pred_check_branch
    %8 = sbr.rel (0) target = $region5
  $region4: #{vae_forward.26} parent=0 // pred_region
    _
  $region5: #{vae_forward.26} parent=0 // pred_fallthru
    _
  // Predicated region
  $region6: #{vae_forward.26} parent=0 // pred_check
    _
  $region7: #{vae_forward.26} parent=0 // pred_check_branch
    %10 = sbr.rel (0) target = $region9
  $region8: #{vae_forward.26} parent=0 // pred_region
    _
  $region9: #{vae_forward.26} parent=0 // pred_fallthru
    _
  %v11 = vld [vmem:[%s0] sm:$0xff]
  %v12 = vld [vmem:[%s0 + $0x8] sm:$0xff]
  %v13 = vld [vmem:[%s0 + $0x10] sm:$0xff]
  %v14 = vld [vmem:[%s0 + $0x18] sm:$0xff]
  %v15 = vld [vmem:[%s0 + $0x20] sm:$0xff]
  %v16 = vld [vmem:[%s0 + $0x28] sm:$0xff]
  %v17 = vld [vmem:[%s0 + $0x30] sm:$0xff]
  %v18 = vld [vmem:[%s0 + $0x38] sm:$0xff]
  %v19 = vld [vmem:[%s0 + $0x40] sm:$0xff]
  %v20 = vld [vmem:[%s0 + $0x48] sm:$0xff]
  %v21 = vld [vmem:[%s0 + $0x50] sm:$0xff]
  %v22 = vld [vmem:[%s0 + $0x58] sm:$0xff]
  %v23 = vld [vmem:[%s0 + $0x60] sm:$0xff]
  %v24 = vld [vmem:[%s0 + $0x68] sm:$0xff]
  %v25 = vld [vmem:[%s0 + $0x70] sm:$0xff]
  %v26 = vld [vmem:[%s0 + $0x78] sm:$0xff]
  %v27 = vld [vmem:[%s1] sm:$0x1]
  %v28 = vperm.slane %v27, 0
  %v29 = vsub.f32 %v11, %v28
  %v30 = vsub.f32 %v12, %v28
  %v31 = vsub.f32 %v13, %v28
  %v32 = vsub.f32 %v14, %v28
  %v33 = vsub.f32 %v15, %v28
  %v34 = vsub.f32 %v16, %v28
  %v35 = vsub.f32 %v17, %v28
  %v36 = vsub.f32 %v18, %v28
  %v37 = vsub.f32 %v19, %v28
  %v38 = vsub.f32 %v20, %v28
  %v39 = vsub.f32 %v21, %v28
  %v40 = vsub.f32 %v22, %v28
  %v41 = vsub.f32 %v23, %v28
  %v42 = vsub.f32 %v24, %v28
  %v43 = vsub.f32 %v25, %v28
  %v44 = vsub.f32 %v26, %v28
  %v45 = vld [vmem:[%s1 + $0x1] sm:$0x1]
  %v46 = vperm.slane %v45, 0
  %v47 = vmul.f32 %v29, %v46
  %v48 = vmul.f32 %v30, %v46
  %v49 = vmul.f32 %v31, %v46
  %v50 = vmul.f32 %v32, %v46
  %v51 = vmul.f32 %v33, %v46
  %v52 = vmul.f32 %v34, %v46
  %v53 = vmul.f32 %v35, %v46
  %v54 = vmul.f32 %v36, %v46
  %v55 = vmul.f32 %v37, %v46
  %v56 = vmul.f32 %v38, %v46
  %v57 = vmul.f32 %v39, %v46
  %v58 = vmul.f32 %v40, %v46
  %v59 = vmul.f32 %v41, %v46
  %v60 = vmul.f32 %v42, %v46
  %v61 = vmul.f32 %v43, %v46
  %v62 = vmul.f32 %v44, %v46
  %v63 = vmax.f32 %v47, 0.0
  %v64 = vmax.f32 %v48, 0.0
  %v65 = vmax.f32 %v49, 0.0
  %v66 = vmax.f32 %v50, 0.0
  %v67 = vmax.f32 %v51, 0.0
  %v68 = vmax.f32 %v52, 0.0
  %v69 = vmax.f32 %v53, 0.0
  %v70 = vmax.f32 %v54, 0.0
  %v71 = vmax.f32 %v55, 0.0
  %v72 = vmax.f32 %v56, 0.0
  %v73 = vmax.f32 %v57, 0.0
  %v74 = vmax.f32 %v58, 0.0
  %v75 = vmax.f32 %v59, 0.0
  %v76 = vmax.f32 %v60, 0.0
  %v77 = vmax.f32 %v61, 0.0
  %v78 = vmax.f32 %v62, 0.0
  %79 = vst [vmem:[%s2] sm:$0xff] %v63
  %80 = vst [vmem:[%s2 + $0x8] sm:$0xff] %v64
  %81 = vst [vmem:[%s2 + $0x10] sm:$0xff] %v65
  %82 = vst [vmem:[%s2 + $0x18] sm:$0xff] %v66
  %83 = vst [vmem:[%s2 + $0x20] sm:$0xff] %v67
  %84 = vst [vmem:[%s2 + $0x28] sm:$0xff] %v68
  %85 = vst [vmem:[%s2 + $0x30] sm:$0xff] %v69
  %86 = vst [vmem:[%s2 + $0x38] sm:$0xff] %v70
  %87 = vst [vmem:[%s2 + $0x40] sm:$0xff] %v71
  %88 = vst [vmem:[%s2 + $0x48] sm:$0xff] %v72
  %89 = vst [vmem:[%s2 + $0x50] sm:$0xff] %v73
  %90 = vst [vmem:[%s2 + $0x58] sm:$0xff] %v74
  %91 = vst [vmem:[%s2 + $0x60] sm:$0xff] %v75
  %92 = vst [vmem:[%s2 + $0x68] sm:$0xff] %v76
  %93 = vst [vmem:[%s2 + $0x70] sm:$0xff] %v77
  %94 = vst [vmem:[%s2 + $0x78] sm:$0xff] %v78
  // Predicated region
  $region10: #{vae_forward.26} parent=0 // pred_check
    _
  $region11: #{vae_forward.26} parent=0 // pred_check_branch
    %96 = sbr.rel (0) target = $region13
  $region12: #{vae_forward.26} parent=0 // pred_region
    _
  $region13: #{vae_forward.26} parent=0 // pred_fallthru
    _
  // Predicated region
  $region14: #{vae_forward.26} parent=0 // pred_check
    _
  $region15: #{vae_forward.26} parent=0 // pred_check_branch
    %98 = sbr.rel (0) target = $region17
  $region16: #{vae_forward.26} parent=0 // pred_region
    _
  $region17: #{vae_forward.26} parent=0 // pred_fallthru
    _

// kernel: vae_forward.24
$region0: #{vae_forward.24}
  #allocation0 [shape = 'u32[]', space=smem, size = 0x4, offset = 0x4, fixed_abs, tag = 'smem constant byte address 0x4 - core index']
  #allocation1 [shape = 'u32[72,128]{1,0:T(1,128)}', space=vmem, size = 0x9000, scoped, tag = 'internal scratch']
  #allocation2 [shape = 'f32[128,128]{1,0:T(8,128)}', space=vmem, size = 0x10000, scoped, tag = 'scratch operand']
  %s0 = inlined_call_operand.vmem [shape: bf16[128,48], index: 0, kind: input, shape index: {}]
  %s1 = inlined_call_operand.vmem [shape: bf16[48,128], index: 1, kind: input, shape index: {}]
  %s2 = inlined_call_operand.vmem [shape: f32[128,128], index: 2, kind: output, shape index: {}]
  %s3 = sld [smem:[#allocation0]]
  $region26: #{vae_forward.24} parent=0
    _
  %s5 = ssub.s32 1, %s3
  %s6 = scalar_select 0, %s5, %s3
  // Predicated region
  $region2: #{vae_forward.24} parent=0 // pred_check
    _
  $region3: #{vae_forward.24} parent=0 // pred_check_branch
    %8 = sbr.rel (0) target = $region5
  $region4: #{vae_forward.24} parent=0 // pred_region
    _
  $region5: #{vae_forward.24} parent=0 // pred_fallthru
    _
  // Predicated region
  $region6: #{vae_forward.24} parent=0 // pred_check
    _
  $region7: #{vae_forward.24} parent=0 // pred_check_branch
    %10 = sbr.rel (0) target = $region9
  $region8: #{vae_forward.24} parent=0 // pred_region
    _
  $region9: #{vae_forward.24} parent=0 // pred_fallthru
    _
  %p12 = scmp.eq.s32.totalorder 0, 0
  // Predicated region
  $region10: #{vae_forward.24} parent=0 // pred_check
    %p13 = pneg %p12
  $region11: #{vae_forward.24} parent=0 // pred_check_branch
    %15 = sbr.rel (%p13) target = $region13
  $region12: #{vae_forward.24} parent=0 // pred_region
    %16 = vst [vmem:[#allocation2] sm:$0xff] 0.0
    %17 = vst [vmem:[#allocation2 + $0x8] sm:$0xff] 0.0
    %18 = vst [vmem:[#allocation2 + $0x10] sm:$0xff] 0.0
    %19 = vst [vmem:[#allocation2 + $0x18] sm:$0xff] 0.0
    %20 = vst [vmem:[#allocation2 + $0x20] sm:$0xff] 0.0
    %21 = vst [vmem:[#allocation2 + $0x28] sm:$0xff] 0.0
    %22 = vst [vmem:[#allocation2 + $0x30] sm:$0xff] 0.0
    %23 = vst [vmem:[#allocation2 + $0x38] sm:$0xff] 0.0
    %24 = vst [vmem:[#allocation2 + $0x40] sm:$0xff] 0.0
    %25 = vst [vmem:[#allocation2 + $0x48] sm:$0xff] 0.0
    %26 = vst [vmem:[#allocation2 + $0x50] sm:$0xff] 0.0
    %27 = vst [vmem:[#allocation2 + $0x58] sm:$0xff] 0.0
    %28 = vst [vmem:[#allocation2 + $0x60] sm:$0xff] 0.0
    %29 = vst [vmem:[#allocation2 + $0x68] sm:$0xff] 0.0
    %30 = vst [vmem:[#allocation2 + $0x70] sm:$0xff] 0.0
    %31 = vst [vmem:[#allocation2 + $0x78] sm:$0xff] 0.0
  $region13: #{vae_forward.24} parent=0 // pred_fallthru
    _
  %v32 = vld [vmem:[#allocation2] sm:$0xff]
  %v33 = vld [vmem:[#allocation2 + $0x8] sm:$0xff]
  %v34 = vld [vmem:[#allocation2 + $0x10] sm:$0xff]
  %v35 = vld [vmem:[#allocation2 + $0x18] sm:$0xff]
  %v36 = vld [vmem:[#allocation2 + $0x20] sm:$0xff]
  %v37 = vld [vmem:[#allocation2 + $0x28] sm:$0xff]
  %v38 = vld [vmem:[#allocation2 + $0x30] sm:$0xff]
  %v39 = vld [vmem:[#allocation2 + $0x38] sm:$0xff]
  %v40 = vld [vmem:[#allocation2 + $0x40] sm:$0xff]
  %v41 = vld [vmem:[#allocation2 + $0x48] sm:$0xff]
  %v42 = vld [vmem:[#allocation2 + $0x50] sm:$0xff]
  %v43 = vld [vmem:[#allocation2 + $0x58] sm:$0xff]
  %v44 = vld [vmem:[#allocation2 + $0x60] sm:$0xff]
  %v45 = vld [vmem:[#allocation2 + $0x68] sm:$0xff]
  %v46 = vld [vmem:[#allocation2 + $0x70] sm:$0xff]
  %v47 = vld [vmem:[#allocation2 + $0x78] sm:$0xff]
  %v48 = vld [vmem:[%s0] sm:$0xf]
  %v49 = vld [vmem:[%s0 + $0x4] sm:$0xf]
  %v50 = vld [vmem:[%s0 + $0x8] sm:$0xf]
  %v51 = vld [vmem:[%s0 + $0xc] sm:$0xf]
  %v52 = vld [vmem:[%s0 + $0x10] sm:$0xf]
  %v53 = vld [vmem:[%s0 + $0x14] sm:$0xf]
  %v54 = vld [vmem:[%s0 + $0x18] sm:$0xf]
  %v55 = vld [vmem:[%s0 + $0x1c] sm:$0xf]
  %v56 = vld [vmem:[%s0 + $0x20] sm:$0xf]
  %v57 = vld [vmem:[%s0 + $0x24] sm:$0xf]
  %v58 = vld [vmem:[%s0 + $0x28] sm:$0xf]
  %v59 = vld [vmem:[%s0 + $0x2c] sm:$0xf]
  %v60 = vld [vmem:[%s0 + $0x30] sm:$0xf]
  %v61 = vld [vmem:[%s0 + $0x34] sm:$0xf]
  %v62 = vld [vmem:[%s0 + $0x38] sm:$0xf]
  %v63 = vld [vmem:[%s0 + $0x3c] sm:$0xf]
  %v64 = vld [vmem:[%s1] sm:$0xf]
  %v65 = vld [vmem:[%s1 + $0x4] sm:$0xf]
  %v66 = vld [vmem:[%s1 + $0x8] sm:$0xf]
  %v67 = vld [vmem:[%s1 + $0xc] sm:$0xf]
  %v68 = vld [vmem:[%s1 + $0x10] sm:$0xf]
  %v69 = vld [vmem:[%s1 + $0x14] sm:$0xf]
  %v86 = vunpack.c.l.b16 %v48
  %v87 = vunpack.c.l.b16 %v49
  %v88 = vunpack.c.l.b16 %v50
  %v89 = vunpack.c.l.b16 %v51
  %v90 = vunpack.c.l.b16 %v52
  %v91 = vunpack.c.l.b16 %v53
  %v92 = vunpack.c.l.b16 %v54
  %v93 = vunpack.c.l.b16 %v55
  %v94 = vunpack.c.l.b16 %v56
  %v95 = vunpack.c.l.b16 %v57
  %v96 = vunpack.c.l.b16 %v58
  %v97 = vunpack.c.l.b16 %v59
  %v98 = vunpack.c.l.b16 %v60
  %v99 = vunpack.c.l.b16 %v61
  %v100 = vunpack.c.l.b16 %v62
  %v101 = vunpack.c.l.b16 %v63
  %v102 = vpack.c.b16 %v87, %v86
  %v103 = vpack.c.b16 %v89, %v88
  %v104 = vpack.c.b16 %v91, %v90
  %v105 = vpack.c.b16 %v93, %v92
  %v106 = vpack.c.b16 %v95, %v94
  %v107 = vpack.c.b16 %v97, %v96
  %v108 = vpack.c.b16 %v99, %v98
  %v109 = vpack.c.b16 %v101, %v100
  %v116 = vunpack.c.l.b16 %v64
  %v117 = vunpack.c.l.b16 %v65
  %v118 = vunpack.c.l.b16 %v66
  %v119 = vunpack.c.l.b16 %v67
  %v120 = vunpack.c.l.b16 %v68
  %v121 = vunpack.c.l.b16 %v69
  %v122 = vpack.c.b16 %v117, %v116
  %v123 = vpack.c.b16 %v119, %v118
  %v124 = vpack.c.b16 %v121, %v120
  %vm128 = vcmask 392192
  %v130 = vsel %vm128, %v102, 0
  %v133 = vsel %vm128, %v103, 0
  %v136 = vsel %vm128, %v104, 0
  %v139 = vsel %vm128, %v105, 0
  %v142 = vsel %vm128, %v106, 0
  %v145 = vsel %vm128, %v107, 0
  %v148 = vsel %vm128, %v108, 0
  %v151 = vsel %vm128, %v109, 0
  %153 = vmatpush.bf16.msra.mxu0 0
  %154 = vmatpush.bf16.msra.mxu0 0
  %155 = vmatpush.bf16.msra.mxu0 0
  %156 = vmatpush.bf16.msra.mxu0 0
  %157 = vmatpush.bf16.msra.mxu0 0
  %158 = vmatpush.bf16.msra.mxu0 %v124
  %159 = vmatpush.bf16.msra.mxu0 %v123
  %160 = vmatpush.bf16.msra.mxu0 %v122
  %161 = vmatmul.bf16.gmra.mxu0 %v130
  %v162 = vpop.f32.mrf.mxu0
  %v163 = vadd.f32 0.0, %v162
  %v164 = vpop.f32.mrf.mxu0
  %v165 = vadd.f32 0.0, %v164
  %166 = vmatmul.bf16.gmra.mxu0 %v133
  %v167 = vpop.f32.mrf.mxu0
  %v168 = vadd.f32 0.0, %v167
  %v169 = vpop.f32.mrf.mxu0
  %v170 = vadd.f32 0.0, %v169
  %171 = vmatmul.bf16.gmra.mxu0 %v136
  %v172 = vpop.f32.mrf.mxu0
  %v173 = vadd.f32 0.0, %v172
  %v174 = vpop.f32.mrf.mxu0
  %v175 = vadd.f32 0.0, %v174
  %176 = vmatmul.bf16.gmra.mxu0 %v139
  %v177 = vpop.f32.mrf.mxu0
  %v178 = vadd.f32 0.0, %v177
  %v179 = vpop.f32.mrf.mxu0
  %v180 = vadd.f32 0.0, %v179
  %181 = vmatmul.bf16.gmra.mxu0 %v142
  %v182 = vpop.f32.mrf.mxu0
  %v183 = vadd.f32 0.0, %v182
  %v184 = vpop.f32.mrf.mxu0
  %v185 = vadd.f32 0.0, %v184
  %186 = vmatmul.bf16.gmra.mxu0 %v145
  %v187 = vpop.f32.mrf.mxu0
  %v188 = vadd.f32 0.0, %v187
  %v189 = vpop.f32.mrf.mxu0
  %v190 = vadd.f32 0.0, %v189
  %191 = vmatmul.bf16.gmra.mxu0 %v148
  %v192 = vpop.f32.mrf.mxu0
  %v193 = vadd.f32 0.0, %v192
  %v194 = vpop.f32.mrf.mxu0
  %v195 = vadd.f32 0.0, %v194
  %196 = vmatmul.bf16.gmra.mxu0 %v151
  %v197 = vpop.f32.mrf.mxu0
  %v198 = vadd.f32 0.0, %v197
  %v199 = vpop.f32.mrf.mxu0
  %v200 = vadd.f32 0.0, %v199
  %201 = vdwg.mxu0
  %v202 = vadd.f32 %v32, %v163
  %v203 = vadd.f32 %v33, %v165
  %v204 = vadd.f32 %v34, %v168
  %v205 = vadd.f32 %v35, %v170
  %v206 = vadd.f32 %v36, %v173
  %v207 = vadd.f32 %v37, %v175
  %v208 = vadd.f32 %v38, %v178
  %v209 = vadd.f32 %v39, %v180
  %v210 = vadd.f32 %v40, %v183
  %v211 = vadd.f32 %v41, %v185
  %v212 = vadd.f32 %v42, %v188
  %v213 = vadd.f32 %v43, %v190
  %v214 = vadd.f32 %v44, %v193
  %v215 = vadd.f32 %v45, %v195
  %v216 = vadd.f32 %v46, %v198
  %v217 = vadd.f32 %v47, %v200
  %218 = vst [vmem:[#allocation2] sm:$0xff] %v202
  %219 = vst [vmem:[#allocation2 + $0x8] sm:$0xff] %v203
  %220 = vst [vmem:[#allocation2 + $0x10] sm:$0xff] %v204
  %221 = vst [vmem:[#allocation2 + $0x18] sm:$0xff] %v205
  %222 = vst [vmem:[#allocation2 + $0x20] sm:$0xff] %v206
  %223 = vst [vmem:[#allocation2 + $0x28] sm:$0xff] %v207
  %224 = vst [vmem:[#allocation2 + $0x30] sm:$0xff] %v208
  %225 = vst [vmem:[#allocation2 + $0x38] sm:$0xff] %v209
  %226 = vst [vmem:[#allocation2 + $0x40] sm:$0xff] %v210
  %227 = vst [vmem:[#allocation2 + $0x48] sm:$0xff] %v211
  %228 = vst [vmem:[#allocation2 + $0x50] sm:$0xff] %v212
  %229 = vst [vmem:[#allocation2 + $0x58] sm:$0xff] %v213
  %230 = vst [vmem:[#allocation2 + $0x60] sm:$0xff] %v214
  %231 = vst [vmem:[#allocation2 + $0x68] sm:$0xff] %v215
  %232 = vst [vmem:[#allocation2 + $0x70] sm:$0xff] %v216
  %233 = vst [vmem:[#allocation2 + $0x78] sm:$0xff] %v217
  // Predicated region
  $region14: #{vae_forward.24} parent=0 // pred_check
    %p234 = pneg %p12
  $region15: #{vae_forward.24} parent=0 // pred_check_branch
    %236 = sbr.rel (%p234) target = $region17
  $region16: #{vae_forward.24} parent=0 // pred_region
    %v237 = vld [vmem:[#allocation2] sm:$0xff]
    %v238 = vld [vmem:[#allocation2 + $0x8] sm:$0xff]
    %v239 = vld [vmem:[#allocation2 + $0x10] sm:$0xff]
    %v240 = vld [vmem:[#allocation2 + $0x18] sm:$0xff]
    %v241 = vld [vmem:[#allocation2 + $0x20] sm:$0xff]
    %v242 = vld [vmem:[#allocation2 + $0x28] sm:$0xff]
    %v243 = vld [vmem:[#allocation2 + $0x30] sm:$0xff]
    %v244 = vld [vmem:[#allocation2 + $0x38] sm:$0xff]
    %v245 = vld [vmem:[#allocation2 + $0x40] sm:$0xff]
    %v246 = vld [vmem:[#allocation2 + $0x48] sm:$0xff]
    %v247 = vld [vmem:[#allocation2 + $0x50] sm:$0xff]
    %v248 = vld [vmem:[#allocation2 + $0x58] sm:$0xff]
    %v249 = vld [vmem:[#allocation2 + $0x60] sm:$0xff]
    %v250 = vld [vmem:[#allocation2 + $0x68] sm:$0xff]
    %v251 = vld [vmem:[#allocation2 + $0x70] sm:$0xff]
    %v252 = vld [vmem:[#allocation2 + $0x78] sm:$0xff]
    %253 = vst [vmem:[%s2] sm:$0xff] %v237
    %254 = vst [vmem:[%s2 + $0x8] sm:$0xff] %v238
    %255 = vst [vmem:[%s2 + $0x10] sm:$0xff] %v239
    %256 = vst [vmem:[%s2 + $0x18] sm:$0xff] %v240
    %257 = vst [vmem:[%s2 + $0x20] sm:$0xff] %v241
    %258 = vst [vmem:[%s2 + $0x28] sm:$0xff] %v242
    %259 = vst [vmem:[%s2 + $0x30] sm:$0xff] %v243
    %260 = vst [vmem:[%s2 + $0x38] sm:$0xff] %v244
    %261 = vst [vmem:[%s2 + $0x40] sm:$0xff] %v245
    %262 = vst [vmem:[%s2 + $0x48] sm:$0xff] %v246
    %263 = vst [vmem:[%s2 + $0x50] sm:$0xff] %v247
    %264 = vst [vmem:[%s2 + $0x58] sm:$0xff] %v248
    %265 = vst [vmem:[%s2 + $0x60] sm:$0xff] %v249
    %266 = vst [vmem:[%s2 + $0x68] sm:$0xff] %v250
    %267 = vst [vmem:[%s2 + $0x70] sm:$0xff] %v251
    %268 = vst [vmem:[%s2 + $0x78] sm:$0xff] %v252
  $region17: #{vae_forward.24} parent=0 // pred_fallthru
    _
  // Predicated region
  $region18: #{vae_forward.24} parent=0 // pred_check
    _
  $region19: #{vae_forward.24} parent=0 // pred_check_branch
    %270 = sbr.rel (0) target = $region21
  $region20: #{vae_forward.24} parent=0 // pred_region
    _
  $region21: #{vae_forward.24} parent=0 // pred_fallthru
    _
  // Predicated region
  $region22: #{vae_forward.24} parent=0 // pred_check
    _
  $region23: #{vae_forward.24} parent=0 // pred_check_branch
    %272 = sbr.rel (0) target = $region25
  $region24: #{vae_forward.24} parent=0 // pred_region
    _
  $region25: #{vae_forward.24} parent=0 // pred_fallthru
    _

// kernel: vae_forward.28
$region0: #{vae_forward.28}
  #allocation0 [shape = 'u32[]', space=smem, size = 0x4, offset = 0x4, fixed_abs, tag = 'smem constant byte address 0x4 - core index']
  #allocation1 [shape = 'u32[72,128]{1,0:T(1,128)}', space=vmem, size = 0x9000, scoped, tag = 'internal scratch']
  %s0 = inlined_call_operand.vmem [shape: f32[32,256], index: 0, kind: input, shape index: {}]
  %s1 = inlined_call_operand.vmem [shape: f32[2,256], index: 1, kind: output, shape index: {}]
  %s2 = sld [smem:[#allocation0]]
  $region18: #{vae_forward.28} parent=0
    _
  %s4 = ssub.s32 1, %s2
  %s5 = scalar_select 0, %s4, %s2
  // Predicated region
  $region2: #{vae_forward.28} parent=0 // pred_check
    _
  $region3: #{vae_forward.28} parent=0 // pred_check_branch
    %7 = sbr.rel (0) target = $region5
  $region4: #{vae_forward.28} parent=0 // pred_region
    _
  $region5: #{vae_forward.28} parent=0 // pred_fallthru
    _
  %p8 = scmp.eq.s32.totalorder 0, 0
  // Predicated region
  $region6: #{vae_forward.28} parent=0 // pred_check
    %p9 = pneg %p8
  $region7: #{vae_forward.28} parent=0 // pred_check_branch
    %11 = sbr.rel (%p9) target = $region9
  $region8: #{vae_forward.28} parent=0 // pred_region
    %12 = vst [vmem:[%s1] sm:$0xf] 0.0
  $region9: #{vae_forward.28} parent=0 // pred_fallthru
    _
  %v13 = vld [vmem:[%s0] sm:$0xff]
  %v14 = vld [vmem:[%s0 + $0x8] sm:$0xff]
  %v15 = vld [vmem:[%s0 + $0x10] sm:$0xff]
  %v16 = vld [vmem:[%s0 + $0x18] sm:$0xff]
  %v17 = vld [vmem:[%s0 + $0x20] sm:$0xff]
  %v18 = vld [vmem:[%s0 + $0x28] sm:$0xff]
  %v19 = vld [vmem:[%s0 + $0x30] sm:$0xff]
  %v20 = vld [vmem:[%s0 + $0x38] sm:$0xff]
  %v21 = vadd.f32 %v13, %v15
  %v22 = vadd.f32 %v21, %v17
  %v23 = vadd.f32 %v22, %v19
  %v24 = vrot.slane %v23, 4
  %v25 = vadd.f32 %v23, %v24
  %v26 = vrot.slane %v25, 2
  %v27 = vadd.f32 %v25, %v26
  %v28 = vrot.slane %v27, 1
  %v29 = vadd.f32 %v27, %v28
  %v30 = vadd.f32 %v14, %v16
  %v31 = vadd.f32 %v30, %v18
  %v32 = vadd.f32 %v31, %v20
  %v33 = vrot.slane %v32, 4
  %v34 = vadd.f32 %v32, %v33
  %v35 = vrot.slane %v34, 2
  %v36 = vadd.f32 %v34, %v35
  %v37 = vrot.slane %v36, 1
  %v38 = vadd.f32 %v36, %v37
  %v39 = vmul.f32 %v13, %v13
  %v40 = vmul.f32 %v14, %v14
  %v41 = vmul.f32 %v15, %v15
  %v42 = vmul.f32 %v16, %v16
  %v43 = vmul.f32 %v17, %v17
  %v44 = vmul.f32 %v18, %v18
  %v45 = vmul.f32 %v19, %v19
  %v46 = vmul.f32 %v20, %v20
  %v47 = vadd.f32 %v39, %v41
  %v48 = vadd.f32 %v47, %v43
  %v49 = vadd.f32 %v48, %v45
  %v50 = vrot.slane %v49, 4
  %v51 = vadd.f32 %v49, %v50
  %v52 = vrot.slane %v51, 2
  %v53 = vadd.f32 %v51, %v52
  %v54 = vrot.slane %v53, 1
  %v55 = vadd.f32 %v53, %v54
  %v56 = vadd.f32 %v40, %v42
  %v57 = vadd.f32 %v56, %v44
  %v58 = vadd.f32 %v57, %v46
  %v59 = vrot.slane %v58, 4
  %v60 = vadd.f32 %v58, %v59
  %v61 = vrot.slane %v60, 2
  %v62 = vadd.f32 %v60, %v61
  %v63 = vrot.slane %v62, 1
  %v64 = vadd.f32 %v62, %v63
  %vm65 = vcmask 1040384
  %v66 = vsel %vm65, %v29, %v55
  %v67 = vsel %vm65, %v38, %v64
  %v68 = vld [vmem:[%s1] sm:$0xf]
  %v71 = vrot.slane %v67, 6
  %vm72 = vcmask 1041408
  %v73 = vsel %vm72, %v66, %v71
  %v75 = vadd.f32 %v68, %v73
  %76 = vst [vmem:[%s1] sm:$0xf] %v75
  // Predicated region
  $region10: #{vae_forward.28} parent=0 // pred_check
    _
  $region11: #{vae_forward.28} parent=0 // pred_check_branch
    %78 = sbr.rel (0) target = $region13
  $region12: #{vae_forward.28} parent=0 // pred_region
    _
  $region13: #{vae_forward.28} parent=0 // pred_fallthru
    _
  // Predicated region
  $region14: #{vae_forward.28} parent=0 // pred_check
    _
  $region15: #{vae_forward.28} parent=0 // pred_check_branch
    %80 = sbr.rel (0) target = $region17
  $region16: #{vae_forward.28} parent=0 // pred_region
    _
  $region17: #{vae_forward.28} parent=0 // pred_fallthru
    _

// kernel: vae_forward.27
$region0: #{vae_forward.27}
  #allocation0 [shape = 'u32[]', space=smem, size = 0x4, offset = 0x4, fixed_abs, tag = 'smem constant byte address 0x4 - core index']
  #allocation1 [shape = 'u32[72,128]{1,0:T(1,128)}', space=vmem, size = 0x9000, scoped, tag = 'internal scratch']
  #allocation2 [shape = 'f32[32,256]{1,0:T(8,128)}', space=vmem, size = 0x8000, scoped, tag = 'scratch operand']
  %s0 = inlined_call_operand.vmem [shape: bf16[32,2048], index: 0, kind: input, shape index: {}]
  %s1 = inlined_call_operand.vmem [shape: bf16[2048,256], index: 1, kind: input, shape index: {}]
  %s2 = inlined_call_operand.vmem [shape: f32[32,256], index: 2, kind: output, shape index: {}]
  %s3 = sld [smem:[#allocation0]]
  $region72: #{vae_forward.27} parent=0
    _
  %s5 = ssub.s32 1, %s3
  %s6 = scalar_select 0, %s5, %s3
  $region1: #{vae_forward.27} parent=0
    #allocation3 [shape = 'u8[131072]{0}', space=vmem, size = 0x20000, scoped, tag = 'input window, operand 0']
    loop: start=0, step=1, limit=4
    $region2: #{vae_forward.27} parent=1 // loop_pre_header
      _
    $region3: #{vae_forward.27} parent=1 // loop_header
      %s8 = sphi 0, %s12
      %p9 = scmp.ge.s32.totalorder %s8, 4
      %s15 = sphi 0, %s34
      %s16 = sphi 0, %s30
      %s17 = sphi 0, %s26
      %s18 = sphi 0, %s15
      %s19 = sphi 0, %s16
      %s20 = sphi 0, %s17
      %s21 = sphi 0, %s18
      %s22 = sphi 0, %s19
      %s23 = sphi 0, %s20
      %s39 = sphi 0, %s41
      %s42 = sphi 0, %s39
      %s43 = sphi 0, %s42
      %s59 = sphi 0, %s43
      %s67 = sphi 0, %s69
      %s70 = sphi 0, %s67
      %s71 = sphi 0, %s70
      %s87 = sphi 0, %s71
      %s95 = sphi 0, %s97
      %s98 = sphi 0, %s95
      %s99 = sphi 0, %s98
      %s115 = sphi 0, %s99
    $region4: #{vae_forward.27} parent=1 // loop_header_branch
      %11 = sbr.rel (%p9) target = $region8
    $region5: #{vae_forward.27} parent=1 // loop_body
      %s13 = ssub.s32 %s8, 1
      %s14 = ssub.s32 %s8, 2
      %s24 = sadd.s32 1, %s17
      %p25 = scmp.ge.s32.totalorder %s24, 2
      %s26 = scalar_select %p25, 0, %s24
      %s27 = sadd.s32 1, %s16
      %s28 = scalar_select %p25, %s27, %s16
      %p29 = scmp.ge.s32.totalorder %s28, 1
      %s30 = scalar_select %p29, 0, %s28
      %s31 = sadd.s32 1, %s15
      %s32 = scalar_select %p29, %s31, %s15
      %p33 = scmp.ge.s32.totalorder %s32, 1
      %s34 = scalar_select %p33, 0, %s32
      %s35 = ssub.s32 %s15, %s34
      %s36 = ssub.s32 %s17, %s26
      %s37 = sor.u32 %s35, %s36
      %p38 = scmp.eq.s32.totalorder %s37, 0
      %s40 = sadd.s32 %s39, 1
      %s41 = scalar_select %p38, %s39, %s40
      %p44 = pneg %p38
      %p45 = scmp.eq.s32.totalorder %s8, 1
      %p46 = por %p44, %p45
      %p47 = scmp.ne.s32.totalorder %s39, %s42
      %p48 = scmp.eq.s32.totalorder %s8, 0
      %p49 = por %p47, %p48
      %p50 = scmp.ne.s32.totalorder %s39, %s42
      %p51 = scmp.eq.s32.totalorder %s13, 1
      %p52 = por %p50, %p51
      %p53 = scmp.ne.s32.totalorder %s42, %s43
      %p54 = scmp.eq.s32.totalorder %s13, 0
      %p55 = por %p53, %p54
      %p56 = scmp.ne.s32.totalorder %s42, %s43
      %p57 = scmp.eq.s32.totalorder %s14, 1
      %p58 = por %p56, %p57
      %p60 = scmp.ne.s32.totalorder %s43, %s59
      %p61 = scmp.eq.s32.totalorder %s14, 0
      %p62 = por %p60, %p61
      %s63 = ssub.s32 %s17, %s26
      %s64 = ssub.s32 %s16, %s30
      %s65 = sor.u32 %s63, %s64
      %p66 = scmp.eq.s32.totalorder %s65, 0
      %s68 = sadd.s32 %s67, 1
      %s69 = scalar_select %p66, %s67, %s68
      %p72 = pneg %p66
      %p73 = scmp.eq.s32.totalorder %s8, 1
      %p74 = por %p72, %p73
      %p75 = scmp.ne.s32.totalorder %s67, %s70
      %p76 = scmp.eq.s32.totalorder %s8, 0
      %p77 = por %p75, %p76
      %p78 = scmp.ne.s32.totalorder %s67, %s70
      %p79 = scmp.eq.s32.totalorder %s13, 1
      %p80 = por %p78, %p79
      %p81 = scmp.ne.s32.totalorder %s70, %s71
      %p82 = scmp.eq.s32.totalorder %s13, 0
      %p83 = por %p81, %p82
      %p84 = scmp.ne.s32.totalorder %s70, %s71
      %p85 = scmp.eq.s32.totalorder %s14, 1
      %p86 = por %p84, %p85
      %p88 = scmp.ne.s32.totalorder %s71, %s87
      %p89 = scmp.eq.s32.totalorder %s14, 0
      %p90 = por %p88, %p89
      %s91 = ssub.s32 %s15, %s34
      %s92 = ssub.s32 %s16, %s30
      %s93 = sor.u32 %s91, %s92
      %p94 = scmp.eq.s32.totalorder %s93, 0
      %s96 = sadd.s32 %s95, 1
      %s97 = scalar_select %p94, %s95, %s96
      %p100 = pneg %p94
      %p101 = scmp.eq.s32.totalorder %s8, 1
      %p102 = por %p100, %p101
      %p103 = scmp.ne.s32.totalorder %s95, %s98
      %p104 = scmp.eq.s32.totalorder %s8, 0
      %p105 = por %p103, %p104
      %p106 = scmp.ne.s32.totalorder %s95, %s98
      %p107 = scmp.eq.s32.totalorder %s13, 1
      %p108 = por %p106, %p107
      %p109 = scmp.ne.s32.totalorder %s98, %s99
      %p110 = scmp.eq.s32.totalorder %s13, 0
      %p111 = por %p109, %p110
      %p112 = scmp.ne.s32.totalorder %s98, %s99
      %p113 = scmp.eq.s32.totalorder %s14, 1
      %p114 = por %p112, %p113
      %p116 = scmp.ne.s32.totalorder %s99, %s115
      %p117 = scmp.eq.s32.totalorder %s14, 0
      %p118 = por %p116, %p117
      %p119 = scmp.le.s32.totalorder 1, %s8
      %p120 = scmp.lt.s32.totalorder %s8, 3
      %p121 = pnand %p119, %p120
      %p122 = pneg %p121
      // Predicated region
      $region9: #{vae_forward.27} parent=5 // pred_check
        _
      $region10: #{vae_forward.27} parent=5 // pred_check_branch
        %124 = sbr.rel (%p121) target = $region12
      $region11: #{vae_forward.27} parent=5 // pred_region
        %s125 = ssub.s32 %s8, 1
      $region12: #{vae_forward.27} parent=5 // pred_fallthru
        _
      %p126 = scmp.lt.s32.totalorder %s8, 2
      // Predicated region
      $region13: #{vae_forward.27} parent=5 // pred_check
        %p127 = pneg %p126
      $region14: #{vae_forward.27} parent=5 // pred_check_branch
        %129 = sbr.rel (%p127) target = $region16
      $region15: #{vae_forward.27} parent=5 // pred_region
        // Predicated region
        $region17: #{vae_forward.27} parent=15 // pred_check
          %p130 = pneg %p49
        $region18: #{vae_forward.27} parent=15 // pred_check_branch
          %132 = sbr.rel (%p130) target = $region20
        $region19: #{vae_forward.27} parent=15 // pred_region
          %s133 = sand.u32 %s39, 1
          %s134 = sand.u32 %s39, 1
          %s135 = smul.addr %s134, 128
          %s136 = scalar_lea.vmem [#allocation3], %s135
          %s137 = smul.u32 4, %s15
          %s138 = smul.u32 8, %s17
          %s139 = smul.addr %s137, 16
          %s140 = sadd.s32 %s138, %s139
          %s141 = smul.addr %s140, 4
          %s142 = scalar_lea.vmem %s0, %s141
          // Predicated region
          $region21: #{vae_forward.27} parent=19 // pred_check
            _
          $region22: #{vae_forward.27} parent=19 // pred_check_branch
            %144 = sbr.rel (0) target = $region24
          $region23: #{vae_forward.27} parent=19 // pred_region
            // Predicated region
            $region25: #{vae_forward.27} parent=23 // pred_check
              _
            $region26: #{vae_forward.27} parent=23 // pred_check_branch
              %146 = sbr.rel (0) target = $region28
            $region27: #{vae_forward.27} parent=23 // pred_region
              loop: start=0, step=1, limit=1
              $region29: #{vae_forward.27} parent=27 // loop_pre_header
                _
              $region30: #{vae_forward.27} parent=27 // loop_header
                %s148 = sphi 0, %s152
                %p149 = scmp.ge.s32.totalorder %s148, 1
                %s153 = sphi %s142, %s142
                %s154 = sphi %s136, %s136
              $region31: #{vae_forward.27} parent=27 // loop_header_branch
                %151 = sbr.rel (%p149) target = $region35
              $region32: #{vae_forward.27} parent=27 // loop_body
                %v155 = vld [vmem:[%s153] sm:$0xff]
                %156 = vst [vmem:[%s154] sm:$0xff] %v155
                %v157 = vld [vmem:[%s153 + $0x8] sm:$0xff]
                %158 = vst [vmem:[%s154 + $0x8] sm:$0xff] %v157
                %v159 = vld [vmem:[%s153 + $0x10] sm:$0xff]
                %160 = vst [vmem:[%s154 + $0x10] sm:$0xff] %v159
                %v161 = vld [vmem:[%s153 + $0x18] sm:$0xff]
                %162 = vst [vmem:[%s154 + $0x18] sm:$0xff] %v161
                %v163 = vld [vmem:[%s153 + $0x40] sm:$0xff]
                %164 = vst [vmem:[%s154 + $0x20] sm:$0xff] %v163
                %v165 = vld [vmem:[%s153 + $0x48] sm:$0xff]
                %166 = vst [vmem:[%s154 + $0x28] sm:$0xff] %v165
                %v167 = vld [vmem:[%s153 + $0x50] sm:$0xff]
                %168 = vst [vmem:[%s154 + $0x30] sm:$0xff] %v167
                %v169 = vld [vmem:[%s153 + $0x58] sm:$0xff]
                %170 = vst [vmem:[%s154 + $0x38] sm:$0xff] %v169
                %v171 = vld [vmem:[%s153 + $0x80] sm:$0xff]
                %172 = vst [vmem:[%s154 + $0x40] sm:$0xff] %v171
                %v173 = vld [vmem:[%s153 + $0x88] sm:$0xff]
                %174 = vst [vmem:[%s154 + $0x48] sm:$0xff] %v173
                %v175 = vld [vmem:[%s153 + $0x90] sm:$0xff]
                %176 = vst [vmem:[%s154 + $0x50] sm:$0xff] %v175
                %v177 = vld [vmem:[%s153 + $0x98] sm:$0xff]
                %178 = vst [vmem:[%s154 + $0x58] sm:$0xff] %v177
                %v179 = vld [vmem:[%s153 + $0xc0] sm:$0xff]
                %180 = vst [vmem:[%s154 + $0x60] sm:$0xff] %v179
                %v181 = vld [vmem:[%s153 + $0xc8] sm:$0xff]
                %182 = vst [vmem:[%s154 + $0x68] sm:$0xff] %v181
                %v183 = vld [vmem:[%s153 + $0xd0] sm:$0xff]
                %184 = vst [vmem:[%s154 + $0x70] sm:$0xff] %v183
                %v185 = vld [vmem:[%s153 + $0xd8] sm:$0xff]
                %186 = vst [vmem:[%s154 + $0x78] sm:$0xff] %v185
              $region33: #{vae_forward.27} parent=27 // loop_footer
                %s152 = sadd.s32 1, %s148
              $region34: #{vae_forward.27} parent=27 // loop_footer_branch
                %147 = sbr.rel target = $region30
              $region35: #{vae_forward.27} parent=27 // loop_exit
                _
            $region28: #{vae_forward.27} parent=23 // pred_fallthru
              _
            // Predicated region
            $region36: #{vae_forward.27} parent=23 // pred_check
              _
            $region37: #{vae_forward.27} parent=23 // pred_check_branch
              %188 = sbr.rel target = $region39
            $region38: #{vae_forward.27} parent=23 // pred_region
              _
            $region39: #{vae_forward.27} parent=23 // pred_fallthru
              _
          $region24: #{vae_forward.27} parent=19 // pred_fallthru
            _
          %189 = vnop
        $region20: #{vae_forward.27} parent=15 // pred_fallthru
          _
        // Predicated region
        $region40: #{vae_forward.27} parent=15 // pred_check
          %p190 = pneg %p77
        $region41: #{vae_forward.27} parent=15 // pred_check_branch
          %192 = sbr.rel (%p190) target = $region43
        $region42: #{vae_forward.27} parent=15 // pred_region
          %s193 = smul.u32 128, %s17
          %s194 = smul.u32 2, %s16
          %p195 = scmp.lt.s32.totalorder %s193, 255
          %s196 = scalar_select %p195, %s193, 255
          %p197 = scmp.lt.s32.totalorder %s194, 1
          %s198 = scalar_select %p197, %s194, 1
          %s199 = smul.addr %s196, 2
          %s200 = sadd.s32 %s198, %s199
          %s201 = smul.addr %s200, 4
          %s202 = scalar_lea.vmem %s1, %s201
          %s203 = smul.u32 128, %s17
          %s204 = smul.u32 2, %s16
        $region43: #{vae_forward.27} parent=15 // pred_fallthru
          _
      $region16: #{vae_forward.27} parent=5 // pred_fallthru
        _
      %p205 = scmp.le.s32.totalorder 1, %s8
      %p206 = scmp.lt.s32.totalorder %s8, 3
      %p207 = pnand %p205, %p206
      %p208 = pneg %p207
      // Predicated region
      $region44: #{vae_forward.27} parent=5 // pred_check
        _
      $region45: #{vae_forward.27} parent=5 // pred_check_branch
        %210 = sbr.rel (%p207) target = $region47
      $region46: #{vae_forward.27} parent=5 // pred_region
        %s211 = ssub.s32 %s8, 1
        %s212 = sand.u32 %s42, 1
        %s213 = sand.u32 %s42, 1
        %s214 = smul.addr %s213, 128
        %s215 = scalar_lea.vmem [#allocation3], %s214
        // Predicated region
        $region48: #{vae_forward.27} parent=46 // pred_check
          %p216 = pneg %p55
        $region49: #{vae_forward.27} parent=46 // pred_check_branch
          %218 = sbr.rel (%p216) target = $region51
        $region50: #{vae_forward.27} parent=46 // pred_region
          _
        $region51: #{vae_forward.27} parent=46 // pred_fallthru
          _
        %s219 = sand.u32 %s42, 1
        %s220 = sand.u32 %s42, 1
        %s221 = smul.addr %s220, 128
        %s222 = scalar_lea.vmem [#allocation3], %s221
        %p223 = pneg %p55
        %p224 = pneg %p52
        %s225 = smul.u32 128, %s20
        %s226 = smul.u32 2, %s19
        %p227 = scmp.lt.s32.totalorder %s225, 255
        %s228 = scalar_select %p227, %s225, 255
        %p229 = scmp.lt.s32.totalorder %s226, 1
        %s230 = scalar_select %p229, %s226, 1
        %s231 = smul.addr %s228, 2
        %s232 = sadd.s32 %s230, %s231
        %s233 = smul.addr %s232, 4
        %s234 = scalar_lea.vmem %s1, %s233
        %p235 = pneg %p83
        %p236 = pneg %p80
        %p237 = pneg %p111
        %p238 = pneg %p108
        %s239 = smul.u32 4, %s18
        %s240 = smul.u32 2, %s19
        %p241 = scmp.lt.s32.totalorder %s239, 3
        %s242 = scalar_select %p241, %s239, 3
        %p243 = scmp.lt.s32.totalorder %s240, 1
        %s244 = scalar_select %p243, %s240, 1
        %s245 = smul.addr %s242, 2
        %s246 = sadd.s32 %s244, %s245
        %s247 = smul.addr %s246, 8
        %s248 = scalar_lea.vmem %s2, %s247
        %s249 = smul.u32 4, %s18
        %s250 = smul.u32 8, %s20
        %s251 = smul.u32 128, %s20
        %s252 = smul.u32 2, %s19
        %p253 = scmp.lt.s32.totalorder %s251, 255
        %s254 = scalar_select %p253, %s251, 255
        %p255 = scmp.lt.s32.totalorder %s252, 1
        %s256 = scalar_select %p255, %s252, 1
        %s257 = smul.addr %s254, 2
        %s258 = sadd.s32 %s256, %s257
        %s259 = smul.addr %s258, 4
        %s260 = scalar_lea.vmem %s1, %s259
        %s261 = smul.u32 128, %s20
        %s262 = smul.u32 2, %s19
        %s263 = smul.u32 4, %s18
        %s264 = smul.u32 2, %s19
        %p265 = scmp.lt.s32.totalorder %s263, 3
        %s266 = scalar_select %p265, %s263, 3
        %p267 = scmp.lt.s32.totalorder %s264, 1
        %s268 = scalar_select %p267, %s264, 1
        %s269 = smul.addr %s266, 2
        %s270 = sadd.s32 %s268, %s269
        %s271 = smul.addr %s270, 8
        %s272 = scalar_lea.vmem %s2, %s271
        %s273 = smul.u32 4, %s18
        %s274 = smul.u32 2, %s19
        %p275 = scmp.eq.s32.totalorder %s20, 0
        // Predicated region
        $region52: #{vae_forward.27} parent=46 // pred_check
          %p276 = pneg %p275
        $region53: #{vae_forward.27} parent=46 // pred_check_branch
          %278 = sbr.rel (%p276) target = $region55
        $region54: #{vae_forward.27} parent=46 // pred_region
          %279 = vst [vmem:[#allocation2] sm:$0xff] 0.0
          %280 = vst [vmem:[#allocation2 + $0x8] sm:$0xff] 0.0
          %281 = vst [vmem:[#allocation2 + $0x10] sm:$0xff] 0.0
          %282 = vst [vmem:[#allocation2 + $0x18] sm:$0xff] 0.0
          %283 = vst [vmem:[#allocation2 + $0x20] sm:$0xff] 0.0
          %284 = vst [vmem:[#allocation2 + $0x28] sm:$0xff] 0.0
          %285 = vst [vmem:[#allocation2 + $0x30] sm:$0xff] 0.0
          %286 = vst [vmem:[#allocation2 + $0x38] sm:$0xff] 0.0
        $region55: #{vae_forward.27} parent=46 // pred_fallthru
          _
        %v287 = vld [vmem:[#allocation2] sm:$0xff]
        %v288 = vld [vmem:[#allocation2 + $0x8] sm:$0xff]
        %v289 = vld [vmem:[#allocation2 + $0x10] sm:$0xff]
        %v290 = vld [vmem:[#allocation2 + $0x18] sm:$0xff]
        %v291 = vld [vmem:[#allocation2 + $0x20] sm:$0xff]
        %v292 = vld [vmem:[#allocation2 + $0x28] sm:$0xff]
        %v293 = vld [vmem:[#allocation2 + $0x30] sm:$0xff]
        %v294 = vld [vmem:[#allocation2 + $0x38] sm:$0xff]
        %v295 = vld [vmem:[%s215] sm:$0xff]
        %v296 = vld [vmem:[%s215 + $0x8] sm:$0xff]
        %v297 = vld [vmem:[%s215 + $0x10] sm:$0xff]
        %v298 = vld [vmem:[%s215 + $0x18] sm:$0xff]
        %v299 = vld [vmem:[%s215 + $0x20] sm:$0xff]
        %v300 = vld [vmem:[%s215 + $0x28] sm:$0xff]
        %v301 = vld [vmem:[%s215 + $0x30] sm:$0xff]
        %v302 = vld [vmem:[%s215 + $0x38] sm:$0xff]
        %v303 = vld [vmem:[%s215 + $0x40] sm:$0xff]
        %v304 = vld [vmem:[%s215 + $0x48] sm:$0xff]
        %v305 = vld [vmem:[%s215 + $0x50] sm:$0xff]
        %v306 = vld [vmem:[%s215 + $0x58] sm:$0xff]
        %v307 = vld [vmem:[%s215 + $0x60] sm:$0xff]
        %v308 = vld [vmem:[%s215 + $0x68] sm:$0xff]
        %v309 = vld [vmem:[%s215 + $0x70] sm:$0xff]
        %v310 = vld [vmem:[%s215 + $0x78] sm:$0xff]
        %v311 = vld [vmem:[%s260] sm:$0xff]
        %v312 = vld [vmem:[%s260 + $0x8] sm:$0xff]
        %v313 = vld [vmem:[%s260 + $0x10] sm:$0xff]
        %v314 = vld [vmem:[%s260 + $0x18] sm:$0xff]
        %v315 = vld [vmem:[%s260 + $0x20] sm:$0xff]
        %v316 = vld [vmem:[%s260 + $0x28] sm:$0xff]
        %v317 = vld [vmem:[%s260 + $0x30] sm:$0xff]
        %v318 = vld [vmem:[%s260 + $0x38] sm:$0xff]
        %v319 = vld [vmem:[%s260 + $0x40] sm:$0xff]
        %v320 = vld [vmem:[%s260 + $0x48] sm:$0xff]
        %v321 = vld [vmem:[%s260 + $0x50] sm:$0xff]
        %v322 = vld [vmem:[%s260 + $0x58] sm:$0xff]
        %v323 = vld [vmem:[%s260 + $0x60] sm:$0xff]
        %v324 = vld [vmem:[%s260 + $0x68] sm:$0xff]
        %v325 = vld [vmem:[%s260 + $0x70] sm:$0xff]
        %v326 = vld [vmem:[%s260 + $0x78] sm:$0xff]
        %v327 = vld [vmem:[%s260 + $0x80] sm:$0xff]
        %v328 = vld [vmem:[%s260 + $0x88] sm:$0xff]
        %v329 = vld [vmem:[%s260 + $0x90] sm:$0xff]
        %v330 = vld [vmem:[%s260 + $0x98] sm:$0xff]
        %v331 = vld [vmem:[%s260 + $0xa0] sm:$0xff]
        %v332 = vld [vmem:[%s260 + $0xa8] sm:$0xff]
        %v333 = vld [vmem:[%s260 + $0xb0] sm:$0xff]
        %v334 = vld [vmem:[%s260 + $0xb8] sm:$0xff]
        %v335 = vld [vmem:[%s260 + $0xc0] sm:$0xff]
        %v336 = vld [vmem:[%s260 + $0xc8] sm:$0xff]
        %v337 = vld [vmem:[%s260 + $0xd0] sm:$0xff]
        %v338 = vld [vmem:[%s260 + $0xd8] sm:$0xff]
        %v339 = vld [vmem:[%s260 + $0xe0] sm:$0xff]
        %v340 = vld [vmem:[%s260 + $0xe8] sm:$0xff]
        %v341 = vld [vmem:[%s260 + $0xf0] sm:$0xff]
        %v342 = vld [vmem:[%s260 + $0xf8] sm:$0xff]
        %v343 = vld [vmem:[%s260 + $0x100] sm:$0xff]
        %v344 = vld [vmem:[%s260 + $0x108] sm:$0xff]
        %v345 = vld [vmem:[%s260 + $0x110] sm:$0xff]
        %v346 = vld [vmem:[%s260 + $0x118] sm:$0xff]
        %v347 = vld [vmem:[%s260 + $0x120] sm:$0xff]
        %v348 = vld [vmem:[%s260 + $0x128] sm:$0xff]
        %v349 = vld [vmem:[%s260 + $0x130] sm:$0xff]
        %v350 = vld [vmem:[%s260 + $0x138] sm:$0xff]
        %v351 = vld [vmem:[%s260 + $0x140] sm:$0xff]
        %v352 = vld [vmem:[%s260 + $0x148] sm:$0xff]
        %v353 = vld [vmem:[%s260 + $0x150] sm:$0xff]
        %v354 = vld [vmem:[%s260 + $0x158] sm:$0xff]
        %v355 = vld [vmem:[%s260 + $0x160] sm:$0xff]
        %v356 = vld [vmem:[%s260 + $0x168] sm:$0xff]
        %v357 = vld [vmem:[%s260 + $0x170] sm:$0xff]
        %v358 = vld [vmem:[%s260 + $0x178] sm:$0xff]
        %v359 = vld [vmem:[%s260 + $0x180] sm:$0xff]
        %v360 = vld [vmem:[%s260 + $0x188] sm:$0xff]
        %v361 = vld [vmem:[%s260 + $0x190] sm:$0xff]
        %v362 = vld [vmem:[%s260 + $0x198] sm:$0xff]
        %v363 = vld [vmem:[%s260 + $0x1a0] sm:$0xff]
        %v364 = vld [vmem:[%s260 + $0x1a8] sm:$0xff]
        %v365 = vld [vmem:[%s260 + $0x1b0] sm:$0xff]
        %v366 = vld [vmem:[%s260 + $0x1b8] sm:$0xff]
        %v367 = vld [vmem:[%s260 + $0x1c0] sm:$0xff]
        %v368 = vld [vmem:[%s260 + $0x1c8] sm:$0xff]
        %v369 = vld [vmem:[%s260 + $0x1d0] sm:$0xff]
        %v370 = vld [vmem:[%s260 + $0x1d8] sm:$0xff]
        %v371 = vld [vmem:[%s260 + $0x1e0] sm:$0xff]
        %v372 = vld [vmem:[%s260 + $0x1e8] sm:$0xff]
        %v373 = vld [vmem:[%s260 + $0x1f0] sm:$0xff]
        %v374 = vld [vmem:[%s260 + $0x1f8] sm:$0xff]
        %v375 = vld [vmem:[%s260 + $0x200] sm:$0xff]
        %v376 = vld [vmem:[%s260 + $0x208] sm:$0xff]
        %v377 = vld [vmem:[%s260 + $0x210] sm:$0xff]
        %v378 = vld [vmem:[%s260 + $0x218] sm:$0xff]
        %v379 = vld [vmem:[%s260 + $0x220] sm:$0xff]
        %v380 = vld [vmem:[%s260 + $0x228] sm:$0xff]
        %v381 = vld [vmem:[%s260 + $0x230] sm:$0xff]
        %v382 = vld [vmem:[%s260 + $0x238] sm:$0xff]
        %v383 = vld [vmem:[%s260 + $0x240] sm:$0xff]
        %v384 = vld [vmem:[%s260 + $0x248] sm:$0xff]
        %v385 = vld [vmem:[%s260 + $0x250] sm:$0xff]
        %v386 = vld [vmem:[%s260 + $0x258] sm:$0xff]
        %v387 = vld [vmem:[%s260 + $0x260] sm:$0xff]
        %v388 = vld [vmem:[%s260 + $0x268] sm:$0xff]
        %v389 = vld [vmem:[%s260 + $0x270] sm:$0xff]
        %v390 = vld [vmem:[%s260 + $0x278] sm:$0xff]
        %v391 = vld [vmem:[%s260 + $0x280] sm:$0xff]
        %v392 = vld [vmem:[%s260 + $0x288] sm:$0xff]
        %v393 = vld [vmem:[%s260 + $0x290] sm:$0xff]
        %v394 = vld [vmem:[%s260 + $0x298] sm:$0xff]
        %v395 = vld [vmem:[%s260 + $0x2a0] sm:$0xff]
        %v396 = vld [vmem:[%s260 + $0x2a8] sm:$0xff]
        %v397 = vld [vmem:[%s260 + $0x2b0] sm:$0xff]
        %v398 = vld [vmem:[%s260 + $0x2b8] sm:$0xff]
        %v399 = vld [vmem:[%s260 + $0x2c0] sm:$0xff]
        %v400 = vld [vmem:[%s260 + $0x2c8] sm:$0xff]
        %v401 = vld [vmem:[%s260 + $0x2d0] sm:$0xff]
        %v402 = vld [vmem:[%s260 + $0x2d8] sm:$0xff]
        %v403 = vld [vmem:[%s260 + $0x2e0] sm:$0xff]
        %v404 = vld [vmem:[%s260 + $0x2e8] sm:$0xff]
        %v405 = vld [vmem:[%s260 + $0x2f0] sm:$0xff]
        %v406 = vld [vmem:[%s260 + $0x2f8] sm:$0xff]
        %v407 = vld [vmem:[%s260 + $0x300] sm:$0xff]
        %v408 = vld [vmem:[%s260 + $0x308] sm:$0xff]
        %v409 = vld [vmem:[%s260 + $0x310] sm:$0xff]
        %v410 = vld [vmem:[%s260 + $0x318] sm:$0xff]
        %v411 = vld [vmem:[%s260 + $0x320] sm:$0xff]
        %v412 = vld [vmem:[%s260 + $0x328] sm:$0xff]
        %v413 = vld [vmem:[%s260 + $0x330] sm:$0xff]
        %v414 = vld [vmem:[%s260 + $0x338] sm:$0xff]
        %v415 = vld [vmem:[%s260 + $0x340] sm:$0xff]
        %v416 = vld [vmem:[%s260 + $0x348] sm:$0xff]
        %v417 = vld [vmem:[%s260 + $0x350] sm:$0xff]
        %v418 = vld [vmem:[%s260 + $0x358] sm:$0xff]
        %v419 = vld [vmem:[%s260 + $0x360] sm:$0xff]
        %v420 = vld [vmem:[%s260 + $0x368] sm:$0xff]
        %v421 = vld [vmem:[%s260 + $0x370] sm:$0xff]
        %v422 = vld [vmem:[%s260 + $0x378] sm:$0xff]
        %v423 = vld [vmem:[%s260 + $0x380] sm:$0xff]
        %v424 = vld [vmem:[%s260 + $0x388] sm:$0xff]
        %v425 = vld [vmem:[%s260 + $0x390] sm:$0xff]
        %v426 = vld [vmem:[%s260 + $0x398] sm:$0xff]
        %v427 = vld [vmem:[%s260 + $0x3a0] sm:$0xff]
        %v428 = vld [vmem:[%s260 + $0x3a8] sm:$0xff]
        %v429 = vld [vmem:[%s260 + $0x3b0] sm:$0xff]
        %v430 = vld [vmem:[%s260 + $0x3b8] sm:$0xff]
        %v431 = vld [vmem:[%s260 + $0x3c0] sm:$0xff]
        %v432 = vld [vmem:[%s260 + $0x3c8] sm:$0xff]
        %v433 = vld [vmem:[%s260 + $0x3d0] sm:$0xff]
        %v434 = vld [vmem:[%s260 + $0x3d8] sm:$0xff]
        %v435 = vld [vmem:[%s260 + $0x3e0] sm:$0xff]
        %v436 = vld [vmem:[%s260 + $0x3e8] sm:$0xff]
        %v437 = vld [vmem:[%s260 + $0x3f0] sm:$0xff]
        %v438 = vld [vmem:[%s260 + $0x3f8] sm:$0xff]
        %v455 = vunpack.c.l.b16 %v295
        %v456 = vunpack.c.h.b16 %v295
        %v457 = vunpack.c.l.b16 %v296
        %v458 = vunpack.c.h.b16 %v296
        %v459 = vunpack.c.l.b16 %v297
        %v460 = vunpack.c.h.b16 %v297
        %v461 = vunpack.c.l.b16 %v298
        %v462 = vunpack.c.h.b16 %v298
        %v463 = vunpack.c.l.b16 %v299
        %v464 = vunpack.c.h.b16 %v299
        %v465 = vunpack.c.l.b16 %v300
        %v466 = vunpack.c.h.b16 %v300
        %v467 = vunpack.c.l.b16 %v301
        %v468 = vunpack.c.h.b16 %v301
        %v469 = vunpack.c.l.b16 %v302
        %v470 = vunpack.c.h.b16 %v302
        %v471 = vunpack.c.l.b16 %v303
        %v472 = vunpack.c.h.b16 %v303
        %v473 = vunpack.c.l.b16 %v304
        %v474 = vunpack.c.h.b16 %v304
        %v475 = vunpack.c.l.b16 %v305
        %v476 = vunpack.c.h.b16 %v305
        %v477 = vunpack.c.l.b16 %v306
        %v478 = vunpack.c.h.b16 %v306
        %v479 = vunpack.c.l.b16 %v307
        %v480 = vunpack.c.h.b16 %v307
        %v481 = vunpack.c.l.b16 %v308
        %v482 = vunpack.c.h.b16 %v308
        %v483 = vunpack.c.l.b16 %v309
        %v484 = vunpack.c.h.b16 %v309
        %v485 = vunpack.c.l.b16 %v310
        %v486 = vunpack.c.h.b16 %v310
        %v487 = vpack.c.b16 %v463, %v455
        %v488 = vpack.c.b16 %v464, %v456
        %v489 = vpack.c.b16 %v465, %v457
        %v490 = vpack.c.b16 %v466, %v458
        %v491 = vpack.c.b16 %v467, %v459
        %v492 = vpack.c.b16 %v468, %v460
        %v493 = vpack.c.b16 %v469, %v461
        %v494 = vpack.c.b16 %v470, %v462
        %v495 = vpack.c.b16 %v479, %v471
        %v496 = vpack.c.b16 %v480, %v472
        %v497 = vpack.c.b16 %v481, %v473
        %v498 = vpack.c.b16 %v482, %v474
        %v499 = vpack.c.b16 %v483, %v475
        %v500 = vpack.c.b16 %v484, %v476
        %v501 = vpack.c.b16 %v485, %v477
        %v502 = vpack.c.b16 %v486, %v478
        %v647 = vunpack.c.l.b16 %v311
        %v648 = vunpack.c.h.b16 %v311
        %v649 = vunpack.c.l.b16 %v312
        %v650 = vunpack.c.h.b16 %v312
        %v651 = vunpack.c.l.b16 %v313
        %v652 = vunpack.c.h.b16 %v313
        %v653 = vunpack.c.l.b16 %v314
        %v654 = vunpack.c.h.b16 %v314
        %v655 = vunpack.c.l.b16 %v315
        %v656 = vunpack.c.h.b16 %v315
        %v657 = vunpack.c.l.b16 %v316
        %v658 = vunpack.c.h.b16 %v316
        %v659 = vunpack.c.l.b16 %v317
        %v660 = vunpack.c.h.b16 %v317
        %v661 = vunpack.c.l.b16 %v318
        %v662 = vunpack.c.h.b16 %v318
        %v663 = vunpack.c.l.b16 %v319
        %v664 = vunpack.c.h.b16 %v319
        %v665 = vunpack.c.l.b16 %v320
        %v666 = vunpack.c.h.b16 %v320
        %v667 = vunpack.c.l.b16 %v321
        %v668 = vunpack.c.h.b16 %v321
        %v669 = vunpack.c.l.b16 %v322
        %v670 = vunpack.c.h.b16 %v322
        %v671 = vunpack.c.l.b16 %v323
        %v672 = vunpack.c.h.b16 %v323
        %v673 = vunpack.c.l.b16 %v324
        %v674 = vunpack.c.h.b16 %v324
        %v675 = vunpack.c.l.b16 %v325
        %v676 = vunpack.c.h.b16 %v325
        %v677 = vunpack.c.l.b16 %v326
        %v678 = vunpack.c.h.b16 %v326
        %v679 = vunpack.c.l.b16 %v327
        %v680 = vunpack.c.h.b16 %v327
        %v681 = vunpack.c.l.b16 %v328
        %v682 = vunpack.c.h.b16 %v328
        %v683 = vunpack.c.l.b16 %v329
        %v684 = vunpack.c.h.b16 %v329
        %v685 = vunpack.c.l.b16 %v330
        %v686 = vunpack.c.h.b16 %v330
        %v687 = vunpack.c.l.b16 %v331
        %v688 = vunpack.c.h.b16 %v331
        %v689 = vunpack.c.l.b16 %v332
        %v690 = vunpack.c.h.b16 %v332
        %v691 = vunpack.c.l.b16 %v333
        %v692 = vunpack.c.h.b16 %v333
        %v693 = vunpack.c.l.b16 %v334
        %v694 = vunpack.c.h.b16 %v334
        %v695 = vunpack.c.l.b16 %v335
        %v696 = vunpack.c.h.b16 %v335
        %v697 = vunpack.c.l.b16 %v336
        %v698 = vunpack.c.h.b16 %v336
        %v699 = vunpack.c.l.b16 %v337
        %v700 = vunpack.c.h.b16 %v337
        %v701 = vunpack.c.l.b16 %v338
        %v702 = vunpack.c.h.b16 %v338
        %v703 = vunpack.c.l.b16 %v339
        %v704 = vunpack.c.h.b16 %v339
        %v705 = vunpack.c.l.b16 %v340
        %v706 = vunpack.c.h.b16 %v340
        %v707 = vunpack.c.l.b16 %v341
        %v708 = vunpack.c.h.b16 %v341
        %v709 = vunpack.c.l.b16 %v342
        %v710 = vunpack.c.h.b16 %v342
        %v711 = vunpack.c.l.b16 %v343
        %v712 = vunpack.c.h.b16 %v343
        %v713 = vunpack.c.l.b16 %v344
        %v714 = vunpack.c.h.b16 %v344
        %v715 = vunpack.c.l.b16 %v345
        %v716 = vunpack.c.h.b16 %v345
        %v717 = vunpack.c.l.b16 %v346
        %v718 = vunpack.c.h.b16 %v346
        %v719 = vunpack.c.l.b16 %v347
        %v720 = vunpack.c.h.b16 %v347
        %v721 = vunpack.c.l.b16 %v348
        %v722 = vunpack.c.h.b16 %v348
        %v723 = vunpack.c.l.b16 %v349
        %v724 = vunpack.c.h.b16 %v349
        %v725 = vunpack.c.l.b16 %v350
        %v726 = vunpack.c.h.b16 %v350
        %v727 = vunpack.c.l.b16 %v351
        %v728 = vunpack.c.h.b16 %v351
        %v729 = vunpack.c.l.b16 %v352
        %v730 = vunpack.c.h.b16 %v352
        %v731 = vunpack.c.l.b16 %v353
        %v732 = vunpack.c.h.b16 %v353
        %v733 = vunpack.c.l.b16 %v354
        %v734 = vunpack.c.h.b16 %v354
        %v735 = vunpack.c.l.b16 %v355
        %v736 = vunpack.c.h.b16 %v355
        %v737 = vunpack.c.l.b16 %v356
        %v738 = vunpack.c.h.b16 %v356
        %v739 = vunpack.c.l.b16 %v357
        %v740 = vunpack.c.h.b16 %v357
        %v741 = vunpack.c.l.b16 %v358
        %v742 = vunpack.c.h.b16 %v358
        %v743 = vunpack.c.l.b16 %v359
        %v744 = vunpack.c.h.b16 %v359
        %v745 = vunpack.c.l.b16 %v360
        %v746 = vunpack.c.h.b16 %v360
        %v747 = vunpack.c.l.b16 %v361
        %v748 = vunpack.c.h.b16 %v361
        %v749 = vunpack.c.l.b16 %v362
        %v750 = vunpack.c.h.b16 %v362
        %v751 = vunpack.c.l.b16 %v363
        %v752 = vunpack.c.h.b16 %v363
        %v753 = vunpack.c.l.b16 %v364
        %v754 = vunpack.c.h.b16 %v364
        %v755 = vunpack.c.l.b16 %v365
        %v756 = vunpack.c.h.b16 %v365
        %v757 = vunpack.c.l.b16 %v366
        %v758 = vunpack.c.h.b16 %v366
        %v759 = vunpack.c.l.b16 %v367
        %v760 = vunpack.c.h.b16 %v367
        %v761 = vunpack.c.l.b16 %v368
        %v762 = vunpack.c.h.b16 %v368
        %v763 = vunpack.c.l.b16 %v369
        %v764 = vunpack.c.h.b16 %v369
        %v765 = vunpack.c.l.b16 %v370
        %v766 = vunpack.c.h.b16 %v370
        %v767 = vunpack.c.l.b16 %v371
        %v768 = vunpack.c.h.b16 %v371
        %v769 = vunpack.c.l.b16 %v372
        %v770 = vunpack.c.h.b16 %v372
        %v771 = vunpack.c.l.b16 %v373
        %v772 = vunpack.c.h.b16 %v373
        %v773 = vunpack.c.l.b16 %v374
        %v774 = vunpack.c.h.b16 %v374
        %v775 = vunpack.c.l.b16 %v375
        %v776 = vunpack.c.h.b16 %v375
        %v777 = vunpack.c.l.b16 %v376
        %v778 = vunpack.c.h.b16 %v376
        %v779 = vunpack.c.l.b16 %v377
        %v780 = vunpack.c.h.b16 %v377
        %v781 = vunpack.c.l.b16 %v378
        %v782 = vunpack.c.h.b16 %v378
        %v783 = vunpack.c.l.b16 %v379
        %v784 = vunpack.c.h.b16 %v379
        %v785 = vunpack.c.l.b16 %v380
        %v786 = vunpack.c.h.b16 %v380
        %v787 = vunpack.c.l.b16 %v381
        %v788 = vunpack.c.h.b16 %v381
        %v789 = vunpack.c.l.b16 %v382
        %v790 = vunpack.c.h.b16 %v382
        %v791 = vunpack.c.l.b16 %v383
        %v792 = vunpack.c.h.b16 %v383
        %v793 = vunpack.c.l.b16 %v384
        %v794 = vunpack.c.h.b16 %v384
        %v795 = vunpack.c.l.b16 %v385
        %v796 = vunpack.c.h.b16 %v385
        %v797 = vunpack.c.l.b16 %v386
        %v798 = vunpack.c.h.b16 %v386
        %v799 = vunpack.c.l.b16 %v387
        %v800 = vunpack.c.h.b16 %v387
        %v801 = vunpack.c.l.b16 %v388
        %v802 = vunpack.c.h.b16 %v388
        %v803 = vunpack.c.l.b16 %v389
        %v804 = vunpack.c.h.b16 %v389
        %v805 = vunpack.c.l.b16 %v390
        %v806 = vunpack.c.h.b16 %v390
        %v807 = vunpack.c.l.b16 %v391
        %v808 = vunpack.c.h.b16 %v391
        %v809 = vunpack.c.l.b16 %v392
        %v810 = vunpack.c.h.b16 %v392
        %v811 = vunpack.c.l.b16 %v393
        %v812 = vunpack.c.h.b16 %v393
        %v813 = vunpack.c.l.b16 %v394
        %v814 = vunpack.c.h.b16 %v394
        %v815 = vunpack.c.l.b16 %v395
        %v816 = vunpack.c.h.b16 %v395
        %v817 = vunpack.c.l.b16 %v396
        %v818 = vunpack.c.h.b16 %v396
        %v819 = vunpack.c.l.b16 %v397
        %v820 = vunpack.c.h.b16 %v397
        %v821 = vunpack.c.l.b16 %v398
        %v822 = vunpack.c.h.b16 %v398
        %v823 = vunpack.c.l.b16 %v399
        %v824 = vunpack.c.h.b16 %v399
        %v825 = vunpack.c.l.b16 %v400
        %v826 = vunpack.c.h.b16 %v400
        %v827 = vunpack.c.l.b16 %v401
        %v828 = vunpack.c.h.b16 %v401
        %v829 = vunpack.c.l.b16 %v402
        %v830 = vunpack.c.h.b16 %v402
        %v831 = vunpack.c.l.b16 %v403
        %v832 = vunpack.c.h.b16 %v403
        %v833 = vunpack.c.l.b16 %v404
        %v834 = vunpack.c.h.b16 %v404
        %v835 = vunpack.c.l.b16 %v405
        %v836 = vunpack.c.h.b16 %v405
        %v837 = vunpack.c.l.b16 %v406
        %v838 = vunpack.c.h.b16 %v406
        %v839 = vunpack.c.l.b16 %v407
        %v840 = vunpack.c.h.b16 %v407
        %v841 = vunpack.c.l.b16 %v408
        %v842 = vunpack.c.h.b16 %v408
        %v843 = vunpack.c.l.b16 %v409
        %v844 = vunpack.c.h.b16 %v409
        %v845 = vunpack.c.l.b16 %v410
        %v846 = vunpack.c.h.b16 %v410
        %v847 = vunpack.c.l.b16 %v411
        %v848 = vunpack.c.h.b16 %v411
        %v849 = vunpack.c.l.b16 %v412
        %v850 = vunpack.c.h.b16 %v412
        %v851 = vunpack.c.l.b16 %v413
        %v852 = vunpack.c.h.b16 %v413
        %v853 = vunpack.c.l.b16 %v414
        %v854 = vunpack.c.h.b16 %v414
        %v855 = vunpack.c.l.b16 %v415
        %v856 = vunpack.c.h.b16 %v415
        %v857 = vunpack.c.l.b16 %v416
        %v858 = vunpack.c.h.b16 %v416
        %v859 = vunpack.c.l.b16 %v417
        %v860 = vunpack.c.h.b16 %v417
        %v861 = vunpack.c.l.b16 %v418
        %v862 = vunpack.c.h.b16 %v418
        %v863 = vunpack.c.l.b16 %v419
        %v864 = vunpack.c.h.b16 %v419
        %v865 = vunpack.c.l.b16 %v420
        %v866 = vunpack.c.h.b16 %v420
        %v867 = vunpack.c.l.b16 %v421
        %v868 = vunpack.c.h.b16 %v421
        %v869 = vunpack.c.l.b16 %v422
        %v870 = vunpack.c.h.b16 %v422
        %v871 = vunpack.c.l.b16 %v423
        %v872 = vunpack.c.h.b16 %v423
        %v873 = vunpack.c.l.b16 %v424
        %v874 = vunpack.c.h.b16 %v424
        %v875 = vunpack.c.l.b16 %v425
        %v876 = vunpack.c.h.b16 %v425
        %v877 = vunpack.c.l.b16 %v426
        %v878 = vunpack.c.h.b16 %v426
        %v879 = vunpack.c.l.b16 %v427
        %v880 = vunpack.c.h.b16 %v427
        %v881 = vunpack.c.l.b16 %v428
        %v882 = vunpack.c.h.b16 %v428
        %v883 = vunpack.c.l.b16 %v429
        %v884 = vunpack.c.h.b16 %v429
        %v885 = vunpack.c.l.b16 %v430
        %v886 = vunpack.c.h.b16 %v430
        %v887 = vunpack.c.l.b16 %v431
        %v888 = vunpack.c.h.b16 %v431
        %v889 = vunpack.c.l.b16 %v432
        %v890 = vunpack.c.h.b16 %v432
        %v891 = vunpack.c.l.b16 %v433
        %v892 = vunpack.c.h.b16 %v433
        %v893 = vunpack.c.l.b16 %v434
        %v894 = vunpack.c.h.b16 %v434
        %v895 = vunpack.c.l.b16 %v435
        %v896 = vunpack.c.h.b16 %v435
        %v897 = vunpack.c.l.b16 %v436
        %v898 = vunpack.c.h.b16 %v436
        %v899 = vunpack.c.l.b16 %v437
        %v900 = vunpack.c.h.b16 %v437
        %v901 = vunpack.c.l.b16 %v438
        %v902 = vunpack.c.h.b16 %v438
        %v903 = vpack.c.b16 %v649, %v647
        %v904 = vpack.c.b16 %v650, %v648
        %v905 = vpack.c.b16 %v653, %v651
        %v906 = vpack.c.b16 %v654, %v652
        %v907 = vpack.c.b16 %v657, %v655
        %v908 = vpack.c.b16 %v658, %v656
        %v909 = vpack.c.b16 %v661, %v659
        %v910 = vpack.c.b16 %v662, %v660
        %v911 = vpack.c.b16 %v665, %v663
        %v912 = vpack.c.b16 %v666, %v664
        %v913 = vpack.c.b16 %v669, %v667
        %v914 = vpack.c.b16 %v670, %v668
        %v915 = vpack.c.b16 %v673, %v671
        %v916 = vpack.c.b16 %v674, %v672
        %v917 = vpack.c.b16 %v677, %v675
        %v918 = vpack.c.b16 %v678, %v676
        %v919 = vpack.c.b16 %v681, %v679
        %v920 = vpack.c.b16 %v682, %v680
        %v921 = vpack.c.b16 %v685, %v683
        %v922 = vpack.c.b16 %v686, %v684
        %v923 = vpack.c.b16 %v689, %v687
        %v924 = vpack.c.b16 %v690, %v688
        %v925 = vpack.c.b16 %v693, %v691
        %v926 = vpack.c.b16 %v694, %v692
        %v927 = vpack.c.b16 %v697, %v695
        %v928 = vpack.c.b16 %v698, %v696
        %v929 = vpack.c.b16 %v701, %v699
        %v930 = vpack.c.b16 %v702, %v700
        %v931 = vpack.c.b16 %v705, %v703
        %v932 = vpack.c.b16 %v706, %v704
        %v933 = vpack.c.b16 %v709, %v707
        %v934 = vpack.c.b16 %v710, %v708
        %v935 = vpack.c.b16 %v713, %v711
        %v936 = vpack.c.b16 %v714, %v712
        %v937 = vpack.c.b16 %v717, %v715
        %v938 = vpack.c.b16 %v718, %v716
        %v939 = vpack.c.b16 %v721, %v719
        %v940 = vpack.c.b16 %v722, %v720
        %v941 = vpack.c.b16 %v725, %v723
        %v942 = vpack.c.b16 %v726, %v724
        %v943 = vpack.c.b16 %v729, %v727
        %v944 = vpack.c.b16 %v730, %v728
        %v945 = vpack.c.b16 %v733, %v731
        %v946 = vpack.c.b16 %v734, %v732
        %v947 = vpack.c.b16 %v737, %v735
        %v948 = vpack.c.b16 %v738, %v736
        %v949 = vpack.c.b16 %v741, %v739
        %v950 = vpack.c.b16 %v742, %v740
        %v951 = vpack.c.b16 %v745, %v743
        %v952 = vpack.c.b16 %v746, %v744
        %v953 = vpack.c.b16 %v749, %v747
        %v954 = vpack.c.b16 %v750, %v748
        %v955 = vpack.c.b16 %v753, %v751
        %v956 = vpack.c.b16 %v754, %v752
        %v957 = vpack.c.b16 %v757, %v755
        %v958 = vpack.c.b16 %v758, %v756
        %v959 = vpack.c.b16 %v761, %v759
        %v960 = vpack.c.b16 %v762, %v760
        %v961 = vpack.c.b16 %v765, %v763
        %v962 = vpack.c.b16 %v766, %v764
        %v963 = vpack.c.b16 %v769, %v767
        %v964 = vpack.c.b16 %v770, %v768
        %v965 = vpack.c.b16 %v773, %v771
        %v966 = vpack.c.b16 %v774, %v772
        %v967 = vpack.c.b16 %v777, %v775
        %v968 = vpack.c.b16 %v778, %v776
        %v969 = vpack.c.b16 %v781, %v779
        %v970 = vpack.c.b16 %v782, %v780
        %v971 = vpack.c.b16 %v785, %v783
        %v972 = vpack.c.b16 %v786, %v784
        %v973 = vpack.c.b16 %v789, %v787
        %v974 = vpack.c.b16 %v790, %v788
        %v975 = vpack.c.b16 %v793, %v791
        %v976 = vpack.c.b16 %v794, %v792
        %v977 = vpack.c.b16 %v797, %v795
        %v978 = vpack.c.b16 %v798, %v796
        %v979 = vpack.c.b16 %v801, %v799
        %v980 = vpack.c.b16 %v802, %v800
        %v981 = vpack.c.b16 %v805, %v803
        %v982 = vpack.c.b16 %v806, %v804
        %v983 = vpack.c.b16 %v809, %v807
        %v984 = vpack.c.b16 %v810, %v808
        %v985 = vpack.c.b16 %v813, %v811
        %v986 = vpack.c.b16 %v814, %v812
        %v987 = vpack.c.b16 %v817, %v815
        %v988 = vpack.c.b16 %v818, %v816
        %v989 = vpack.c.b16 %v821, %v819
        %v990 = vpack.c.b16 %v822, %v820
        %v991 = vpack.c.b16 %v825, %v823
        %v992 = vpack.c.b16 %v826, %v824
        %v993 = vpack.c.b16 %v829, %v827
        %v994 = vpack.c.b16 %v830, %v828
        %v995 = vpack.c.b16 %v833, %v831
        %v996 = vpack.c.b16 %v834, %v832
        %v997 = vpack.c.b16 %v837, %v835
        %v998 = vpack.c.b16 %v838, %v836
        %v999 = vpack.c.b16 %v841, %v839
        %v1000 = vpack.c.b16 %v842, %v840
        %v1001 = vpack.c.b16 %v845, %v843
        %v1002 = vpack.c.b16 %v846, %v844
        %v1003 = vpack.c.b16 %v849, %v847
        %v1004 = vpack.c.b16 %v850, %v848
        %v1005 = vpack.c.b16 %v853, %v851
        %v1006 = vpack.c.b16 %v854, %v852
        %v1007 = vpack.c.b16 %v857, %v855
        %v1008 = vpack.c.b16 %v858, %v856
        %v1009 = vpack.c.b16 %v861, %v859
        %v1010 = vpack.c.b16 %v862, %v860
        %v1011 = vpack.c.b16 %v865, %v863
        %v1012 = vpack.c.b16 %v866, %v864
        %v1013 = vpack.c.b16 %v869, %v867
        %v1014 = vpack.c.b16 %v870, %v868
        %v1015 = vpack.c.b16 %v873, %v871
        %v1016 = vpack.c.b16 %v874, %v872
        %v1017 = vpack.c.b16 %v877, %v875
        %v1018 = vpack.c.b16 %v878, %v876
        %v1019 = vpack.c.b16 %v881, %v879
        %v1020 = vpack.c.b16 %v882, %v880
        %v1021 = vpack.c.b16 %v885, %v883
        %v1022 = vpack.c.b16 %v886, %v884
        %v1023 = vpack.c.b16 %v889, %v887
        %v1024 = vpack.c.b16 %v890, %v888
        %v1025 = vpack.c.b16 %v893, %v891
        %v1026 = vpack.c.b16 %v894, %v892
        %v1027 = vpack.c.b16 %v897, %v895
        %v1028 = vpack.c.b16 %v898, %v896
        %v1029 = vpack.c.b16 %v901, %v899
        %v1030 = vpack.c.b16 %v902, %v900
        %1159 = vmatpush.bf16.msra.mxu0 %v917
        %1160 = vmatpush.bf16.msra.mxu0 %v915
        %1161 = vmatpush.bf16.msra.mxu0 %v913
        %1162 = vmatpush.bf16.msra.mxu0 %v911
        %1163 = vmatpush.bf16.msra.mxu0 %v909
        %1164 = vmatpush.bf16.msra.mxu0 %v907
        %1165 = vmatpush.bf16.msra.mxu0 %v905
        %1166 = vmatpush.bf16.msra.mxu0 %v903
        %1167 = vmatmul.bf16.gmra.mxu0 %v487
        %v1168 = vpop.f32.mrf.mxu0
        %v1169 = vadd.f32 0.0, %v1168
        %v1170 = vpop.f32.mrf.mxu0
        %v1171 = vadd.f32 0.0, %v1170
        %1172 = vmatmul.bf16.gmra.mxu0 %v495
        %v1173 = vpop.f32.mrf.mxu0
        %v1174 = vadd.f32 0.0, %v1173
        %v1175 = vpop.f32.mrf.mxu0
        %v1176 = vadd.f32 0.0, %v1175
        %1177 = vdwg.mxu0
        %1178 = vmatpush.bf16.msra.mxu0 %v933
        %1179 = vmatpush.bf16.msra.mxu0 %v931
        %1180 = vmatpush.bf16.msra.mxu0 %v929
        %1181 = vmatpush.bf16.msra.mxu0 %v927
        %1182 = vmatpush.bf16.msra.mxu0 %v925
        %1183 = vmatpush.bf16.msra.mxu0 %v923
        %1184 = vmatpush.bf16.msra.mxu0 %v921
        %1185 = vmatpush.bf16.msra.mxu0 %v919
        %1186 = vmatmul.bf16.gmra.mxu0 %v488
        %v1187 = vpop.f32.mrf.mxu0
        %v1188 = vadd.f32 %v1169, %v1187
        %v1189 = vpop.f32.mrf.mxu0
        %v1190 = vadd.f32 %v1171, %v1189
        %1191 = vmatmul.bf16.gmra.mxu0 %v496
        %v1192 = vpop.f32.mrf.mxu0
        %v1193 = vadd.f32 %v1174, %v1192
        %v1194 = vpop.f32.mrf.mxu0
        %v1195 = vadd.f32 %v1176, %v1194
        %1196 = vdwg.mxu0
        %1197 = vmatpush.bf16.msra.mxu0 %v949
        %1198 = vmatpush.bf16.msra.mxu0 %v947
        %1199 = vmatpush.bf16.msra.mxu0 %v945
        %1200 = vmatpush.bf16.msra.mxu0 %v943
        %1201 = vmatpush.bf16.msra.mxu0 %v941
        %1202 = vmatpush.bf16.msra.mxu0 %v939
        %1203 = vmatpush.bf16.msra.mxu0 %v937
        %1204 = vmatpush.bf16.msra.mxu0 %v935
        %1205 = vmatmul.bf16.gmra.mxu0 %v489
        %v1206 = vpop.f32.mrf.mxu0
        %v1207 = vadd.f32 %v1188, %v1206
        %v1208 = vpop.f32.mrf.mxu0
        %v1209 = vadd.f32 %v1190, %v1208
        %1210 = vmatmul.bf16.gmra.mxu0 %v497
        %v1211 = vpop.f32.mrf.mxu0
        %v1212 = vadd.f32 %v1193, %v1211
        %v1213 = vpop.f32.mrf.mxu0
        %v1214 = vadd.f32 %v1195, %v1213
        %1215 = vdwg.mxu0
        %1216 = vmatpush.bf16.msra.mxu0 %v965
        %1217 = vmatpush.bf16.msra.mxu0 %v963
        %1218 = vmatpush.bf16.msra.mxu0 %v961
        %1219 = vmatpush.bf16.msra.mxu0 %v959
        %1220 = vmatpush.bf16.msra.mxu0 %v957
        %1221 = vmatpush.bf16.msra.mxu0 %v955
        %1222 = vmatpush.bf16.msra.mxu0 %v953
        %1223 = vmatpush.bf16.msra.mxu0 %v951
        %1224 = vmatmul.bf16.gmra.mxu0 %v490
        %v1225 = vpop.f32.mrf.mxu0
        %v1226 = vadd.f32 %v1207, %v1225
        %v1227 = vpop.f32.mrf.mxu0
        %v1228 = vadd.f32 %v1209, %v1227
        %1229 = vmatmul.bf16.gmra.mxu0 %v498
        %v1230 = vpop.f32.mrf.mxu0
        %v1231 = vadd.f32 %v1212, %v1230
        %v1232 = vpop.f32.mrf.mxu0
        %v1233 = vadd.f32 %v1214, %v1232
        %1234 = vdwg.mxu0
        %1235 = vmatpush.bf16.msra.mxu0 %v981
        %1236 = vmatpush.bf16.msra.mxu0 %v979
        %1237 = vmatpush.bf16.msra.mxu0 %v977
        %1238 = vmatpush.bf16.msra.mxu0 %v975
        %1239 = vmatpush.bf16.msra.mxu0 %v973
        %1240 = vmatpush.bf16.msra.mxu0 %v971
        %1241 = vmatpush.bf16.msra.mxu0 %v969
        %1242 = vmatpush.bf16.msra.mxu0 %v967
        %1243 = vmatmul.bf16.gmra.mxu0 %v491
        %v1244 = vpop.f32.mrf.mxu0
        %v1245 = vadd.f32 %v1226, %v1244
        %v1246 = vpop.f32.mrf.mxu0
        %v1247 = vadd.f32 %v1228, %v1246
        %1248 = vmatmul.bf16.gmra.mxu0 %v499
        %v1249 = vpop.f32.mrf.mxu0
        %v1250 = vadd.f32 %v1231, %v1249
        %v1251 = vpop.f32.mrf.mxu0
        %v1252 = vadd.f32 %v1233, %v1251
        %1253 = vdwg.mxu0
        %1254 = vmatpush.bf16.msra.mxu0 %v997
        %1255 = vmatpush.bf16.msra.mxu0 %v995
        %1256 = vmatpush.bf16.msra.mxu0 %v993
        %1257 = vmatpush.bf16.msra.mxu0 %v991
        %1258 = vmatpush.bf16.msra.mxu0 %v989
        %1259 = vmatpush.bf16.msra.mxu0 %v987
        %1260 = vmatpush.bf16.msra.mxu0 %v985
        %1261 = vmatpush.bf16.msra.mxu0 %v983
        %1262 = vmatmul.bf16.gmra.mxu0 %v492
        %v1263 = vpop.f32.mrf.mxu0
        %v1264 = vadd.f32 %v1245, %v1263
        %v1265 = vpop.f32.mrf.mxu0
        %v1266 = vadd.f32 %v1247, %v1265
        %1267 = vmatmul.bf16.gmra.mxu0 %v500
        %v1268 = vpop.f32.mrf.mxu0
        %v1269 = vadd.f32 %v1250, %v1268
        %v1270 = vpop.f32.mrf.mxu0
        %v1271 = vadd.f32 %v1252, %v1270
        %1272 = vdwg.mxu0
        %1273 = vmatpush.bf16.msra.mxu0 %v1013
        %1274 = vmatpush.bf16.msra.mxu0 %v1011
        %1275 = vmatpush.bf16.msra.mxu0 %v1009
        %1276 = vmatpush.bf16.msra.mxu0 %v1007
        %1277 = vmatpush.bf16.msra.mxu0 %v1005
        %1278 = vmatpush.bf16.msra.mxu0 %v1003
        %1279 = vmatpush.bf16.msra.mxu0 %v1001
        %1280 = vmatpush.bf16.msra.mxu0 %v999
        %1281 = vmatmul.bf16.gmra.mxu0 %v493
        %v1282 = vpop.f32.mrf.mxu0
        %v1283 = vadd.f32 %v1264, %v1282
        %v1284 = vpop.f32.mrf.mxu0
        %v1285 = vadd.f32 %v1266, %v1284
        %1286 = vmatmul.bf16.gmra.mxu0 %v501
        %v1287 = vpop.f32.mrf.mxu0
        %v1288 = vadd.f32 %v1269, %v1287
        %v1289 = vpop.f32.mrf.mxu0
        %v1290 = vadd.f32 %v1271, %v1289
        %1291 = vdwg.mxu0
        %1292 = vmatpush.bf16.msra.mxu0 %v1029
        %1293 = vmatpush.bf16.msra.mxu0 %v1027
        %1294 = vmatpush.bf16.msra.mxu0 %v1025
        %1295 = vmatpush.bf16.msra.mxu0 %v1023
        %1296 = vmatpush.bf16.msra.mxu0 %v1021
        %1297 = vmatpush.bf16.msra.mxu0 %v1019
        %1298 = vmatpush.bf16.msra.mxu0 %v1017
        %1299 = vmatpush.bf16.msra.mxu0 %v1015
        %1300 = vmatmul.bf16.gmra.mxu0 %v494
        %v1301 = vpop.f32.mrf.mxu0
        %v1302 = vadd.f32 %v1283, %v1301
        %v1303 = vpop.f32.mrf.mxu0
        %v1304 = vadd.f32 %v1285, %v1303
        %1305 = vmatmul.bf16.gmra.mxu0 %v502
        %v1306 = vpop.f32.mrf.mxu0
        %v1307 = vadd.f32 %v1288, %v1306
        %v1308 = vpop.f32.mrf.mxu0
        %v1309 = vadd.f32 %v1290, %v1308
        %1310 = vdwg.mxu0
        %1311 = vmatpush.bf16.msra.mxu0 %v918
        %1312 = vmatpush.bf16.msra.mxu0 %v916
        %1313 = vmatpush.bf16.msra.mxu0 %v914
        %1314 = vmatpush.bf16.msra.mxu0 %v912
        %1315 = vmatpush.bf16.msra.mxu0 %v910
        %1316 = vmatpush.bf16.msra.mxu0 %v908
        %1317 = vmatpush.bf16.msra.mxu0 %v906
        %1318 = vmatpush.bf16.msra.mxu0 %v904
        %1319 = vmatmul.bf16.gmra.mxu0 %v487
        %v1320 = vpop.f32.mrf.mxu0
        %v1321 = vadd.f32 0.0, %v1320
        %v1322 = vpop.f32.mrf.mxu0
        %v1323 = vadd.f32 0.0, %v1322
        %1324 = vmatmul.bf16.gmra.mxu0 %v495
        %v1325 = vpop.f32.mrf.mxu0
        %v1326 = vadd.f32 0.0, %v1325
        %v1327 = vpop.f32.mrf.mxu0
        %v1328 = vadd.f32 0.0, %v1327
        %1329 = vdwg.mxu0
        %1330 = vmatpush.bf16.msra.mxu0 %v934
        %1331 = vmatpush.bf16.msra.mxu0 %v932
        %1332 = vmatpush.bf16.msra.mxu0 %v930
        %1333 = vmatpush.bf16.msra.mxu0 %v928
        %1334 = vmatpush.bf16.msra.mxu0 %v926
        %1335 = vmatpush.bf16.msra.mxu0 %v924
        %1336 = vmatpush.bf16.msra.mxu0 %v922
        %1337 = vmatpush.bf16.msra.mxu0 %v920
        %1338 = vmatmul.bf16.gmra.mxu0 %v488
        %v1339 = vpop.f32.mrf.mxu0
        %v1340 = vadd.f32 %v1321, %v1339
        %v1341 = vpop.f32.mrf.mxu0
        %v1342 = vadd.f32 %v1323, %v1341
        %1343 = vmatmul.bf16.gmra.mxu0 %v496
        %v1344 = vpop.f32.mrf.mxu0
        %v1345 = vadd.f32 %v1326, %v1344
        %v1346 = vpop.f32.mrf.mxu0
        %v1347 = vadd.f32 %v1328, %v1346
        %1348 = vdwg.mxu0
        %1349 = vmatpush.bf16.msra.mxu0 %v950
        %1350 = vmatpush.bf16.msra.mxu0 %v948
        %1351 = vmatpush.bf16.msra.mxu0 %v946
        %1352 = vmatpush.bf16.msra.mxu0 %v944
        %1353 = vmatpush.bf16.msra.mxu0 %v942
        %1354 = vmatpush.bf16.msra.mxu0 %v940
        %1355 = vmatpush.bf16.msra.mxu0 %v938
        %1356 = vmatpush.bf16.msra.mxu0 %v936
        %1357 = vmatmul.bf16.gmra.mxu0 %v489
        %v1358 = vpop.f32.mrf.mxu0
        %v1359 = vadd.f32 %v1340, %v1358
        %v1360 = vpop.f32.mrf.mxu0
        %v1361 = vadd.f32 %v1342, %v1360
        %1362 = vmatmul.bf16.gmra.mxu0 %v497
        %v1363 = vpop.f32.mrf.mxu0
        %v1364 = vadd.f32 %v1345, %v1363
        %v1365 = vpop.f32.mrf.mxu0
        %v1366 = vadd.f32 %v1347, %v1365
        %1367 = vdwg.mxu0
        %1368 = vmatpush.bf16.msra.mxu0 %v966
        %1369 = vmatpush.bf16.msra.mxu0 %v964
        %1370 = vmatpush.bf16.msra.mxu0 %v962
        %1371 = vmatpush.bf16.msra.mxu0 %v960
        %1372 = vmatpush.bf16.msra.mxu0 %v958
        %1373 = vmatpush.bf16.msra.mxu0 %v956
        %1374 = vmatpush.bf16.msra.mxu0 %v954
        %1375 = vmatpush.bf16.msra.mxu0 %v952
        %1376 = vmatmul.bf16.gmra.mxu0 %v490
        %v1377 = vpop.f32.mrf.mxu0
        %v1378 = vadd.f32 %v1359, %v1377
        %v1379 = vpop.f32.mrf.mxu0
        %v1380 = vadd.f32 %v1361, %v1379
        %1381 = vmatmul.bf16.gmra.mxu0 %v498
        %v1382 = vpop.f32.mrf.mxu0
        %v1383 = vadd.f32 %v1364, %v1382
        %v1384 = vpop.f32.mrf.mxu0
        %v1385 = vadd.f32 %v1366, %v1384
        %1386 = vdwg.mxu0
        %1387 = vmatpush.bf16.msra.mxu0 %v982
        %1388 = vmatpush.bf16.msra.mxu0 %v980
        %1389 = vmatpush.bf16.msra.mxu0 %v978
        %1390 = vmatpush.bf16.msra.mxu0 %v976
        %1391 = vmatpush.bf16.msra.mxu0 %v974
        %1392 = vmatpush.bf16.msra.mxu0 %v972
        %1393 = vmatpush.bf16.msra.mxu0 %v970
        %1394 = vmatpush.bf16.msra.mxu0 %v968
        %1395 = vmatmul.bf16.gmra.mxu0 %v491
        %v1396 = vpop.f32.mrf.mxu0
        %v1397 = vadd.f32 %v1378, %v1396
        %v1398 = vpop.f32.mrf.mxu0
        %v1399 = vadd.f32 %v1380, %v1398
        %1400 = vmatmul.bf16.gmra.mxu0 %v499
        %v1401 = vpop.f32.mrf.mxu0
        %v1402 = vadd.f32 %v1383, %v1401
        %v1403 = vpop.f32.mrf.mxu0
        %v1404 = vadd.f32 %v1385, %v1403
        %1405 = vdwg.mxu0
        %1406 = vmatpush.bf16.msra.mxu0 %v998
        %1407 = vmatpush.bf16.msra.mxu0 %v996
        %1408 = vmatpush.bf16.msra.mxu0 %v994
        %1409 = vmatpush.bf16.msra.mxu0 %v992
        %1410 = vmatpush.bf16.msra.mxu0 %v990
        %1411 = vmatpush.bf16.msra.mxu0 %v988
        %1412 = vmatpush.bf16.msra.mxu0 %v986
        %1413 = vmatpush.bf16.msra.mxu0 %v984
        %1414 = vmatmul.bf16.gmra.mxu0 %v492
        %v1415 = vpop.f32.mrf.mxu0
        %v1416 = vadd.f32 %v1397, %v1415
        %v1417 = vpop.f32.mrf.mxu0
        %v1418 = vadd.f32 %v1399, %v1417
        %1419 = vmatmul.bf16.gmra.mxu0 %v500
        %v1420 = vpop.f32.mrf.mxu0
        %v1421 = vadd.f32 %v1402, %v1420
        %v1422 = vpop.f32.mrf.mxu0
        %v1423 = vadd.f32 %v1404, %v1422
        %1424 = vdwg.mxu0
        %1425 = vmatpush.bf16.msra.mxu0 %v1014
        %1426 = vmatpush.bf16.msra.mxu0 %v1012
        %1427 = vmatpush.bf16.msra.mxu0 %v1010
        %1428 = vmatpush.bf16.msra.mxu0 %v1008
        %1429 = vmatpush.bf16.msra.mxu0 %v1006
        %1430 = vmatpush.bf16.msra.mxu0 %v1004
        %1431 = vmatpush.bf16.msra.mxu0 %v1002
        %1432 = vmatpush.bf16.msra.mxu0 %v1000
        %1433 = vmatmul.bf16.gmra.mxu0 %v493
        %v1434 = vpop.f32.mrf.mxu0
        %v1435 = vadd.f32 %v1416, %v1434
        %v1436 = vpop.f32.mrf.mxu0
        %v1437 = vadd.f32 %v1418, %v1436
        %1438 = vmatmul.bf16.gmra.mxu0 %v501
        %v1439 = vpop.f32.mrf.mxu0
        %v1440 = vadd.f32 %v1421, %v1439
        %v1441 = vpop.f32.mrf.mxu0
        %v1442 = vadd.f32 %v1423, %v1441
        %1443 = vdwg.mxu0
        %1444 = vmatpush.bf16.msra.mxu0 %v1030
        %1445 = vmatpush.bf16.msra.mxu0 %v1028
        %1446 = vmatpush.bf16.msra.mxu0 %v1026
        %1447 = vmatpush.bf16.msra.mxu0 %v1024
        %1448 = vmatpush.bf16.msra.mxu0 %v1022
        %1449 = vmatpush.bf16.msra.mxu0 %v1020
        %1450 = vmatpush.bf16.msra.mxu0 %v1018
        %1451 = vmatpush.bf16.msra.mxu0 %v1016
        %1452 = vmatmul.bf16.gmra.mxu0 %v494
        %v1453 = vpop.f32.mrf.mxu0
        %v1454 = vadd.f32 %v1435, %v1453
        %v1455 = vpop.f32.mrf.mxu0
        %v1456 = vadd.f32 %v1437, %v1455
        %1457 = vmatmul.bf16.gmra.mxu0 %v502
        %v1458 = vpop.f32.mrf.mxu0
        %v1459 = vadd.f32 %v1440, %v1458
        %v1460 = vpop.f32.mrf.mxu0
        %v1461 = vadd.f32 %v1442, %v1460
        %1462 = vdwg.mxu0
        %v1463 = vadd.f32 %v287, %v1302
        %v1464 = vadd.f32 %v288, %v1454
        %v1465 = vadd.f32 %v289, %v1304
        %v1466 = vadd.f32 %v290, %v1456
        %v1467 = vadd.f32 %v291, %v1307
        %v1468 = vadd.f32 %v292, %v1459
        %v1469 = vadd.f32 %v293, %v1309
        %v1470 = vadd.f32 %v294, %v1461
        %1471 = vst [vmem:[#allocation2] sm:$0xff] %v1463
        %1472 = vst [vmem:[#allocation2 + $0x8] sm:$0xff] %v1464
        %1473 = vst [vmem:[#allocation2 + $0x10] sm:$0xff] %v1465
        %1474 = vst [vmem:[#allocation2 + $0x18] sm:$0xff] %v1466
        %1475 = vst [vmem:[#allocation2 + $0x20] sm:$0xff] %v1467
        %1476 = vst [vmem:[#allocation2 + $0x28] sm:$0xff] %v1468
        %1477 = vst [vmem:[#allocation2 + $0x30] sm:$0xff] %v1469
        %1478 = vst [vmem:[#allocation2 + $0x38] sm:$0xff] %v1470
        %p1479 = scmp.eq.s32.totalorder %s20, 1
        // Predicated region
        $region56: #{vae_forward.27} parent=46 // pred_check
          %p1480 = pneg %p1479
        $region57: #{vae_forward.27} parent=46 // pred_check_branch
          %1482 = sbr.rel (%p1480) target = $region59
        $region58: #{vae_forward.27} parent=46 // pred_region
          %v1483 = vld [vmem:[#allocation2] sm:$0xff]
          %v1484 = vld [vmem:[#allocation2 + $0x8] sm:$0xff]
          %v1485 = vld [vmem:[#allocation2 + $0x10] sm:$0xff]
          %v1486 = vld [vmem:[#allocation2 + $0x18] sm:$0xff]
          %v1487 = vld [vmem:[#allocation2 + $0x20] sm:$0xff]
          %v1488 = vld [vmem:[#allocation2 + $0x28] sm:$0xff]
          %v1489 = vld [vmem:[#allocation2 + $0x30] sm:$0xff]
          %v1490 = vld [vmem:[#allocation2 + $0x38] sm:$0xff]
          %1491 = vst [vmem:[%s272] sm:$0xff] %v1483
          %1492 = vst [vmem:[%s272 + $0x8] sm:$0xff] %v1484
          %1493 = vst [vmem:[%s272 + $0x10] sm:$0xff] %v1485
          %1494 = vst [vmem:[%s272 + $0x18] sm:$0xff] %v1486
          %1495 = vst [vmem:[%s272 + $0x20] sm:$0xff] %v1487
          %1496 = vst [vmem:[%s272 + $0x28] sm:$0xff] %v1488
          %1497 = vst [vmem:[%s272 + $0x30] sm:$0xff] %v1489
          %1498 = vst [vmem:[%s272 + $0x38] sm:$0xff] %v1490
        $region59: #{vae_forward.27} parent=46 // pred_fallthru
          _
        %s1499 = smul.u32 4, %s18
        %s1500 = smul.u32 2, %s19
        %p1501 = scmp.lt.s32.totalorder %s1499, 3
        %s1502 = scalar_select %p1501, %s1499, 3
        %p1503 = scmp.lt.s32.totalorder %s1500, 1
        %s1504 = scalar_select %p1503, %s1500, 1
        %s1505 = smul.addr %s1502, 2
        %s1506 = sadd.s32 %s1504, %s1505
        %s1507 = smul.addr %s1506, 8
        %s1508 = scalar_lea.vmem %s2, %s1507
        // Predicated region
        $region60: #{vae_forward.27} parent=46 // pred_check
          %p1509 = pneg %p108
        $region61: #{vae_forward.27} parent=46 // pred_check_branch
          %1511 = sbr.rel (%p1509) target = $region63
        $region62: #{vae_forward.27} parent=46 // pred_region
          %s1512 = smul.u32 4, %s18
          %s1513 = smul.u32 2, %s19
        $region63: #{vae_forward.27} parent=46 // pred_fallthru
          _
        // Predicated region
        $region64: #{vae_forward.27} parent=46 // pred_check
          %p1514 = pneg %p108
        $region65: #{vae_forward.27} parent=46 // pred_check_branch
          %1516 = sbr.rel (%p1514) target = $region67
        $region66: #{vae_forward.27} parent=46 // pred_region
          %s1517 = smul.u32 4, %s18
          %s1518 = smul.u32 2, %s19
          %p1519 = scmp.lt.s32.totalorder %s1517, 3
          %s1520 = scalar_select %p1519, %s1517, 3
          %p1521 = scmp.lt.s32.totalorder %s1518, 1
          %s1522 = scalar_select %p1521, %s1518, 1
          %s1523 = smul.addr %s1520, 2
          %s1524 = sadd.s32 %s1522, %s1523
          %s1525 = smul.addr %s1524, 8
          %s1526 = scalar_lea.vmem %s2, %s1525
        $region67: #{vae_forward.27} parent=46 // pred_fallthru
          _
      $region47: #{vae_forward.27} parent=5 // pred_fallthru
        _
      %p1527 = scmp.le.s32.totalorder 2, %s8
      // Predicated region
      $region68: #{vae_forward.27} parent=5 // pred_check
        %p1528 = pneg %p1527
      $region69: #{vae_forward.27} parent=5 // pred_check_branch
        %1530 = sbr.rel (%p1528) target = $region71
      $region70: #{vae_forward.27} parent=5 // pred_region
        %s1531 = ssub.s32 %s8, 2
      $region71: #{vae_forward.27} parent=5 // pred_fallthru
        _
    $region6: #{vae_forward.27} parent=1 // loop_footer
      %s12 = sadd.s32 1, %s8
    $region7: #{vae_forward.27} parent=1 // loop_footer_branch
      %7 = sbr.rel target = $region3
    $region8: #{vae_forward.27} parent=1 // loop_exit
      _

// kernel: vae_forward.29
$region0: #{vae_forward.29}
  #allocation0 [shape = 'u32[]', space=smem, size = 0x4, offset = 0x4, fixed_abs, tag = 'smem constant byte address 0x4 - core index']
  #allocation1 [shape = 'u32[72,128]{1,0:T(1,128)}', space=vmem, size = 0x9000, scoped, tag = 'internal scratch']
  %s0 = inlined_call_operand.vmem [shape: f32[32,256], index: 0, kind: input, shape index: {}]
  %s1 = inlined_call_operand.vmem [shape: f32[2,256], index: 1, kind: input, shape index: {}]
  %s2 = inlined_call_operand.vmem [shape: f32[32,256], index: 2, kind: output, shape index: {}]
  %s3 = sld [smem:[#allocation0]]
  $region18: #{vae_forward.29} parent=0
    _
  %s5 = ssub.s32 1, %s3
  %s6 = scalar_select 0, %s5, %s3
  // Predicated region
  $region2: #{vae_forward.29} parent=0 // pred_check
    _
  $region3: #{vae_forward.29} parent=0 // pred_check_branch
    %8 = sbr.rel (0) target = $region5
  $region4: #{vae_forward.29} parent=0 // pred_region
    _
  $region5: #{vae_forward.29} parent=0 // pred_fallthru
    _
  // Predicated region
  $region6: #{vae_forward.29} parent=0 // pred_check
    _
  $region7: #{vae_forward.29} parent=0 // pred_check_branch
    %10 = sbr.rel (0) target = $region9
  $region8: #{vae_forward.29} parent=0 // pred_region
    _
  $region9: #{vae_forward.29} parent=0 // pred_fallthru
    _
  %v11 = vld [vmem:[%s0] sm:$0xff]
  %v12 = vld [vmem:[%s0 + $0x8] sm:$0xff]
  %v13 = vld [vmem:[%s0 + $0x10] sm:$0xff]
  %v14 = vld [vmem:[%s0 + $0x18] sm:$0xff]
  %v15 = vld [vmem:[%s0 + $0x20] sm:$0xff]
  %v16 = vld [vmem:[%s0 + $0x28] sm:$0xff]
  %v17 = vld [vmem:[%s0 + $0x30] sm:$0xff]
  %v18 = vld [vmem:[%s0 + $0x38] sm:$0xff]
  %v19 = vld [vmem:[%s1] ss:$2 sm:$0x3]
  %v21 = vperm.slane %v19, 0
  %v22 = vperm.slane %v19, 1
  %v25 = vsub.f32 %v11, %v21
  %v26 = vsub.f32 %v12, %v22
  %v27 = vsub.f32 %v13, %v21
  %v28 = vsub.f32 %v14, %v22
  %v29 = vsub.f32 %v15, %v21
  %v30 = vsub.f32 %v16, %v22
  %v31 = vsub.f32 %v17, %v21
  %v32 = vsub.f32 %v18, %v22
  %s33 = scalar_lea.vmem %s1, 1
  %v34 = vld [vmem:[%s33] ss:$2 sm:$0x3]
  %v36 = vperm.slane %v34, 0
  %v37 = vperm.slane %v34, 1
  %v40 = vmul.f32 %v25, %v36
  %v41 = vmul.f32 %v26, %v37
  %v42 = vmul.f32 %v27, %v36
  %v43 = vmul.f32 %v28, %v37
  %v44 = vmul.f32 %v29, %v36
  %v45 = vmul.f32 %v30, %v37
  %v46 = vmul.f32 %v31, %v36
  %v47 = vmul.f32 %v32, %v37
  %v48 = vmax.f32 %v40, 0.0
  %v49 = vmax.f32 %v41, 0.0
  %v50 = vmax.f32 %v42, 0.0
  %v51 = vmax.f32 %v43, 0.0
  %v52 = vmax.f32 %v44, 0.0
  %v53 = vmax.f32 %v45, 0.0
  %v54 = vmax.f32 %v46, 0.0
  %v55 = vmax.f32 %v47, 0.0
  %56 = vst [vmem:[%s2] sm:$0xff] %v48
  %57 = vst [vmem:[%s2 + $0x8] sm:$0xff] %v49
  %58 = vst [vmem:[%s2 + $0x10] sm:$0xff] %v50
  %59 = vst [vmem:[%s2 + $0x18] sm:$0xff] %v51
  %60 = vst [vmem:[%s2 + $0x20] sm:$0xff] %v52
  %61 = vst [vmem:[%s2 + $0x28] sm:$0xff] %v53
  %62 = vst [vmem:[%s2 + $0x30] sm:$0xff] %v54
  %63 = vst [vmem:[%s2 + $0x38] sm:$0xff] %v55
  // Predicated region
  $region10: #{vae_forward.29} parent=0 // pred_check
    _
  $region11: #{vae_forward.29} parent=0 // pred_check_branch
    %65 = sbr.rel (0) target = $region13
  $region12: #{vae_forward.29} parent=0 // pred_region
    _
  $region13: #{vae_forward.29} parent=0 // pred_fallthru
    _
  // Predicated region
  $region14: #{vae_forward.29} parent=0 // pred_check
    _
  $region15: #{vae_forward.29} parent=0 // pred_check_branch
    %67 = sbr.rel (0) target = $region17
  $region16: #{vae_forward.29} parent=0 // pred_region
    _
  $region17: #{vae_forward.29} parent=0 // pred_fallthru
    _

// kernel: vae_forward.30
$region0: #{vae_forward.30}
  #allocation0 [shape = 'u32[]', space=smem, size = 0x4, offset = 0x4, fixed_abs, tag = 'smem constant byte address 0x4 - core index']
  #allocation1 [shape = 'u32[72,128]{1,0:T(1,128)}', space=vmem, size = 0x9000, scoped, tag = 'internal scratch']
  #allocation2 [shape = 'f32[2,64]{1,0:T(2,128)}', space=vmem, size = 0x400, scoped, tag = 'scratch operand']
  %s0 = inlined_call_operand.vmem [shape: bf16[2,4096], index: 0, kind: input, shape index: {}]
  %s1 = inlined_call_operand.vmem [shape: bf16[4096,64], index: 1, kind: input, shape index: {}]
  %s2 = inlined_call_operand.vmem [shape: f32[1,64], index: 2, kind: input, shape index: {}]
  %s3 = inlined_call_operand.vmem [shape: f32[2,64], index: 3, kind: output, shape index: {}]
  %s4 = sld [smem:[#allocation0]]
  $region53: #{vae_forward.30} parent=0
    _
  %s6 = ssub.s32 1, %s4
  %s7 = scalar_select 0, %s6, %s4
  loop: start=0, step=1, limit=6
  $region2: #{vae_forward.30} parent=0 // loop_pre_header
    _
  $region3: #{vae_forward.30} parent=0 // loop_header
    %s9 = sphi 0, %s13
    %p10 = scmp.ge.s32.totalorder %s9, 6
    %s16 = sphi 0, %s35
    %s17 = sphi 0, %s31
    %s18 = sphi 0, %s27
    %s19 = sphi 0, %s16
    %s20 = sphi 0, %s17
    %s21 = sphi 0, %s18
    %s22 = sphi 0, %s19
    %s23 = sphi 0, %s20
    %s24 = sphi 0, %s21
    %s40 = sphi 0, %s42
    %s43 = sphi 0, %s40
    %s44 = sphi 0, %s43
    %s60 = sphi 0, %s44
    %s68 = sphi 0, %s70
    %s71 = sphi 0, %s68
    %s72 = sphi 0, %s71
    %s88 = sphi 0, %s72
    %s94 = sphi 0, %s96
    %s97 = sphi 0, %s94
    %s98 = sphi 0, %s97
    %s114 = sphi 0, %s98
    %s122 = sphi 0, %s124
    %s125 = sphi 0, %s122
    %s126 = sphi 0, %s125
    %s142 = sphi 0, %s126
  $region4: #{vae_forward.30} parent=0 // loop_header_branch
    %12 = sbr.rel (%p10) target = $region8
  $region5: #{vae_forward.30} parent=0 // loop_body
    %s14 = ssub.s32 %s9, 1
    %s15 = ssub.s32 %s9, 2
    %s25 = sadd.s32 1, %s18
    %p26 = scmp.ge.s32.totalorder %s25, 4
    %s27 = scalar_select %p26, 0, %s25
    %s28 = sadd.s32 1, %s17
    %s29 = scalar_select %p26, %s28, %s17
    %p30 = scmp.ge.s32.totalorder %s29, 1
    %s31 = scalar_select %p30, 0, %s29
    %s32 = sadd.s32 1, %s16
    %s33 = scalar_select %p30, %s32, %s16
    %p34 = scmp.ge.s32.totalorder %s33, 1
    %s35 = scalar_select %p34, 0, %s33
    %s36 = ssub.s32 %s16, %s35
    %s37 = ssub.s32 %s18, %s27
    %s38 = sor.u32 %s36, %s37
    %p39 = scmp.eq.s32.totalorder %s38, 0
    %s41 = sadd.s32 %s40, 1
    %s42 = scalar_select %p39, %s40, %s41
    %p45 = pneg %p39
    %p46 = scmp.eq.s32.totalorder %s9, 3
    %p47 = por %p45, %p46
    %p48 = scmp.ne.s32.totalorder %s40, %s43
    %p49 = scmp.eq.s32.totalorder %s9, 0
    %p50 = por %p48, %p49
    %p51 = scmp.ne.s32.totalorder %s40, %s43
    %p52 = scmp.eq.s32.totalorder %s14, 3
    %p53 = por %p51, %p52
    %p54 = scmp.ne.s32.totalorder %s43, %s44
    %p55 = scmp.eq.s32.totalorder %s14, 0
    %p56 = por %p54, %p55
    %p57 = scmp.ne.s32.totalorder %s43, %s44
    %p58 = scmp.eq.s32.totalorder %s15, 3
    %p59 = por %p57, %p58
    %p61 = scmp.ne.s32.totalorder %s44, %s60
    %p62 = scmp.eq.s32.totalorder %s15, 0
    %p63 = por %p61, %p62
    %s64 = ssub.s32 %s18, %s27
    %s65 = ssub.s32 %s17, %s31
    %s66 = sor.u32 %s64, %s65
    %p67 = scmp.eq.s32.totalorder %s66, 0
    %s69 = sadd.s32 %s68, 1
    %s70 = scalar_select %p67, %s68, %s69
    %p73 = pneg %p67
    %p74 = scmp.eq.s32.totalorder %s9, 3
    %p75 = por %p73, %p74
    %p76 = scmp.ne.s32.totalorder %s68, %s71
    %p77 = scmp.eq.s32.totalorder %s9, 0
    %p78 = por %p76, %p77
    %p79 = scmp.ne.s32.totalorder %s68, %s71
    %p80 = scmp.eq.s32.totalorder %s14, 3
    %p81 = por %p79, %p80
    %p82 = scmp.ne.s32.totalorder %s71, %s72
    %p83 = scmp.eq.s32.totalorder %s14, 0
    %p84 = por %p82, %p83
    %p85 = scmp.ne.s32.totalorder %s71, %s72
    %p86 = scmp.eq.s32.totalorder %s15, 3
    %p87 = por %p85, %p86
    %p89 = scmp.ne.s32.totalorder %s72, %s88
    %p90 = scmp.eq.s32.totalorder %s15, 0
    %p91 = por %p89, %p90
    %s92 = ssub.s32 %s17, %s31
    %p93 = scmp.eq.s32.totalorder %s92, 0
    %s95 = sadd.s32 %s94, 1
    %s96 = scalar_select %p93, %s94, %s95
    %p99 = pneg %p93
    %p100 = scmp.eq.s32.totalorder %s9, 3
    %p101 = por %p99, %p100
    %p102 = scmp.ne.s32.totalorder %s94, %s97
    %p103 = scmp.eq.s32.totalorder %s9, 0
    %p104 = por %p102, %p103
    %p105 = scmp.ne.s32.totalorder %s94, %s97
    %p106 = scmp.eq.s32.totalorder %s14, 3
    %p107 = por %p105, %p106
    %p108 = scmp.ne.s32.totalorder %s97, %s98
    %p109 = scmp.eq.s32.totalorder %s14, 0
    %p110 = por %p108, %p109
    %p111 = scmp.ne.s32.totalorder %s97, %s98
    %p112 = scmp.eq.s32.totalorder %s15, 3
    %p113 = por %p111, %p112
    %p115 = scmp.ne.s32.totalorder %s98, %s114
    %p116 = scmp.eq.s32.totalorder %s15, 0
    %p117 = por %p115, %p116
    %s118 = ssub.s32 %s16, %s35
    %s119 = ssub.s32 %s17, %s31
    %s120 = sor.u32 %s118, %s119
    %p121 = scmp.eq.s32.totalorder %s120, 0
    %s123 = sadd.s32 %s122, 1
    %s124 = scalar_select %p121, %s122, %s123
    %p127 = pneg %p121
    %p128 = scmp.eq.s32.totalorder %s9, 3
    %p129 = por %p127, %p128
    %p130 = scmp.ne.s32.totalorder %s122, %s125
    %p131 = scmp.eq.s32.totalorder %s9, 0
    %p132 = por %p130, %p131
    %p133 = scmp.ne.s32.totalorder %s122, %s125
    %p134 = scmp.eq.s32.totalorder %s14, 3
    %p135 = por %p133, %p134
    %p136 = scmp.ne.s32.totalorder %s125, %s126
    %p137 = scmp.eq.s32.totalorder %s14, 0
    %p138 = por %p136, %p137
    %p139 = scmp.ne.s32.totalorder %s125, %s126
    %p140 = scmp.eq.s32.totalorder %s15, 3
    %p141 = por %p139, %p140
    %p143 = scmp.ne.s32.totalorder %s126, %s142
    %p144 = scmp.eq.s32.totalorder %s15, 0
    %p145 = por %p143, %p144
    %p146 = scmp.le.s32.totalorder 1, %s9
    %p147 = scmp.lt.s32.totalorder %s9, 5
    %p148 = pnand %p146, %p147
    %p149 = pneg %p148
    // Predicated region
    $region9: #{vae_forward.30} parent=5 // pred_check
      _
    $region10: #{vae_forward.30} parent=5 // pred_check_branch
      %151 = sbr.rel (%p148) target = $region12
    $region11: #{vae_forward.30} parent=5 // pred_region
      %s152 = ssub.s32 %s9, 1
      // Predicated region
      $region13: #{vae_forward.30} parent=11 // pred_check
        %p153 = pneg %p110
      $region14: #{vae_forward.30} parent=11 // pred_check_branch
        %155 = sbr.rel (%p153) target = $region16
      $region15: #{vae_forward.30} parent=11 // pred_region
        %p156 = scmp.lt.s32.totalorder %s20, 0
        %s157 = scalar_select %p156, %s20, 0
        %s158 = scalar_lea.vmem %s2, %s157
      $region16: #{vae_forward.30} parent=11 // pred_fallthru
        _
    $region12: #{vae_forward.30} parent=5 // pred_fallthru
      _
    %p159 = scmp.lt.s32.totalorder %s9, 4
    // Predicated region
    $region17: #{vae_forward.30} parent=5 // pred_check
      %p160 = pneg %p159
    $region18: #{vae_forward.30} parent=5 // pred_check_branch
      %162 = sbr.rel (%p160) target = $region20
    $region19: #{vae_forward.30} parent=5 // pred_region
      // Predicated region
      $region21: #{vae_forward.30} parent=19 // pred_check
        %p163 = pneg %p50
      $region22: #{vae_forward.30} parent=19 // pred_check_branch
        %165 = sbr.rel (%p163) target = $region24
      $region23: #{vae_forward.30} parent=19 // pred_region
        %s166 = smul.u32 8, %s18
        %p167 = scmp.lt.s32.totalorder %s16, 0
        %s168 = scalar_select %p167, %s16, 0
        %p169 = scmp.lt.s32.totalorder %s166, 31
        %s170 = scalar_select %p169, %s166, 31
        %s171 = smul.addr %s168, 32
        %s172 = sadd.s32 %s170, %s171
        %s173 = scalar_lea.vmem %s0, %s172
        %s174 = smul.u32 8, %s18
      $region24: #{vae_forward.30} parent=19 // pred_fallthru
        _
      // Predicated region
      $region25: #{vae_forward.30} parent=19 // pred_check
        %p175 = pneg %p78
      $region26: #{vae_forward.30} parent=19 // pred_check_branch
        %177 = sbr.rel (%p175) target = $region28
      $region27: #{vae_forward.30} parent=19 // pred_region
        %s178 = smul.u32 128, %s18
        %p179 = scmp.lt.s32.totalorder %s178, 511
        %s180 = scalar_select %p179, %s178, 511
        %p181 = scmp.lt.s32.totalorder %s17, 0
        %s182 = scalar_select %p181, %s17, 0
        %s183 = sadd.s32 %s182, %s180
        %s184 = smul.addr %s183, 4
        %s185 = scalar_lea.vmem %s1, %s184
        %s186 = smul.u32 128, %s18
      $region28: #{vae_forward.30} parent=19 // pred_fallthru
        _
    $region20: #{vae_forward.30} parent=5 // pred_fallthru
      _
    %p187 = scmp.le.s32.totalorder 1, %s9
    %p188 = scmp.lt.s32.totalorder %s9, 5
    %p189 = pnand %p187, %p188
    %p190 = pneg %p189
    // Predicated region
    $region29: #{vae_forward.30} parent=5 // pred_check
      _
    $region30: #{vae_forward.30} parent=5 // pred_check_branch
      %192 = sbr.rel (%p189) target = $region32
    $region31: #{vae_forward.30} parent=5 // pred_region
      %s193 = ssub.s32 %s9, 1
      %s194 = smul.u32 8, %s21
      %p195 = scmp.lt.s32.totalorder %s19, 0
      %s196 = scalar_select %p195, %s19, 0
      %p197 = scmp.lt.s32.totalorder %s194, 31
      %s198 = scalar_select %p197, %s194, 31
      %s199 = smul.addr %s196, 32
      %s200 = sadd.s32 %s198, %s199
      %s201 = scalar_lea.vmem %s0, %s200
      %p202 = pneg %p56
      %p203 = pneg %p53
      %s204 = smul.u32 128, %s21
      %p205 = scmp.lt.s32.totalorder %s204, 511
      %s206 = scalar_select %p205, %s204, 511
      %p207 = scmp.lt.s32.totalorder %s20, 0
      %s208 = scalar_select %p207, %s20, 0
      %s209 = sadd.s32 %s208, %s206
      %s210 = smul.addr %s209, 4
      %s211 = scalar_lea.vmem %s1, %s210
      %p212 = pneg %p84
      %p213 = pneg %p81
      %p214 = scmp.lt.s32.totalorder %s20, 0
      %s215 = scalar_select %p214, %s20, 0
      %s216 = scalar_lea.vmem %s2, %s215
      %p217 = pneg %p110
      %p218 = pneg %p107
      %p219 = pneg %p138
      %p220 = pneg %p135
      %p221 = scmp.lt.s32.totalorder %s19, 0
      %s222 = scalar_select %p221, %s19, 0
      %p223 = scmp.lt.s32.totalorder %s20, 0
      %s224 = scalar_select %p223, %s20, 0
      %s225 = sadd.s32 %s224, %s222
      %s226 = smul.addr %s225, 2
      %s227 = scalar_lea.vmem %s3, %s226
      %s228 = smul.u32 8, %s21
      %p229 = scmp.lt.s32.totalorder %s19, 0
      %s230 = scalar_select %p229, %s19, 0
      %p231 = scmp.lt.s32.totalorder %s228, 31
      %s232 = scalar_select %p231, %s228, 31
      %s233 = smul.addr %s230, 32
      %s234 = sadd.s32 %s232, %s233
      %s235 = scalar_lea.vmem %s0, %s234
      %s236 = smul.u32 8, %s21
      %s237 = smul.u32 128, %s21
      %p238 = scmp.lt.s32.totalorder %s237, 511
      %s239 = scalar_select %p238, %s237, 511
      %p240 = scmp.lt.s32.totalorder %s20, 0
      %s241 = scalar_select %p240, %s20, 0
      %s242 = sadd.s32 %s241, %s239
      %s243 = smul.addr %s242, 4
      %s244 = scalar_lea.vmem %s1, %s243
      %s245 = smul.u32 128, %s21
      %p246 = scmp.lt.s32.totalorder %s20, 0
      %s247 = scalar_select %p246, %s20, 0
      %s248 = scalar_lea.vmem %s2, %s247
      %p249 = scmp.lt.s32.totalorder %s19, 0
      %s250 = scalar_select %p249, %s19, 0
      %p251 = scmp.lt.s32.totalorder %s20, 0
      %s252 = scalar_select %p251, %s20, 0
      %s253 = sadd.s32 %s252, %s250
      %s254 = smul.addr %s253, 2
      %s255 = scalar_lea.vmem %s3, %s254
      %p256 = scmp.eq.s32.totalorder %s21, 0
      // Predicated region
      $region33: #{vae_forward.30} parent=31 // pred_check
        %p257 = pneg %p256
      $region34: #{vae_forward.30} parent=31 // pred_check_branch
        %259 = sbr.rel (%p257) target = $region36
      $region35: #{vae_forward.30} parent=31 // pred_region
        %vm260 = vcmask 517120
        %261 = vst.msk [vmem:[#allocation2] sm:$0x3] %vm260, 0.0
      $region36: #{vae_forward.30} parent=31 // pred_fallthru
        _
      %v262 = vld [vmem:[#allocation2] sm:$0x3]
      %v263 = vld [vmem:[%s235] sm:$0xff]
      %v264 = vld [vmem:[%s244] sm:$0xf]
      %v265 = vld [vmem:[%s244 + $0x4] sm:$0xf]
      %v266 = vld [vmem:[%s244 + $0x8] sm:$0xf]
      %v267 = vld [vmem:[%s244 + $0xc] sm:$0xf]
      %v268 = vld [vmem:[%s244 + $0x10] sm:$0xf]
      %v269 = vld [vmem:[%s244 + $0x14] sm:$0xf]
      %v270 = vld [vmem:[%s244 + $0x18] sm:$0xf]
      %v271 = vld [vmem:[%s244 + $0x1c] sm:$0xf]
      %v272 = vld [vmem:[%s244 + $0x20] sm:$0xf]
      %v273 = vld [vmem:[%s244 + $0x24] sm:$0xf]
      %v274 = vld [vmem:[%s244 + $0x28] sm:$0xf]
      %v275 = vld [vmem:[%s244 + $0x2c] sm:$0xf]
      %v276 = vld [vmem:[%s244 + $0x30] sm:$0xf]
      %v277 = vld [vmem:[%s244 + $0x34] sm:$0xf]
      %v278 = vld [vmem:[%s244 + $0x38] sm:$0xf]
      %v279 = vld [vmem:[%s244 + $0x3c] sm:$0xf]
      %v280 = vld [vmem:[%s244 + $0x40] sm:$0xf]
      %v281 = vld [vmem:[%s244 + $0x44] sm:$0xf]
      %v282 = vld [vmem:[%s244 + $0x48] sm:$0xf]
      %v283 = vld [vmem:[%s244 + $0x4c] sm:$0xf]
      %v284 = vld [vmem:[%s244 + $0x50] sm:$0xf]
      %v285 = vld [vmem:[%s244 + $0x54] sm:$0xf]
      %v286 = vld [vmem:[%s244 + $0x58] sm:$0xf]
      %v287 = vld [vmem:[%s244 + $0x5c] sm:$0xf]
      %v288 = vld [vmem:[%s244 + $0x60] sm:$0xf]
      %v289 = vld [vmem:[%s244 + $0x64] sm:$0xf]
      %v290 = vld [vmem:[%s244 + $0x68] sm:$0xf]
      %v291 = vld [vmem:[%s244 + $0x6c] sm:$0xf]
      %v292 = vld [vmem:[%s244 + $0x70] sm:$0xf]
      %v293 = vld [vmem:[%s244 + $0x74] sm:$0xf]
      %v294 = vld [vmem:[%s244 + $0x78] sm:$0xf]
      %v295 = vld [vmem:[%s244 + $0x7c] sm:$0xf]
      %v296 = vld [vmem:[%s244 + $0x80] sm:$0xf]
      %v297 = vld [vmem:[%s244 + $0x84] sm:$0xf]
      %v298 = vld [vmem:[%s244 + $0x88] sm:$0xf]
      %v299 = vld [vmem:[%s244 + $0x8c] sm:$0xf]
      %v300 = vld [vmem:[%s244 + $0x90] sm:$0xf]
      %v301 = vld [vmem:[%s244 + $0x94] sm:$0xf]
      %v302 = vld [vmem:[%s244 + $0x98] sm:$0xf]
      %v303 = vld [vmem:[%s244 + $0x9c] sm:$0xf]
      %v304 = vld [vmem:[%s244 + $0xa0] sm:$0xf]
      %v305 = vld [vmem:[%s244 + $0xa4] sm:$0xf]
      %v306 = vld [vmem:[%s244 + $0xa8] sm:$0xf]
      %v307 = vld [vmem:[%s244 + $0xac] sm:$0xf]
      %v308 = vld [vmem:[%s244 + $0xb0] sm:$0xf]
      %v309 = vld [vmem:[%s244 + $0xb4] sm:$0xf]
      %v310 = vld [vmem:[%s244 + $0xb8] sm:$0xf]
      %v311 = vld [vmem:[%s244 + $0xbc] sm:$0xf]
      %v312 = vld [vmem:[%s244 + $0xc0] sm:$0xf]
      %v313 = vld [vmem:[%s244 + $0xc4] sm:$0xf]
      %v314 = vld [vmem:[%s244 + $0xc8] sm:$0xf]
      %v315 = vld [vmem:[%s244 + $0xcc] sm:$0xf]
      %v316 = vld [vmem:[%s244 + $0xd0] sm:$0xf]
      %v317 = vld [vmem:[%s244 + $0xd4] sm:$0xf]
      %v318 = vld [vmem:[%s244 + $0xd8] sm:$0xf]
      %v319 = vld [vmem:[%s244 + $0xdc] sm:$0xf]
      %v320 = vld [vmem:[%s244 + $0xe0] sm:$0xf]
      %v321 = vld [vmem:[%s244 + $0xe4] sm:$0xf]
      %v322 = vld [vmem:[%s244 + $0xe8] sm:$0xf]
      %v323 = vld [vmem:[%s244 + $0xec] sm:$0xf]
      %v324 = vld [vmem:[%s244 + $0xf0] sm:$0xf]
      %v325 = vld [vmem:[%s244 + $0xf4] sm:$0xf]
      %v326 = vld [vmem:[%s244 + $0xf8] sm:$0xf]
      %v327 = vld [vmem:[%s244 + $0xfc] sm:$0xf]
      %v328 = vld [vmem:[%s244 + $0x100] sm:$0xf]
      %v329 = vld [vmem:[%s244 + $0x104] sm:$0xf]
      %v330 = vld [vmem:[%s244 + $0x108] sm:$0xf]
      %v331 = vld [vmem:[%s244 + $0x10c] sm:$0xf]
      %v332 = vld [vmem:[%s244 + $0x110] sm:$0xf]
      %v333 = vld [vmem:[%s244 + $0x114] sm:$0xf]
      %v334 = vld [vmem:[%s244 + $0x118] sm:$0xf]
      %v335 = vld [vmem:[%s244 + $0x11c] sm:$0xf]
      %v336 = vld [vmem:[%s244 + $0x120] sm:$0xf]
      %v337 = vld [vmem:[%s244 + $0x124] sm:$0xf]
      %v338 = vld [vmem:[%s244 + $0x128] sm:$0xf]
      %v339 = vld [vmem:[%s244 + $0x12c] sm:$0xf]
      %v340 = vld [vmem:[%s244 + $0x130] sm:$0xf]
      %v341 = vld [vmem:[%s244 + $0x134] sm:$0xf]
      %v342 = vld [vmem:[%s244 + $0x138] sm:$0xf]
      %v343 = vld [vmem:[%s244 + $0x13c] sm:$0xf]
      %v344 = vld [vmem:[%s244 + $0x140] sm:$0xf]
      %v345 = vld [vmem:[%s244 + $0x144] sm:$0xf]
      %v346 = vld [vmem:[%s244 + $0x148] sm:$0xf]
      %v347 = vld [vmem:[%s244 + $0x14c] sm:$0xf]
      %v348 = vld [vmem:[%s244 + $0x150] sm:$0xf]
      %v349 = vld [vmem:[%s244 + $0x154] sm:$0xf]
      %v350 = vld [vmem:[%s244 + $0x158] sm:$0xf]
      %v351 = vld [vmem:[%s244 + $0x15c] sm:$0xf]
      %v352 = vld [vmem:[%s244 + $0x160] sm:$0xf]
      %v353 = vld [vmem:[%s244 + $0x164] sm:$0xf]
      %v354 = vld [vmem:[%s244 + $0x168] sm:$0xf]
      %v355 = vld [vmem:[%s244 + $0x16c] sm:$0xf]
      %v356 = vld [vmem:[%s244 + $0x170] sm:$0xf]
      %v357 = vld [vmem:[%s244 + $0x174] sm:$0xf]
      %v358 = vld [vmem:[%s244 + $0x178] sm:$0xf]
      %v359 = vld [vmem:[%s244 + $0x17c] sm:$0xf]
      %v360 = vld [vmem:[%s244 + $0x180] sm:$0xf]
      %v361 = vld [vmem:[%s244 + $0x184] sm:$0xf]
      %v362 = vld [vmem:[%s244 + $0x188] sm:$0xf]
      %v363 = vld [vmem:[%s244 + $0x18c] sm:$0xf]
      %v364 = vld [vmem:[%s244 + $0x190] sm:$0xf]
      %v365 = vld [vmem:[%s244 + $0x194] sm:$0xf]
      %v366 = vld [vmem:[%s244 + $0x198] sm:$0xf]
      %v367 = vld [vmem:[%s244 + $0x19c] sm:$0xf]
      %v368 = vld [vmem:[%s244 + $0x1a0] sm:$0xf]
      %v369 = vld [vmem:[%s244 + $0x1a4] sm:$0xf]
      %v370 = vld [vmem:[%s244 + $0x1a8] sm:$0xf]
      %v371 = vld [vmem:[%s244 + $0x1ac] sm:$0xf]
      %v372 = vld [vmem:[%s244 + $0x1b0] sm:$0xf]
      %v373 = vld [vmem:[%s244 + $0x1b4] sm:$0xf]
      %v374 = vld [vmem:[%s244 + $0x1b8] sm:$0xf]
      %v375 = vld [vmem:[%s244 + $0x1bc] sm:$0xf]
      %v376 = vld [vmem:[%s244 + $0x1c0] sm:$0xf]
      %v377 = vld [vmem:[%s244 + $0x1c4] sm:$0xf]
      %v378 = vld [vmem:[%s244 + $0x1c8] sm:$0xf]
      %v379 = vld [vmem:[%s244 + $0x1cc] sm:$0xf]
      %v380 = vld [vmem:[%s244 + $0x1d0] sm:$0xf]
      %v381 = vld [vmem:[%s244 + $0x1d4] sm:$0xf]
      %v382 = vld [vmem:[%s244 + $0x1d8] sm:$0xf]
      %v383 = vld [vmem:[%s244 + $0x1dc] sm:$0xf]
      %v384 = vld [vmem:[%s244 + $0x1e0] sm:$0xf]
      %v385 = vld [vmem:[%s244 + $0x1e4] sm:$0xf]
      %v386 = vld [vmem:[%s244 + $0x1e8] sm:$0xf]
      %v387 = vld [vmem:[%s244 + $0x1ec] sm:$0xf]
      %v388 = vld [vmem:[%s244 + $0x1f0] sm:$0xf]
      %v389 = vld [vmem:[%s244 + $0x1f4] sm:$0xf]
      %v390 = vld [vmem:[%s244 + $0x1f8] sm:$0xf]
      %v391 = vld [vmem:[%s244 + $0x1fc] sm:$0xf]
      %393 = vst [vmem:[#allocation1] ss:$9 sm:$0xff] %v263
      %v394 = vld [vmem:[#allocation1] sm:$0xff]
      %v395 = vld [vmem:[#allocation1 + $0x9] sm:$0xff]
      %v396 = vld [vmem:[#allocation1 + $0x12] sm:$0xff]
      %v397 = vld [vmem:[#allocation1 + $0x1b] sm:$0xff]
      %v398 = vld [vmem:[#allocation1 + $0x24] sm:$0xff]
      %v399 = vld [vmem:[#allocation1 + $0x2d] sm:$0xff]
      %v400 = vld [vmem:[#allocation1 + $0x36] sm:$0xff]
      %v401 = vld [vmem:[#allocation1 + $0x3f] sm:$0xff]
      %v538 = vunpack.c.l.b16 %v264
      %v539 = vunpack.c.l.b16 %v265
      %v540 = vunpack.c.l.b16 %v266
      %v541 = vunpack.c.l.b16 %v267
      %v542 = vunpack.c.l.b16 %v268
      %v543 = vunpack.c.l.b16 %v269
      %v544 = vunpack.c.l.b16 %v270
      %v545 = vunpack.c.l.b16 %v271
      %v546 = vunpack.c.l.b16 %v272
      %v547 = vunpack.c.l.b16 %v273
      %v548 = vunpack.c.l.b16 %v274
      %v549 = vunpack.c.l.b16 %v275
      %v550 = vunpack.c.l.b16 %v276
      %v551 = vunpack.c.l.b16 %v277
      %v552 = vunpack.c.l.b16 %v278
      %v553 = vunpack.c.l.b16 %v279
      %v554 = vunpack.c.l.b16 %v280
      %v555 = vunpack.c.l.b16 %v281
      %v556 = vunpack.c.l.b16 %v282
      %v557 = vunpack.c.l.b16 %v283
      %v558 = vunpack.c.l.b16 %v284
      %v559 = vunpack.c.l.b16 %v285
      %v560 = vunpack.c.l.b16 %v286
      %v561 = vunpack.c.l.b16 %v287
      %v562 = vunpack.c.l.b16 %v288
      %v563 = vunpack.c.l.b16 %v289
      %v564 = vunpack.c.l.b16 %v290
      %v565 = vunpack.c.l.b16 %v291
      %v566 = vunpack.c.l.b16 %v292
      %v567 = vunpack.c.l.b16 %v293
      %v568 = vunpack.c.l.b16 %v294
      %v569 = vunpack.c.l.b16 %v295
      %v570 = vunpack.c.l.b16 %v296
      %v571 = vunpack.c.l.b16 %v297
      %v572 = vunpack.c.l.b16 %v298
      %v573 = vunpack.c.l.b16 %v299
      %v574 = vunpack.c.l.b16 %v300
      %v575 = vunpack.c.l.b16 %v301
      %v576 = vunpack.c.l.b16 %v302
      %v577 = vunpack.c.l.b16 %v303
      %v578 = vunpack.c.l.b16 %v304
      %v579 = vunpack.c.l.b16 %v305
      %v580 = vunpack.c.l.b16 %v306
      %v581 = vunpack.c.l.b16 %v307
      %v582 = vunpack.c.l.b16 %v308
      %v583 = vunpack.c.l.b16 %v309
      %v584 = vunpack.c.l.b16 %v310
      %v585 = vunpack.c.l.b16 %v311
      %v586 = vunpack.c.l.b16 %v312
      %v587 = vunpack.c.l.b16 %v313
      %v588 = vunpack.c.l.b16 %v314
      %v589 = vunpack.c.l.b16 %v315
      %v590 = vunpack.c.l.b16 %v316
      %v591 = vunpack.c.l.b16 %v317
      %v592 = vunpack.c.l.b16 %v318
      %v593 = vunpack.c.l.b16 %v319
      %v594 = vunpack.c.l.b16 %v320
      %v595 = vunpack.c.l.b16 %v321
      %v596 = vunpack.c.l.b16 %v322
      %v597 = vunpack.c.l.b16 %v323
      %v598 = vunpack.c.l.b16 %v324
      %v599 = vunpack.c.l.b16 %v325
      %v600 = vunpack.c.l.b16 %v326
      %v601 = vunpack.c.l.b16 %v327
      %v602 = vunpack.c.l.b16 %v328
      %v603 = vunpack.c.l.b16 %v329
      %v604 = vunpack.c.l.b16 %v330
      %v605 = vunpack.c.l.b16 %v331
      %v606 = vunpack.c.l.b16 %v332
      %v607 = vunpack.c.l.b16 %v333
      %v608 = vunpack.c.l.b16 %v334
      %v609 = vunpack.c.l.b16 %v335
      %v610 = vunpack.c.l.b16 %v336
      %v611 = vunpack.c.l.b16 %v337
      %v612 = vunpack.c.l.b16 %v338
      %v613 = vunpack.c.l.b16 %v339
      %v614 = vunpack.c.l.b16 %v340
      %v615 = vunpack.c.l.b16 %v341
      %v616 = vunpack.c.l.b16 %v342
      %v617 = vunpack.c.l.b16 %v343
      %v618 = vunpack.c.l.b16 %v344
      %v619 = vunpack.c.l.b16 %v345
      %v620 = vunpack.c.l.b16 %v346
      %v621 = vunpack.c.l.b16 %v347
      %v622 = vunpack.c.l.b16 %v348
      %v623 = vunpack.c.l.b16 %v349
      %v624 = vunpack.c.l.b16 %v350
      %v625 = vunpack.c.l.b16 %v351
      %v626 = vunpack.c.l.b16 %v352
      %v627 = vunpack.c.l.b16 %v353
      %v628 = vunpack.c.l.b16 %v354
      %v629 = vunpack.c.l.b16 %v355
      %v630 = vunpack.c.l.b16 %v356
      %v631 = vunpack.c.l.b16 %v357
      %v632 = vunpack.c.l.b16 %v358
      %v633 = vunpack.c.l.b16 %v359
      %v634 = vunpack.c.l.b16 %v360
      %v635 = vunpack.c.l.b16 %v361
      %v636 = vunpack.c.l.b16 %v362
      %v637 = vunpack.c.l.b16 %v363
      %v638 = vunpack.c.l.b16 %v364
      %v639 = vunpack.c.l.b16 %v365
      %v640 = vunpack.c.l.b16 %v366
      %v641 = vunpack.c.l.b16 %v367
      %v642 = vunpack.c.l.b16 %v368
      %v643 = vunpack.c.l.b16 %v369
      %v644 = vunpack.c.l.b16 %v370
      %v645 = vunpack.c.l.b16 %v371
      %v646 = vunpack.c.l.b16 %v372
      %v647 = vunpack.c.l.b16 %v373
      %v648 = vunpack.c.l.b16 %v374
      %v649 = vunpack.c.l.b16 %v375
      %v650 = vunpack.c.l.b16 %v376
      %v651 = vunpack.c.l.b16 %v377
      %v652 = vunpack.c.l.b16 %v378
      %v653 = vunpack.c.l.b16 %v379
      %v654 = vunpack.c.l.b16 %v380
      %v655 = vunpack.c.l.b16 %v381
      %v656 = vunpack.c.l.b16 %v382
      %v657 = vunpack.c.l.b16 %v383
      %v658 = vunpack.c.l.b16 %v384
      %v659 = vunpack.c.l.b16 %v385
      %v660 = vunpack.c.l.b16 %v386
      %v661 = vunpack.c.l.b16 %v387
      %v662 = vunpack.c.l.b16 %v388
      %v663 = vunpack.c.l.b16 %v389
      %v664 = vunpack.c.l.b16 %v390
      %v665 = vunpack.c.l.b16 %v391
      %v666 = vpack.c.b16 %v539, %v538
      %v667 = vpack.c.b16 %v541, %v540
      %v668 = vpack.c.b16 %v543, %v542
      %v669 = vpack.c.b16 %v545, %v544
      %v670 = vpack.c.b16 %v547, %v546
      %v671 = vpack.c.b16 %v549, %v548
      %v672 = vpack.c.b16 %v551, %v550
      %v673 = vpack.c.b16 %v553, %v552
      %v674 = vpack.c.b16 %v555, %v554
      %v675 = vpack.c.b16 %v557, %v556
      %v676 = vpack.c.b16 %v559, %v558
      %v677 = vpack.c.b16 %v561, %v560
      %v678 = vpack.c.b16 %v563, %v562
      %v679 = vpack.c.b16 %v565, %v564
      %v680 = vpack.c.b16 %v567, %v566
      %v681 = vpack.c.b16 %v569, %v568
      %v682 = vpack.c.b16 %v571, %v570
      %v683 = vpack.c.b16 %v573, %v572
      %v684 = vpack.c.b16 %v575, %v574
      %v685 = vpack.c.b16 %v577, %v576
      %v686 = vpack.c.b16 %v579, %v578
      %v687 = vpack.c.b16 %v581, %v580
      %v688 = vpack.c.b16 %v583, %v582
      %v689 = vpack.c.b16 %v585, %v584
      %v690 = vpack.c.b16 %v587, %v586
      %v691 = vpack.c.b16 %v589, %v588
      %v692 = vpack.c.b16 %v591, %v590
      %v693 = vpack.c.b16 %v593, %v592
      %v694 = vpack.c.b16 %v595, %v594
      %v695 = vpack.c.b16 %v597, %v596
      %v696 = vpack.c.b16 %v599, %v598
      %v697 = vpack.c.b16 %v601, %v600
      %v698 = vpack.c.b16 %v603, %v602
      %v699 = vpack.c.b16 %v605, %v604
      %v700 = vpack.c.b16 %v607, %v606
      %v701 = vpack.c.b16 %v609, %v608
      %v702 = vpack.c.b16 %v611, %v610
      %v703 = vpack.c.b16 %v613, %v612
      %v704 = vpack.c.b16 %v615, %v614
      %v705 = vpack.c.b16 %v617, %v616
      %v706 = vpack.c.b16 %v619, %v618
      %v707 = vpack.c.b16 %v621, %v620
      %v708 = vpack.c.b16 %v623, %v622
      %v709 = vpack.c.b16 %v625, %v624
      %v710 = vpack.c.b16 %v627, %v626
      %v711 = vpack.c.b16 %v629, %v628
      %v712 = vpack.c.b16 %v631, %v630
      %v713 = vpack.c.b16 %v633, %v632
      %v714 = vpack.c.b16 %v635, %v634
      %v715 = vpack.c.b16 %v637, %v636
      %v716 = vpack.c.b16 %v639, %v638
      %v717 = vpack.c.b16 %v641, %v640
      %v718 = vpack.c.b16 %v643, %v642
      %v719 = vpack.c.b16 %v645, %v644
      %v720 = vpack.c.b16 %v647, %v646
      %v721 = vpack.c.b16 %v649, %v648
      %v722 = vpack.c.b16 %v651, %v650
      %v723 = vpack.c.b16 %v653, %v652
      %v724 = vpack.c.b16 %v655, %v654
      %v725 = vpack.c.b16 %v657, %v656
      %v726 = vpack.c.b16 %v659, %v658
      %v727 = vpack.c.b16 %v661, %v660
      %v728 = vpack.c.b16 %v663, %v662
      %v729 = vpack.c.b16 %v665, %v664
      %794 = vmatpush.bf16.msra.mxu0 %v673
      %795 = vmatpush.bf16.msra.mxu0 %v672
      %796 = vmatpush.bf16.msra.mxu0 %v671
      %797 = vmatpush.bf16.msra.mxu0 %v670
      %798 = vmatpush.bf16.msra.mxu0 %v669
      %799 = vmatpush.bf16.msra.mxu0 %v668
      %800 = vmatpush.bf16.msra.mxu0 %v667
      %801 = vmatpush.bf16.msra.mxu0 %v666
      %802 = vmatmul.bf16.gmra.mxu0 %v394
      %v803 = vpop.f32.mrf.mxu0
      %v804 = vadd.f32 0.0, %v803
      %v805 = vpop.f32.mrf.mxu0
      %806 = vdwg.mxu0
      %807 = vmatpush.bf16.msra.mxu0 %v681
      %808 = vmatpush.bf16.msra.mxu0 %v680
      %809 = vmatpush.bf16.msra.mxu0 %v679
      %810 = vmatpush.bf16.msra.mxu0 %v678
      %811 = vmatpush.bf16.msra.mxu0 %v677
      %812 = vmatpush.bf16.msra.mxu0 %v676
      %813 = vmatpush.bf16.msra.mxu0 %v675
      %814 = vmatpush.bf16.msra.mxu0 %v674
      %815 = vmatmul.bf16.gmra.mxu0 %v395
      %v816 = vpop.f32.mrf.mxu0
      %v817 = vadd.f32 %v804, %v816
      %v818 = vpop.f32.mrf.mxu0
      %819 = vdwg.mxu0
      %820 = vmatpush.bf16.msra.mxu0 %v689
      %821 = vmatpush.bf16.msra.mxu0 %v688
      %822 = vmatpush.bf16.msra.mxu0 %v687
      %823 = vmatpush.bf16.msra.mxu0 %v686
      %824 = vmatpush.bf16.msra.mxu0 %v685
      %825 = vmatpush.bf16.msra.mxu0 %v684
      %826 = vmatpush.bf16.msra.mxu0 %v683
      %827 = vmatpush.bf16.msra.mxu0 %v682
      %828 = vmatmul.bf16.gmra.mxu0 %v396
      %v829 = vpop.f32.mrf.mxu0
      %v830 = vadd.f32 %v817, %v829
      %v831 = vpop.f32.mrf.mxu0
      %832 = vdwg.mxu0
      %833 = vmatpush.bf16.msra.mxu0 %v697
      %834 = vmatpush.bf16.msra.mxu0 %v696
      %835 = vmatpush.bf16.msra.mxu0 %v695
      %836 = vmatpush.bf16.msra.mxu0 %v694
      %837 = vmatpush.bf16.msra.mxu0 %v693
      %838 = vmatpush.bf16.msra.mxu0 %v692
      %839 = vmatpush.bf16.msra.mxu0 %v691
      %840 = vmatpush.bf16.msra.mxu0 %v690
      %841 = vmatmul.bf16.gmra.mxu0 %v397
      %v842 = vpop.f32.mrf.mxu0
      %v843 = vadd.f32 %v830, %v842
      %v844 = vpop.f32.mrf.mxu0
      %845 = vdwg.mxu0
      %846 = vmatpush.bf16.msra.mxu0 %v705
      %847 = vmatpush.bf16.msra.mxu0 %v704
      %848 = vmatpush.bf16.msra.mxu0 %v703
      %849 = vmatpush.bf16.msra.mxu0 %v702
      %850 = vmatpush.bf16.msra.mxu0 %v701
      %851 = vmatpush.bf16.msra.mxu0 %v700
      %852 = vmatpush.bf16.msra.mxu0 %v699
      %853 = vmatpush.bf16.msra.mxu0 %v698
      %854 = vmatmul.bf16.gmra.mxu0 %v398
      %v855 = vpop.f32.mrf.mxu0
      %v856 = vadd.f32 %v843, %v855
      %v857 = vpop.f32.mrf.mxu0
      %858 = vdwg.mxu0
      %859 = vmatpush.bf16.msra.mxu0 %v713
      %860 = vmatpush.bf16.msra.mxu0 %v712
      %861 = vmatpush.bf16.msra.mxu0 %v711
      %862 = vmatpush.bf16.msra.mxu0 %v710
      %863 = vmatpush.bf16.msra.mxu0 %v709
      %864 = vmatpush.bf16.msra.mxu0 %v708
      %865 = vmatpush.bf16.msra.mxu0 %v707
      %866 = vmatpush.bf16.msra.mxu0 %v706
      %867 = vmatmul.bf16.gmra.mxu0 %v399
      %v868 = vpop.f32.mrf.mxu0
      %v869 = vadd.f32 %v856, %v868
      %v870 = vpop.f32.mrf.mxu0
      %871 = vdwg.mxu0
      %872 = vmatpush.bf16.msra.mxu0 %v721
      %873 = vmatpush.bf16.msra.mxu0 %v720
      %874 = vmatpush.bf16.msra.mxu0 %v719
      %875 = vmatpush.bf16.msra.mxu0 %v718
      %876 = vmatpush.bf16.msra.mxu0 %v717
      %877 = vmatpush.bf16.msra.mxu0 %v716
      %878 = vmatpush.bf16.msra.mxu0 %v715
      %879 = vmatpush.bf16.msra.mxu0 %v714
      %880 = vmatmul.bf16.gmra.mxu0 %v400
      %v881 = vpop.f32.mrf.mxu0
      %v882 = vadd.f32 %v869, %v881
      %v883 = vpop.f32.mrf.mxu0
      %884 = vdwg.mxu0
      %885 = vmatpush.bf16.msra.mxu0 %v729
      %886 = vmatpush.bf16.msra.mxu0 %v728
      %887 = vmatpush.bf16.msra.mxu0 %v727
      %888 = vmatpush.bf16.msra.mxu0 %v726
      %889 = vmatpush.bf16.msra.mxu0 %v725
      %890 = vmatpush.bf16.msra.mxu0 %v724
      %891 = vmatpush.bf16.msra.mxu0 %v723
      %892 = vmatpush.bf16.msra.mxu0 %v722
      %893 = vmatmul.bf16.gmra.mxu0 %v401
      %v894 = vpop.f32.mrf.mxu0
      %v895 = vadd.f32 %v882, %v894
      %v896 = vpop.f32.mrf.mxu0
      %897 = vdwg.mxu0
      %v898 = vadd.f32 %v262, %v895
      %vm899 = vcmask 517120
      %900 = vst.msk [vmem:[#allocation2] sm:$0x3] %vm899, %v898
      %p901 = scmp.eq.s32.totalorder %s21, 3
      // Predicated region
      $region37: #{vae_forward.30} parent=31 // pred_check
        %p902 = pneg %p901
      $region38: #{vae_forward.30} parent=31 // pred_check_branch
        %904 = sbr.rel (%p902) target = $region40
      $region39: #{vae_forward.30} parent=31 // pred_region
        %v905 = vld [vmem:[#allocation2] sm:$0x3]
        %v906 = vld [vmem:[%s248] sm:$0x1]
        %v908 = vperm.slane %v906, 0
        %v910 = vadd.f32 %v905, %v908
        %911 = vst.msk [vmem:[%s255] sm:$0x3] %vm899, %v910
      $region40: #{vae_forward.30} parent=31 // pred_fallthru
        _
      %p912 = scmp.lt.s32.totalorder %s19, 0
      %s913 = scalar_select %p912, %s19, 0
      %p914 = scmp.lt.s32.totalorder %s20, 0
      %s915 = scalar_select %p914, %s20, 0
      %s916 = sadd.s32 %s915, %s913
      %s917 = smul.addr %s916, 2
      %s918 = scalar_lea.vmem %s3, %s917
      // Predicated region
      $region41: #{vae_forward.30} parent=31 // pred_check
        %p919 = pneg %p135
      $region42: #{vae_forward.30} parent=31 // pred_check_branch
        %921 = sbr.rel (%p919) target = $region44
      $region43: #{vae_forward.30} parent=31 // pred_region
        _
      $region44: #{vae_forward.30} parent=31 // pred_fallthru
        _
      // Predicated region
      $region45: #{vae_forward.30} parent=31 // pred_check
        %p922 = pneg %p135
      $region46: #{vae_forward.30} parent=31 // pred_check_branch
        %924 = sbr.rel (%p922) target = $region48
      $region47: #{vae_forward.30} parent=31 // pred_region
        %p925 = scmp.lt.s32.totalorder %s19, 0
        %s926 = scalar_select %p925, %s19, 0
        %p927 = scmp.lt.s32.totalorder %s20, 0
        %s928 = scalar_select %p927, %s20, 0
        %s929 = sadd.s32 %s928, %s926
        %s930 = smul.addr %s929, 2
        %s931 = scalar_lea.vmem %s3, %s930
      $region48: #{vae_forward.30} parent=31 // pred_fallthru
        _
    $region32: #{vae_forward.30} parent=5 // pred_fallthru
      _
    %p932 = scmp.le.s32.totalorder 2, %s9
    // Predicated region
    $region49: #{vae_forward.30} parent=5 // pred_check
      %p933 = pneg %p932
    $region50: #{vae_forward.30} parent=5 // pred_check_branch
      %935 = sbr.rel (%p933) target = $region52
    $region51: #{vae_forward.30} parent=5 // pred_region
      %s936 = ssub.s32 %s9, 2
    $region52: #{vae_forward.30} parent=5 // pred_fallthru
      _
  $region6: #{vae_forward.30} parent=0 // loop_footer
    %s13 = sadd.s32 1, %s9
  $region7: #{vae_forward.30} parent=0 // loop_footer_branch
    %8 = sbr.rel target = $region3
  $region8: #{vae_forward.30} parent=0 // loop_exit
    _

// kernel: vae_forward.31
$region0: #{vae_forward.31}
  #allocation0 [shape = 'u32[]', space=smem, size = 0x4, offset = 0x4, fixed_abs, tag = 'smem constant byte address 0x4 - core index']
  #allocation1 [shape = 'u32[72,128]{1,0:T(1,128)}', space=vmem, size = 0x9000, scoped, tag = 'internal scratch']
  %s0 = inlined_call_operand.vmem [shape: f32[2,32], index: 0, kind: input, shape index: {}]
  %s1 = inlined_call_operand.vmem [shape: f32[2,32], index: 1, kind: input, shape index: {}]
  %s2 = inlined_call_operand.vmem [shape: f32[2,32], index: 2, kind: input, shape index: {}]
  %s3 = inlined_call_operand.vmem [shape: bf16[32,4096], index: 3, kind: input, shape index: {}]
  %s4 = inlined_call_operand.vmem [shape: f32[1,4096], index: 4, kind: input, shape index: {}]
  %s5 = inlined_call_operand.vmem [shape: f32[2,4096], index: 5, kind: output, shape index: {}]
  %s6 = sld [smem:[#allocation0]]
  $region76: #{vae_forward.31} parent=0
    _
  %s8 = ssub.s32 1, %s6
  %s9 = scalar_select 0, %s8, %s6
  $region1: #{vae_forward.31} parent=0
    #allocation2 [shape = 'u8[65536]{0}', space=vmem, size = 0x10000, scoped, tag = 'input window, operand 3']
    loop: start=0, step=1, limit=10
    $region2: #{vae_forward.31} parent=1 // loop_pre_header
      _
    $region3: #{vae_forward.31} parent=1 // loop_header
      %s11 = sphi 0, %s15
      %p12 = scmp.ge.s32.totalorder %s11, 10
      %s19 = sphi 0, %s19
      %s21 = sphi 0, %s19
      %s22 = sphi 0, %s21
      %s36 = sphi 0, %s22
      %s40 = sphi 0, %s40
      %s42 = sphi 0, %s40
      %s43 = sphi 0, %s42
      %s57 = sphi 0, %s43
      %s61 = sphi 0, %s61
      %s63 = sphi 0, %s61
      %s64 = sphi 0, %s63
      %s78 = sphi 0, %s64
      %s84 = sphi 0, %s86
      %s87 = sphi 0, %s84
      %s88 = sphi 0, %s87
      %s104 = sphi 0, %s88
      %s110 = sphi 0, %s112
      %s113 = sphi 0, %s110
      %s114 = sphi 0, %s113
      %s130 = sphi 0, %s114
      %s136 = sphi 0, %s138
      %s139 = sphi 0, %s136
      %s140 = sphi 0, %s139
      %s156 = sphi 0, %s140
    $region4: #{vae_forward.31} parent=1 // loop_header_branch
      %14 = sbr.rel (%p12) target = $region8
    $region5: #{vae_forward.31} parent=1 // loop_body
      %s16 = ssub.s32 %s11, 1
      %s17 = ssub.s32 %s11, 2
      %s18 = sadd.s32 %s11, 1
      %s20 = sadd.s32 %s19, 1
      %p23 = scmp.eq.s32.totalorder %s11, 7
      %p24 = scmp.ne.s32.totalorder %s19, %s21
      %p25 = scmp.eq.s32.totalorder %s11, 0
      %p26 = por %p24, %p25
      %p27 = scmp.ne.s32.totalorder %s19, %s21
      %p28 = scmp.eq.s32.totalorder %s16, 7
      %p29 = por %p27, %p28
      %p30 = scmp.ne.s32.totalorder %s21, %s22
      %p31 = scmp.eq.s32.totalorder %s16, 0
      %p32 = por %p30, %p31
      %p33 = scmp.ne.s32.totalorder %s21, %s22
      %p34 = scmp.eq.s32.totalorder %s17, 7
      %p35 = por %p33, %p34
      %p37 = scmp.ne.s32.totalorder %s22, %s36
      %p38 = scmp.eq.s32.totalorder %s17, 0
      %p39 = por %p37, %p38
      %s41 = sadd.s32 %s40, 1
      %p44 = scmp.eq.s32.totalorder %s11, 7
      %p45 = scmp.ne.s32.totalorder %s40, %s42
      %p46 = scmp.eq.s32.totalorder %s11, 0
      %p47 = por %p45, %p46
      %p48 = scmp.ne.s32.totalorder %s40, %s42
      %p49 = scmp.eq.s32.totalorder %s16, 7
      %p50 = por %p48, %p49
      %p51 = scmp.ne.s32.totalorder %s42, %s43
      %p52 = scmp.eq.s32.totalorder %s16, 0
      %p53 = por %p51, %p52
      %p54 = scmp.ne.s32.totalorder %s42, %s43
      %p55 = scmp.eq.s32.totalorder %s17, 7
      %p56 = por %p54, %p55
      %p58 = scmp.ne.s32.totalorder %s43, %s57
      %p59 = scmp.eq.s32.totalorder %s17, 0
      %p60 = por %p58, %p59
      %s62 = sadd.s32 %s61, 1
      %p65 = scmp.eq.s32.totalorder %s11, 7
      %p66 = scmp.ne.s32.totalorder %s61, %s63
      %p67 = scmp.eq.s32.totalorder %s11, 0
      %p68 = por %p66, %p67
      %p69 = scmp.ne.s32.totalorder %s61, %s63
      %p70 = scmp.eq.s32.totalorder %s16, 7
      %p71 = por %p69, %p70
      %p72 = scmp.ne.s32.totalorder %s63, %s64
      %p73 = scmp.eq.s32.totalorder %s16, 0
      %p74 = por %p72, %p73
      %p75 = scmp.ne.s32.totalorder %s63, %s64
      %p76 = scmp.eq.s32.totalorder %s17, 7
      %p77 = por %p75, %p76
      %p79 = scmp.ne.s32.totalorder %s64, %s78
      %p80 = scmp.eq.s32.totalorder %s17, 0
      %p81 = por %p79, %p80
      %s82 = ssub.s32 %s11, %s18
      %p83 = scmp.eq.s32.totalorder %s82, 0
      %s85 = sadd.s32 %s84, 1
      %s86 = scalar_select %p83, %s84, %s85
      %p89 = pneg %p83
      %p90 = scmp.eq.s32.totalorder %s11, 7
      %p91 = por %p89, %p90
      %p92 = scmp.ne.s32.totalorder %s84, %s87
      %p93 = scmp.eq.s32.totalorder %s11, 0
      %p94 = por %p92, %p93
      %p95 = scmp.ne.s32.totalorder %s84, %s87
      %p96 = scmp.eq.s32.totalorder %s16, 7
      %p97 = por %p95, %p96
      %p98 = scmp.ne.s32.totalorder %s87, %s88
      %p99 = scmp.eq.s32.totalorder %s16, 0
      %p100 = por %p98, %p99
      %p101 = scmp.ne.s32.totalorder %s87, %s88
      %p102 = scmp.eq.s32.totalorder %s17, 7
      %p103 = por %p101, %p102
      %p105 = scmp.ne.s32.totalorder %s88, %s104
      %p106 = scmp.eq.s32.totalorder %s17, 0
      %p107 = por %p105, %p106
      %s108 = ssub.s32 %s11, %s18
      %p109 = scmp.eq.s32.totalorder %s108, 0
      %s111 = sadd.s32 %s110, 1
      %s112 = scalar_select %p109, %s110, %s111
      %p115 = pneg %p109
      %p116 = scmp.eq.s32.totalorder %s11, 7
      %p117 = por %p115, %p116
      %p118 = scmp.ne.s32.totalorder %s110, %s113
      %p119 = scmp.eq.s32.totalorder %s11, 0
      %p120 = por %p118, %p119
      %p121 = scmp.ne.s32.totalorder %s110, %s113
      %p122 = scmp.eq.s32.totalorder %s16, 7
      %p123 = por %p121, %p122
      %p124 = scmp.ne.s32.totalorder %s113, %s114
      %p125 = scmp.eq.s32.totalorder %s16, 0
      %p126 = por %p124, %p125
      %p127 = scmp.ne.s32.totalorder %s113, %s114
      %p128 = scmp.eq.s32.totalorder %s17, 7
      %p129 = por %p127, %p128
      %p131 = scmp.ne.s32.totalorder %s114, %s130
      %p132 = scmp.eq.s32.totalorder %s17, 0
      %p133 = por %p131, %p132
      %s134 = ssub.s32 %s11, %s18
      %p135 = scmp.eq.s32.totalorder %s134, 0
      %s137 = sadd.s32 %s136, 1
      %s138 = scalar_select %p135, %s136, %s137
      %p141 = pneg %p135
      %p142 = scmp.eq.s32.totalorder %s11, 7
      %p143 = por %p141, %p142
      %p144 = scmp.ne.s32.totalorder %s136, %s139
      %p145 = scmp.eq.s32.totalorder %s11, 0
      %p146 = por %p144, %p145
      %p147 = scmp.ne.s32.totalorder %s136, %s139
      %p148 = scmp.eq.s32.totalorder %s16, 7
      %p149 = por %p147, %p148
      %p150 = scmp.ne.s32.totalorder %s139, %s140
      %p151 = scmp.eq.s32.totalorder %s16, 0
      %p152 = por %p150, %p151
      %p153 = scmp.ne.s32.totalorder %s139, %s140
      %p154 = scmp.eq.s32.totalorder %s17, 7
      %p155 = por %p153, %p154
      %p157 = scmp.ne.s32.totalorder %s140, %s156
      %p158 = scmp.eq.s32.totalorder %s17, 0
      %p159 = por %p157, %p158
      %p160 = scmp.le.s32.totalorder 1, %s11
      %p161 = scmp.lt.s32.totalorder %s11, 9
      %p162 = pnand %p160, %p161
      %p163 = pneg %p162
      // Predicated region
      $region9: #{vae_forward.31} parent=5 // pred_check
        _
      $region10: #{vae_forward.31} parent=5 // pred_check_branch
        %165 = sbr.rel (%p162) target = $region12
      $region11: #{vae_forward.31} parent=5 // pred_region
        %s166 = ssub.s32 %s11, 1
        // Predicated region
        $region13: #{vae_forward.31} parent=11 // pred_check
          %p167 = pneg %p32
        $region14: #{vae_forward.31} parent=11 // pred_check_branch
          %169 = sbr.rel (%p167) target = $region16
        $region15: #{vae_forward.31} parent=11 // pred_region
          _
        $region16: #{vae_forward.31} parent=11 // pred_fallthru
          _
        // Predicated region
        $region17: #{vae_forward.31} parent=11 // pred_check
          %p170 = pneg %p53
        $region18: #{vae_forward.31} parent=11 // pred_check_branch
          %172 = sbr.rel (%p170) target = $region20
        $region19: #{vae_forward.31} parent=11 // pred_region
          _
        $region20: #{vae_forward.31} parent=11 // pred_fallthru
          _
        // Predicated region
        $region21: #{vae_forward.31} parent=11 // pred_check
          %p173 = pneg %p74
        $region22: #{vae_forward.31} parent=11 // pred_check_branch
          %175 = sbr.rel (%p173) target = $region24
        $region23: #{vae_forward.31} parent=11 // pred_region
          _
        $region24: #{vae_forward.31} parent=11 // pred_fallthru
          _
      $region12: #{vae_forward.31} parent=5 // pred_fallthru
        _
      %p176 = scmp.lt.s32.totalorder %s11, 8
      // Predicated region
      $region25: #{vae_forward.31} parent=5 // pred_check
        %p177 = pneg %p176
      $region26: #{vae_forward.31} parent=5 // pred_check_branch
        %179 = sbr.rel (%p177) target = $region28
      $region27: #{vae_forward.31} parent=5 // pred_region
        // Predicated region
        $region29: #{vae_forward.31} parent=27 // pred_check
          %p180 = pneg %p94
        $region30: #{vae_forward.31} parent=27 // pred_check_branch
          %182 = sbr.rel (%p180) target = $region32
        $region31: #{vae_forward.31} parent=27 // pred_region
          %s183 = sand.u32 %s84, 1
          %s184 = sand.u32 %s84, 1
          %s185 = smul.addr %s184, 64
          %s186 = scalar_lea.vmem [#allocation2], %s185
          %s187 = smul.u32 4, %s11
          %s188 = smul.addr %s187, 4
          %s189 = scalar_lea.vmem %s3, %s188
          // Predicated region
          $region33: #{vae_forward.31} parent=31 // pred_check
            _
          $region34: #{vae_forward.31} parent=31 // pred_check_branch
            %191 = sbr.rel (0) target = $region36
          $region35: #{vae_forward.31} parent=31 // pred_region
            // Predicated region
            $region37: #{vae_forward.31} parent=35 // pred_check
              _
            $region38: #{vae_forward.31} parent=35 // pred_check_branch
              %193 = sbr.rel (0) target = $region40
            $region39: #{vae_forward.31} parent=35 // pred_region
              loop: start=0, step=1, limit=1
              $region41: #{vae_forward.31} parent=39 // loop_pre_header
                _
              $region42: #{vae_forward.31} parent=39 // loop_header
                %s195 = sphi 0, %s199
                %p196 = scmp.ge.s32.totalorder %s195, 1
                %s200 = sphi %s189, %s189
                %s201 = sphi %s186, %s186
              $region43: #{vae_forward.31} parent=39 // loop_header_branch
                %198 = sbr.rel (%p196) target = $region47
              $region44: #{vae_forward.31} parent=39 // loop_body
                %v202 = vld [vmem:[%s200] sm:$0xff]
                %203 = vst [vmem:[%s201] sm:$0xff] %v202
                %v204 = vld [vmem:[%s200 + $0x8] sm:$0xff]
                %205 = vst [vmem:[%s201 + $0x8] sm:$0xff] %v204
                %v206 = vld [vmem:[%s200 + $0x80] sm:$0xff]
                %207 = vst [vmem:[%s201 + $0x10] sm:$0xff] %v206
                %v208 = vld [vmem:[%s200 + $0x88] sm:$0xff]
                %209 = vst [vmem:[%s201 + $0x18] sm:$0xff] %v208
                %v210 = vld [vmem:[%s200 + $0x100] sm:$0xff]
                %211 = vst [vmem:[%s201 + $0x20] sm:$0xff] %v210
                %v212 = vld [vmem:[%s200 + $0x108] sm:$0xff]
                %213 = vst [vmem:[%s201 + $0x28] sm:$0xff] %v212
                %v214 = vld [vmem:[%s200 + $0x180] sm:$0xff]
                %215 = vst [vmem:[%s201 + $0x30] sm:$0xff] %v214
                %v216 = vld [vmem:[%s200 + $0x188] sm:$0xff]
                %217 = vst [vmem:[%s201 + $0x38] sm:$0xff] %v216
              $region45: #{vae_forward.31} parent=39 // loop_footer
                %s199 = sadd.s32 1, %s195
              $region46: #{vae_forward.31} parent=39 // loop_footer_branch
                %194 = sbr.rel target = $region42
              $region47: #{vae_forward.31} parent=39 // loop_exit
                _
            $region40: #{vae_forward.31} parent=35 // pred_fallthru
              _
            // Predicated region
            $region48: #{vae_forward.31} parent=35 // pred_check
              _
            $region49: #{vae_forward.31} parent=35 // pred_check_branch
              %219 = sbr.rel target = $region51
            $region50: #{vae_forward.31} parent=35 // pred_region
              _
            $region51: #{vae_forward.31} parent=35 // pred_fallthru
              _
          $region36: #{vae_forward.31} parent=31 // pred_fallthru
            _
          %220 = vnop
        $region32: #{vae_forward.31} parent=27 // pred_fallthru
          _
        // Predicated region
        $region52: #{vae_forward.31} parent=27 // pred_check
          %p221 = pneg %p120
        $region53: #{vae_forward.31} parent=27 // pred_check_branch
          %223 = sbr.rel (%p221) target = $region55
        $region54: #{vae_forward.31} parent=27 // pred_region
          %s224 = smul.u32 4, %s11
          %p225 = scmp.lt.s32.totalorder %s224, 31
          %s226 = scalar_select %p225, %s224, 31
          %s227 = scalar_lea.vmem %s4, %s226
          %s228 = smul.u32 4, %s11
        $region55: #{vae_forward.31} parent=27 // pred_fallthru
          _
      $region28: #{vae_forward.31} parent=5 // pred_fallthru
        _
      %p229 = scmp.le.s32.totalorder 1, %s11
      %p230 = scmp.lt.s32.totalorder %s11, 9
      %p231 = pnand %p229, %p230
      %p232 = pneg %p231
      // Predicated region
      $region56: #{vae_forward.31} parent=5 // pred_check
        _
      $region57: #{vae_forward.31} parent=5 // pred_check_branch
        %234 = sbr.rel (%p231) target = $region59
      $region58: #{vae_forward.31} parent=5 // pred_region
        %s235 = ssub.s32 %s11, 1
        %s236 = sand.u32 %s87, 1
        %s237 = sand.u32 %s87, 1
        %s238 = smul.addr %s237, 64
        %s239 = scalar_lea.vmem [#allocation2], %s238
        // Predicated region
        $region60: #{vae_forward.31} parent=58 // pred_check
          %p240 = pneg %p100
        $region61: #{vae_forward.31} parent=58 // pred_check_branch
          %242 = sbr.rel (%p240) target = $region63
        $region62: #{vae_forward.31} parent=58 // pred_region
          _
        $region63: #{vae_forward.31} parent=58 // pred_fallthru
          _
        %p243 = pneg %p32
        %p244 = pneg %p29
        %p245 = pneg %p53
        %p246 = pneg %p50
        %p247 = pneg %p74
        %p248 = pneg %p71
        %s249 = sand.u32 %s87, 1
        %s250 = sand.u32 %s87, 1
        %s251 = smul.addr %s250, 64
        %s252 = scalar_lea.vmem [#allocation2], %s251
        %p253 = pneg %p100
        %p254 = pneg %p97
        %s255 = smul.u32 4, %s16
        %p256 = scmp.lt.s32.totalorder %s255, 31
        %s257 = scalar_select %p256, %s255, 31
        %s258 = scalar_lea.vmem %s4, %s257
        %p259 = pneg %p126
        %p260 = pneg %p123
        %p261 = pneg %p152
        %p262 = pneg %p149
        %s263 = smul.u32 4, %s16
        %p264 = scmp.lt.s32.totalorder %s263, 31
        %s265 = scalar_select %p264, %s263, 31
        %s266 = smul.addr %s265, 2
        %s267 = scalar_lea.vmem %s5, %s266
        %s268 = smul.u32 4, %s16
        %s269 = smul.u32 4, %s16
        %p270 = scmp.lt.s32.totalorder %s269, 31
        %s271 = scalar_select %p270, %s269, 31
        %s272 = scalar_lea.vmem %s4, %s271
        %s273 = smul.u32 4, %s16
        %s274 = smul.u32 4, %s16
        %p275 = scmp.lt.s32.totalorder %s274, 31
        %s276 = scalar_select %p275, %s274, 31
        %s277 = smul.addr %s276, 2
        %s278 = scalar_lea.vmem %s5, %s277
        %s279 = smul.u32 4, %s16
        %v281 = vld [vmem:[%s0] sm:$0x3]
        %v282 = vld [vmem:[%s2] sm:$0x3]
        %v283 = vld [vmem:[%s1] sm:$0x3]
        %v284 = vmul.f32 %v283, 0.5
        %v285 = vmul.f32 %v284, 1.442695
        %v286 = vpow.pop %v285
        %v287 = vmul.f32 %v282, %v286
        %v288 = vadd.f32 %v281, %v287
        %v289 = vpack.c.bf16 %v288, %v288
        %v290 = vld [vmem:[%s239] sm:$0xff]
        %v291 = vld [vmem:[%s239 + $0x8] sm:$0xff]
        %v292 = vld [vmem:[%s239 + $0x10] sm:$0xff]
        %v293 = vld [vmem:[%s239 + $0x18] sm:$0xff]
        %v294 = vld [vmem:[%s239 + $0x20] sm:$0xff]
        %v295 = vld [vmem:[%s239 + $0x28] sm:$0xff]
        %v296 = vld [vmem:[%s239 + $0x30] sm:$0xff]
        %v297 = vld [vmem:[%s239 + $0x38] sm:$0xff]
        %v298 = vld [vmem:[%s272] sm:$0xf]
        %v300 = vperm.slane %v298, 0
        %v301 = vperm.slane %v298, 1
        %v302 = vperm.slane %v298, 2
        %v303 = vperm.slane %v298, 3
        %v316 = vunpack.c.l.b16 %v290
        %v317 = vunpack.c.h.b16 %v290
        %v318 = vunpack.c.l.b16 %v291
        %v319 = vunpack.c.h.b16 %v291
        %v320 = vunpack.c.l.b16 %v292
        %v321 = vunpack.c.h.b16 %v292
        %v322 = vunpack.c.l.b16 %v293
        %v323 = vunpack.c.h.b16 %v293
        %v324 = vunpack.c.l.b16 %v294
        %v325 = vunpack.c.h.b16 %v294
        %v326 = vunpack.c.l.b16 %v295
        %v327 = vunpack.c.h.b16 %v295
        %v328 = vunpack.c.l.b16 %v296
        %v329 = vunpack.c.h.b16 %v296
        %v330 = vunpack.c.l.b16 %v297
        %v331 = vunpack.c.h.b16 %v297
        %v332 = vpack.c.b16 %v320, %v316
        %v333 = vpack.c.b16 %v321, %v317
        %v334 = vpack.c.b16 %v322, %v318
        %v335 = vpack.c.b16 %v323, %v319
        %v336 = vpack.c.b16 %v328, %v324
        %v337 = vpack.c.b16 %v329, %v325
        %v338 = vpack.c.b16 %v330, %v326
        %v339 = vpack.c.b16 %v331, %v327
        %vm348 = vcmask 261120
        %v350 = vsel %vm348, %v289, 0
        %352 = vmatpush.bf16.msra.mxu0 0
        %353 = vmatpush.bf16.msra.mxu0 0
        %354 = vmatpush.bf16.msra.mxu0 0
        %355 = vmatpush.bf16.msra.mxu0 0
        %356 = vmatpush.bf16.msra.mxu0 0
        %357 = vmatpush.bf16.msra.mxu0 0
        %358 = vmatpush.bf16.msra.mxu0 %v336
        %359 = vmatpush.bf16.msra.mxu0 %v332
        %360 = vmatmul.bf16.gmra.mxu0 %v350
        %v361 = vpop.f32.mrf.mxu0
        %v362 = vadd.f32 %v300, %v361
        %v363 = vpop.f32.mrf.mxu0
        %364 = vdwg.mxu0
        %365 = vmatpush.bf16.msra.mxu0 0
        %366 = vmatpush.bf16.msra.mxu0 0
        %367 = vmatpush.bf16.msra.mxu0 0
        %368 = vmatpush.bf16.msra.mxu0 0
        %369 = vmatpush.bf16.msra.mxu0 0
        %370 = vmatpush.bf16.msra.mxu0 0
        %371 = vmatpush.bf16.msra.mxu0 %v337
        %372 = vmatpush.bf16.msra.mxu0 %v333
        %373 = vmatmul.bf16.gmra.mxu0 %v350
        %v374 = vpop.f32.mrf.mxu0
        %v375 = vadd.f32 %v301, %v374
        %v376 = vpop.f32.mrf.mxu0
        %377 = vdwg.mxu0
        %378 = vmatpush.bf16.msra.mxu0 0
        %379 = vmatpush.bf16.msra.mxu0 0
        %380 = vmatpush.bf16.msra.mxu0 0
        %381 = vmatpush.bf16.msra.mxu0 0
        %382 = vmatpush.bf16.msra.mxu0 0
        %383 = vmatpush.bf16.msra.mxu0 0
        %384 = vmatpush.bf16.msra.mxu0 %v338
        %385 = vmatpush.bf16.msra.mxu0 %v334
        %386 = vmatmul.bf16.gmra.mxu0 %v350
        %v387 = vpop.f32.mrf.mxu0
        %v388 = vadd.f32 %v302, %v387
        %v389 = vpop.f32.mrf.mxu0
        %390 = vdwg.mxu0
        %391 = vmatpush.bf16.msra.mxu0 0
        %392 = vmatpush.bf16.msra.mxu0 0
        %393 = vmatpush.bf16.msra.mxu0 0
        %394 = vmatpush.bf16.msra.mxu0 0
        %395 = vmatpush.bf16.msra.mxu0 0
        %396 = vmatpush.bf16.msra.mxu0 0
        %397 = vmatpush.bf16.msra.mxu0 %v339
        %398 = vmatpush.bf16.msra.mxu0 %v335
        %399 = vmatmul.bf16.gmra.mxu0 %v350
        %v400 = vpop.f32.mrf.mxu0
        %v401 = vadd.f32 %v303, %v400
        %v402 = vpop.f32.mrf.mxu0
        %403 = vdwg.mxu0
        %vm404 = vcmp.ge.f32.partialorder %v362, 0.0
        %vm405 = vcmp.ge.f32.partialorder %v375, 0.0
        %vm406 = vcmp.ge.f32.partialorder %v388, 0.0
        %vm407 = vcmp.ge.f32.partialorder %v401, 0.0
        %v408 = vmul.f32 %v362, 0.2
        %v409 = vmul.f32 %v375, 0.2
        %v410 = vmul.f32 %v388, 0.2
        %v411 = vmul.f32 %v401, 0.2
        %v412 = vsel %vm404, %v362, %v408
        %v413 = vsel %vm405, %v375, %v409
        %v414 = vsel %vm406, %v388, %v410
        %v415 = vsel %vm407, %v401, %v411
        %v420 = vrot.slane %v413, 6
        %v421 = vrot.slane %v414, 4
        %v422 = vrot.slane %v415, 2
        %vm423 = vcmask 1041408
        %v424 = vsel %vm423, %v412, %v420
        %vm425 = vcmask 1045508
        %v426 = vsel %vm425, %v421, %v422
        %vm427 = vcmask 1043456
        %v428 = vsel %vm427, %v424, %v426
        %430 = vst [vmem:[%s278] sm:$0xff] %v428
        %s431 = smul.u32 4, %s16
        %p432 = scmp.lt.s32.totalorder %s431, 31
        %s433 = scalar_select %p432, %s431, 31
        %s434 = smul.addr %s433, 2
        %s435 = scalar_lea.vmem %s5, %s434
        // Predicated region
        $region64: #{vae_forward.31} parent=58 // pred_check
          %p436 = pneg %p149
        $region65: #{vae_forward.31} parent=58 // pred_check_branch
          %438 = sbr.rel (%p436) target = $region67
        $region66: #{vae_forward.31} parent=58 // pred_region
          %s439 = smul.u32 4, %s16
        $region67: #{vae_forward.31} parent=58 // pred_fallthru
          _
      $region59: #{vae_forward.31} parent=5 // pred_fallthru
        _
      %p440 = scmp.le.s32.totalorder 2, %s11
      // Predicated region
      $region68: #{vae_forward.31} parent=5 // pred_check
        %p441 = pneg %p440
      $region69: #{vae_forward.31} parent=5 // pred_check_branch
        %443 = sbr.rel (%p441) target = $region71
      $region70: #{vae_forward.31} parent=5 // pred_region
        %s444 = ssub.s32 %s11, 2
        // Predicated region
        $region72: #{vae_forward.31} parent=70 // pred_check
          %p445 = pneg %p155
        $region73: #{vae_forward.31} parent=70 // pred_check_branch
          %447 = sbr.rel (%p445) target = $region75
        $region74: #{vae_forward.31} parent=70 // pred_region
          %s448 = smul.u32 4, %s17
          %p449 = scmp.lt.s32.totalorder %s448, 31
          %s450 = scalar_select %p449, %s448, 31
          %s451 = smul.addr %s450, 2
          %s452 = scalar_lea.vmem %s5, %s451
        $region75: #{vae_forward.31} parent=70 // pred_fallthru
          _
      $region71: #{vae_forward.31} parent=5 // pred_fallthru
        _
    $region6: #{vae_forward.31} parent=1 // loop_footer
      %s15 = sadd.s32 1, %s11
    $region7: #{vae_forward.31} parent=1 // loop_footer_branch
      %10 = sbr.rel target = $region3
    $region8: #{vae_forward.31} parent=1 // loop_exit
      _

// kernel: vae_forward.36
$region0: #{vae_forward.36}
  #allocation0 [shape = 'u32[]', space=smem, size = 0x4, offset = 0x4, fixed_abs, tag = 'smem constant byte address 0x4 - core index']
  #allocation1 [shape = 'u32[72,128]{1,0:T(1,128)}', space=vmem, size = 0x9000, scoped, tag = 'internal scratch']
  %s0 = inlined_call_operand.vmem [shape: f32[32,128], index: 0, kind: input, shape index: {}]
  %s1 = inlined_call_operand.vmem [shape: f32[2,128], index: 1, kind: output, shape index: {}]
  %s2 = sld [smem:[#allocation0]]
  $region18: #{vae_forward.36} parent=0
    _
  %s4 = ssub.s32 1, %s2
  %s5 = scalar_select 0, %s4, %s2
  // Predicated region
  $region2: #{vae_forward.36} parent=0 // pred_check
    _
  $region3: #{vae_forward.36} parent=0 // pred_check_branch
    %7 = sbr.rel (0) target = $region5
  $region4: #{vae_forward.36} parent=0 // pred_region
    _
  $region5: #{vae_forward.36} parent=0 // pred_fallthru
    _
  %p8 = scmp.eq.s32.totalorder 0, 0
  // Predicated region
  $region6: #{vae_forward.36} parent=0 // pred_check
    %p9 = pneg %p8
  $region7: #{vae_forward.36} parent=0 // pred_check_branch
    %11 = sbr.rel (%p9) target = $region9
  $region8: #{vae_forward.36} parent=0 // pred_region
    %12 = vst [vmem:[%s1] sm:$0x3] 0.0
  $region9: #{vae_forward.36} parent=0 // pred_fallthru
    _
  %v13 = vld [vmem:[%s0] sm:$0xff]
  %v14 = vld [vmem:[%s0 + $0x8] sm:$0xff]
  %v15 = vld [vmem:[%s0 + $0x10] sm:$0xff]
  %v16 = vld [vmem:[%s0 + $0x18] sm:$0xff]
  %v17 = vadd.f32 %v13, %v14
  %v18 = vadd.f32 %v17, %v15
  %v19 = vadd.f32 %v18, %v16
  %v20 = vrot.slane %v19, 4
  %v21 = vadd.f32 %v19, %v20
  %v22 = vrot.slane %v21, 2
  %v23 = vadd.f32 %v21, %v22
  %v24 = vrot.slane %v23, 1
  %v25 = vadd.f32 %v23, %v24
  %v26 = vmul.f32 %v13, %v13
  %v27 = vmul.f32 %v14, %v14
  %v28 = vmul.f32 %v15, %v15
  %v29 = vmul.f32 %v16, %v16
  %v30 = vadd.f32 %v26, %v27
  %v31 = vadd.f32 %v30, %v28
  %v32 = vadd.f32 %v31, %v29
  %v33 = vrot.slane %v32, 4
  %v34 = vadd.f32 %v32, %v33
  %v35 = vrot.slane %v34, 2
  %v36 = vadd.f32 %v34, %v35
  %v37 = vrot.slane %v36, 1
  %v38 = vadd.f32 %v36, %v37
  %vm39 = vcmask 1040384
  %v40 = vsel %vm39, %v25, %v38
  %v41 = vld [vmem:[%s1] sm:$0x3]
  %v42 = vadd.f32 %v41, %v40
  %43 = vst [vmem:[%s1] sm:$0x3] %v42
  // Predicated region
  $region10: #{vae_forward.36} parent=0 // pred_check
    _
  $region11: #{vae_forward.36} parent=0 // pred_check_branch
    %45 = sbr.rel (0) target = $region13
  $region12: #{vae_forward.36} parent=0 // pred_region
    _
  $region13: #{vae_forward.36} parent=0 // pred_fallthru
    _
  // Predicated region
  $region14: #{vae_forward.36} parent=0 // pred_check
    _
  $region15: #{vae_forward.36} parent=0 // pred_check_branch
    %47 = sbr.rel (0) target = $region17
  $region16: #{vae_forward.36} parent=0 // pred_region
    _
  $region17: #{vae_forward.36} parent=0 // pred_fallthru
    _

// kernel: vae_forward.40
$region0: #{vae_forward.40}
  #allocation0 [shape = 'u32[]', space=smem, size = 0x4, offset = 0x4, fixed_abs, tag = 'smem constant byte address 0x4 - core index']
  #allocation1 [shape = 'u32[72,128]{1,0:T(1,128)}', space=vmem, size = 0x9000, scoped, tag = 'internal scratch']
  %s0 = inlined_call_operand.vmem [shape: f32[32,128], index: 0, kind: input, shape index: {}]
  %s1 = inlined_call_operand.vmem [shape: f32[2,128], index: 1, kind: input, shape index: {}]
  %s2 = inlined_call_operand.vmem [shape: f32[32,128], index: 2, kind: output, shape index: {}]
  %s3 = sld [smem:[#allocation0]]
  $region18: #{vae_forward.40} parent=0
    _
  %s5 = ssub.s32 1, %s3
  %s6 = scalar_select 0, %s5, %s3
  // Predicated region
  $region2: #{vae_forward.40} parent=0 // pred_check
    _
  $region3: #{vae_forward.40} parent=0 // pred_check_branch
    %8 = sbr.rel (0) target = $region5
  $region4: #{vae_forward.40} parent=0 // pred_region
    _
  $region5: #{vae_forward.40} parent=0 // pred_fallthru
    _
  // Predicated region
  $region6: #{vae_forward.40} parent=0 // pred_check
    _
  $region7: #{vae_forward.40} parent=0 // pred_check_branch
    %10 = sbr.rel (0) target = $region9
  $region8: #{vae_forward.40} parent=0 // pred_region
    _
  $region9: #{vae_forward.40} parent=0 // pred_fallthru
    _
  %v11 = vld [vmem:[%s0] sm:$0xff]
  %v12 = vld [vmem:[%s0 + $0x8] sm:$0xff]
  %v13 = vld [vmem:[%s0 + $0x10] sm:$0xff]
  %v14 = vld [vmem:[%s0 + $0x18] sm:$0xff]
  %v15 = vld [vmem:[%s1] sm:$0x1]
  %v16 = vperm.slane %v15, 0
  %v17 = vsub.f32 %v11, %v16
  %v18 = vsub.f32 %v12, %v16
  %v19 = vsub.f32 %v13, %v16
  %v20 = vsub.f32 %v14, %v16
  %v21 = vld [vmem:[%s1 + $0x1] sm:$0x1]
  %v22 = vperm.slane %v21, 0
  %v23 = vmul.f32 %v17, %v22
  %v24 = vmul.f32 %v18, %v22
  %v25 = vmul.f32 %v19, %v22
  %v26 = vmul.f32 %v20, %v22
  %vm27 = vcmp.ge.f32.partialorder %v23, 0.0
  %vm28 = vcmp.ge.f32.partialorder %v24, 0.0
  %vm29 = vcmp.ge.f32.partialorder %v25, 0.0
  %vm30 = vcmp.ge.f32.partialorder %v26, 0.0
  %v31 = vmul.f32 %v23, 0.2
  %v32 = vmul.f32 %v24, 0.2
  %v33 = vmul.f32 %v25, 0.2
  %v34 = vmul.f32 %v26, 0.2
  %v35 = vsel %vm27, %v23, %v31
  %v36 = vsel %vm28, %v24, %v32
  %v37 = vsel %vm29, %v25, %v33
  %v38 = vsel %vm30, %v26, %v34
  %39 = vst [vmem:[%s2] sm:$0xff] %v35
  %40 = vst [vmem:[%s2 + $0x8] sm:$0xff] %v36
  %41 = vst [vmem:[%s2 + $0x10] sm:$0xff] %v37
  %42 = vst [vmem:[%s2 + $0x18] sm:$0xff] %v38
  // Predicated region
  $region10: #{vae_forward.40} parent=0 // pred_check
    _
  $region11: #{vae_forward.40} parent=0 // pred_check_branch
    %44 = sbr.rel (0) target = $region13
  $region12: #{vae_forward.40} parent=0 // pred_region
    _
  $region13: #{vae_forward.40} parent=0 // pred_fallthru
    _
  // Predicated region
  $region14: #{vae_forward.40} parent=0 // pred_check
    _
  $region15: #{vae_forward.40} parent=0 // pred_check_branch
    %46 = sbr.rel (0) target = $region17
  $region16: #{vae_forward.40} parent=0 // pred_region
    _
  $region17: #{vae_forward.40} parent=0 // pred_fallthru
    _

// kernel: vae_forward.32
$region0: #{vae_forward.32}
  #allocation0 [shape = 'u32[]', space=smem, size = 0x4, offset = 0x4, fixed_abs, tag = 'smem constant byte address 0x4 - core index']
  #allocation1 [shape = 'u32[72,128]{1,0:T(1,128)}', space=vmem, size = 0x9000, scoped, tag = 'internal scratch']
  #allocation2 [shape = 'f32[32,128]{1,0:T(8,128)}', space=vmem, size = 0x4000, scoped, tag = 'scratch operand']
  %s0 = inlined_call_operand.vmem [shape: bf16[32,1024], index: 0, kind: input, shape index: {}]
  %s1 = inlined_call_operand.vmem [shape: bf16[1024,128], index: 1, kind: input, shape index: {}]
  %s2 = inlined_call_operand.vmem [shape: f32[32,128], index: 2, kind: output, shape index: {}]
  %s3 = sld [smem:[#allocation0]]
  $region26: #{vae_forward.32} parent=0
    _
  %s5 = ssub.s32 1, %s3
  %s6 = scalar_select 0, %s5, %s3
  // Predicated region
  $region2: #{vae_forward.32} parent=0 // pred_check
    _
  $region3: #{vae_forward.32} parent=0 // pred_check_branch
    %8 = sbr.rel (0) target = $region5
  $region4: #{vae_forward.32} parent=0 // pred_region
    _
  $region5: #{vae_forward.32} parent=0 // pred_fallthru
    _
  // Predicated region
  $region6: #{vae_forward.32} parent=0 // pred_check
    _
  $region7: #{vae_forward.32} parent=0 // pred_check_branch
    %10 = sbr.rel (0) target = $region9
  $region8: #{vae_forward.32} parent=0 // pred_region
    _
  $region9: #{vae_forward.32} parent=0 // pred_fallthru
    _
  %p11 = scmp.eq.s32.totalorder 0, 0
  // Predicated region
  $region10: #{vae_forward.32} parent=0 // pred_check
    %p12 = pneg %p11
  $region11: #{vae_forward.32} parent=0 // pred_check_branch
    %14 = sbr.rel (%p12) target = $region13
  $region12: #{vae_forward.32} parent=0 // pred_region
    %15 = vst [vmem:[#allocation2] sm:$0xff] 0.0
    %16 = vst [vmem:[#allocation2 + $0x8] sm:$0xff] 0.0
    %17 = vst [vmem:[#allocation2 + $0x10] sm:$0xff] 0.0
    %18 = vst [vmem:[#allocation2 + $0x18] sm:$0xff] 0.0
  $region13: #{vae_forward.32} parent=0 // pred_fallthru
    _
  %v19 = vld [vmem:[#allocation2] sm:$0xff]
  %v20 = vld [vmem:[#allocation2 + $0x8] sm:$0xff]
  %v21 = vld [vmem:[#allocation2 + $0x10] sm:$0xff]
  %v22 = vld [vmem:[#allocation2 + $0x18] sm:$0xff]
  %v23 = vld [vmem:[%s0] sm:$0xff]
  %v24 = vld [vmem:[%s0 + $0x8] sm:$0xff]
  %v25 = vld [vmem:[%s0 + $0x10] sm:$0xff]
  %v26 = vld [vmem:[%s0 + $0x18] sm:$0xff]
  %v27 = vld [vmem:[%s0 + $0x20] sm:$0xff]
  %v28 = vld [vmem:[%s0 + $0x28] sm:$0xff]
  %v29 = vld [vmem:[%s0 + $0x30] sm:$0xff]
  %v30 = vld [vmem:[%s0 + $0x38] sm:$0xff]
  %v31 = vld [vmem:[%s0 + $0x40] sm:$0xff]
  %v32 = vld [vmem:[%s0 + $0x48] sm:$0xff]
  %v33 = vld [vmem:[%s0 + $0x50] sm:$0xff]
  %v34 = vld [vmem:[%s0 + $0x58] sm:$0xff]
  %v35 = vld [vmem:[%s0 + $0x60] sm:$0xff]
  %v36 = vld [vmem:[%s0 + $0x68] sm:$0xff]
  %v37 = vld [vmem:[%s0 + $0x70] sm:$0xff]
  %v38 = vld [vmem:[%s0 + $0x78] sm:$0xff]
  %v39 = vld [vmem:[%s1] sm:$0xf]
  %v40 = vld [vmem:[%s1 + $0x4] sm:$0xf]
  %v41 = vld [vmem:[%s1 + $0x8] sm:$0xf]
  %v42 = vld [vmem:[%s1 + $0xc] sm:$0xf]
  %v43 = vld [vmem:[%s1 + $0x10] sm:$0xf]
  %v44 = vld [vmem:[%s1 + $0x14] sm:$0xf]
  %v45 = vld [vmem:[%s1 + $0x18] sm:$0xf]
  %v46 = vld [vmem:[%s1 + $0x1c] sm:$0xf]
  %v47 = vld [vmem:[%s1 + $0x20] sm:$0xf]
  %v48 = vld [vmem:[%s1 + $0x24] sm:$0xf]
  %v49 = vld [vmem:[%s1 + $0x28] sm:$0xf]
  %v50 = vld [vmem:[%s1 + $0x2c] sm:$0xf]
  %v51 = vld [vmem:[%s1 + $0x30] sm:$0xf]
  %v52 = vld [vmem:[%s1 + $0x34] sm:$0xf]
  %v53 = vld [vmem:[%s1 + $0x38] sm:$0xf]
  %v54 = vld [vmem:[%s1 + $0x3c] sm:$0xf]
  %v55 = vld [vmem:[%s1 + $0x40] sm:$0xf]
  %v56 = vld [vmem:[%s1 + $0x44] sm:$0xf]
  %v57 = vld [vmem:[%s1 + $0x48] sm:$0xf]
  %v58 = vld [vmem:[%s1 + $0x4c] sm:$0xf]
  %v59 = vld [vmem:[%s1 + $0x50] sm:$0xf]
  %v60 = vld [vmem:[%s1 + $0x54] sm:$0xf]
  %v61 = vld [vmem:[%s1 + $0x58] sm:$0xf]
  %v62 = vld [vmem:[%s1 + $0x5c] sm:$0xf]
  %v63 = vld [vmem:[%s1 + $0x60] sm:$0xf]
  %v64 = vld [vmem:[%s1 + $0x64] sm:$0xf]
  %v65 = vld [vmem:[%s1 + $0x68] sm:$0xf]
  %v66 = vld [vmem:[%s1 + $0x6c] sm:$0xf]
  %v67 = vld [vmem:[%s1 + $0x70] sm:$0xf]
  %v68 = vld [vmem:[%s1 + $0x74] sm:$0xf]
  %v69 = vld [vmem:[%s1 + $0x78] sm:$0xf]
  %v70 = vld [vmem:[%s1 + $0x7c] sm:$0xf]
  %v71 = vld [vmem:[%s1 + $0x80] sm:$0xf]
  %v72 = vld [vmem:[%s1 + $0x84] sm:$0xf]
  %v73 = vld [vmem:[%s1 + $0x88] sm:$0xf]
  %v74 = vld [vmem:[%s1 + $0x8c] sm:$0xf]
  %v75 = vld [vmem:[%s1 + $0x90] sm:$0xf]
  %v76 = vld [vmem:[%s1 + $0x94] sm:$0xf]
  %v77 = vld [vmem:[%s1 + $0x98] sm:$0xf]
  %v78 = vld [vmem:[%s1 + $0x9c] sm:$0xf]
  %v79 = vld [vmem:[%s1 + $0xa0] sm:$0xf]
  %v80 = vld [vmem:[%s1 + $0xa4] sm:$0xf]
  %v81 = vld [vmem:[%s1 + $0xa8] sm:$0xf]
  %v82 = vld [vmem:[%s1 + $0xac] sm:$0xf]
  %v83 = vld [vmem:[%s1 + $0xb0] sm:$0xf]
  %v84 = vld [vmem:[%s1 + $0xb4] sm:$0xf]
  %v85 = vld [vmem:[%s1 + $0xb8] sm:$0xf]
  %v86 = vld [vmem:[%s1 + $0xbc] sm:$0xf]
  %v87 = vld [vmem:[%s1 + $0xc0] sm:$0xf]
  %v88 = vld [vmem:[%s1 + $0xc4] sm:$0xf]
  %v89 = vld [vmem:[%s1 + $0xc8] sm:$0xf]
  %v90 = vld [vmem:[%s1 + $0xcc] sm:$0xf]
  %v91 = vld [vmem:[%s1 + $0xd0] sm:$0xf]
  %v92 = vld [vmem:[%s1 + $0xd4] sm:$0xf]
  %v93 = vld [vmem:[%s1 + $0xd8] sm:$0xf]
  %v94 = vld [vmem:[%s1 + $0xdc] sm:$0xf]
  %v95 = vld [vmem:[%s1 + $0xe0] sm:$0xf]
  %v96 = vld [vmem:[%s1 + $0xe4] sm:$0xf]
  %v97 = vld [vmem:[%s1 + $0xe8] sm:$0xf]
  %v98 = vld [vmem:[%s1 + $0xec] sm:$0xf]
  %v99 = vld [vmem:[%s1 + $0xf0] sm:$0xf]
  %v100 = vld [vmem:[%s1 + $0xf4] sm:$0xf]
  %v101 = vld [vmem:[%s1 + $0xf8] sm:$0xf]
  %v102 = vld [vmem:[%s1 + $0xfc] sm:$0xf]
  %v103 = vld [vmem:[%s1 + $0x100] sm:$0xf]
  %v104 = vld [vmem:[%s1 + $0x104] sm:$0xf]
  %v105 = vld [vmem:[%s1 + $0x108] sm:$0xf]
  %v106 = vld [vmem:[%s1 + $0x10c] sm:$0xf]
  %v107 = vld [vmem:[%s1 + $0x110] sm:$0xf]
  %v108 = vld [vmem:[%s1 + $0x114] sm:$0xf]
  %v109 = vld [vmem:[%s1 + $0x118] sm:$0xf]
  %v110 = vld [vmem:[%s1 + $0x11c] sm:$0xf]
  %v111 = vld [vmem:[%s1 + $0x120] sm:$0xf]
  %v112 = vld [vmem:[%s1 + $0x124] sm:$0xf]
  %v113 = vld [vmem:[%s1 + $0x128] sm:$0xf]
  %v114 = vld [vmem:[%s1 + $0x12c] sm:$0xf]
  %v115 = vld [vmem:[%s1 + $0x130] sm:$0xf]
  %v116 = vld [vmem:[%s1 + $0x134] sm:$0xf]
  %v117 = vld [vmem:[%s1 + $0x138] sm:$0xf]
  %v118 = vld [vmem:[%s1 + $0x13c] sm:$0xf]
  %v119 = vld [vmem:[%s1 + $0x140] sm:$0xf]
  %v120 = vld [vmem:[%s1 + $0x144] sm:$0xf]
  %v121 = vld [vmem:[%s1 + $0x148] sm:$0xf]
  %v122 = vld [vmem:[%s1 + $0x14c] sm:$0xf]
  %v123 = vld [vmem:[%s1 + $0x150] sm:$0xf]
  %v124 = vld [vmem:[%s1 + $0x154] sm:$0xf]
  %v125 = vld [vmem:[%s1 + $0x158] sm:$0xf]
  %v126 = vld [vmem:[%s1 + $0x15c] sm:$0xf]
  %v127 = vld [vmem:[%s1 + $0x160] sm:$0xf]
  %v128 = vld [vmem:[%s1 + $0x164] sm:$0xf]
  %v129 = vld [vmem:[%s1 + $0x168] sm:$0xf]
  %v130 = vld [vmem:[%s1 + $0x16c] sm:$0xf]
  %v131 = vld [vmem:[%s1 + $0x170] sm:$0xf]
  %v132 = vld [vmem:[%s1 + $0x174] sm:$0xf]
  %v133 = vld [vmem:[%s1 + $0x178] sm:$0xf]
  %v134 = vld [vmem:[%s1 + $0x17c] sm:$0xf]
  %v135 = vld [vmem:[%s1 + $0x180] sm:$0xf]
  %v136 = vld [vmem:[%s1 + $0x184] sm:$0xf]
  %v137 = vld [vmem:[%s1 + $0x188] sm:$0xf]
  %v138 = vld [vmem:[%s1 + $0x18c] sm:$0xf]
  %v139 = vld [vmem:[%s1 + $0x190] sm:$0xf]
  %v140 = vld [vmem:[%s1 + $0x194] sm:$0xf]
  %v141 = vld [vmem:[%s1 + $0x198] sm:$0xf]
  %v142 = vld [vmem:[%s1 + $0x19c] sm:$0xf]
  %v143 = vld [vmem:[%s1 + $0x1a0] sm:$0xf]
  %v144 = vld [vmem:[%s1 + $0x1a4] sm:$0xf]
  %v145 = vld [vmem:[%s1 + $0x1a8] sm:$0xf]
  %v146 = vld [vmem:[%s1 + $0x1ac] sm:$0xf]
  %v147 = vld [vmem:[%s1 + $0x1b0] sm:$0xf]
  %v148 = vld [vmem:[%s1 + $0x1b4] sm:$0xf]
  %v149 = vld [vmem:[%s1 + $0x1b8] sm:$0xf]
  %v150 = vld [vmem:[%s1 + $0x1bc] sm:$0xf]
  %v151 = vld [vmem:[%s1 + $0x1c0] sm:$0xf]
  %v152 = vld [vmem:[%s1 + $0x1c4] sm:$0xf]
  %v153 = vld [vmem:[%s1 + $0x1c8] sm:$0xf]
  %v154 = vld [vmem:[%s1 + $0x1cc] sm:$0xf]
  %v155 = vld [vmem:[%s1 + $0x1d0] sm:$0xf]
  %v156 = vld [vmem:[%s1 + $0x1d4] sm:$0xf]
  %v157 = vld [vmem:[%s1 + $0x1d8] sm:$0xf]
  %v158 = vld [vmem:[%s1 + $0x1dc] sm:$0xf]
  %v159 = vld [vmem:[%s1 + $0x1e0] sm:$0xf]
  %v160 = vld [vmem:[%s1 + $0x1e4] sm:$0xf]
  %v161 = vld [vmem:[%s1 + $0x1e8] sm:$0xf]
  %v162 = vld [vmem:[%s1 + $0x1ec] sm:$0xf]
  %v163 = vld [vmem:[%s1 + $0x1f0] sm:$0xf]
  %v164 = vld [vmem:[%s1 + $0x1f4] sm:$0xf]
  %v165 = vld [vmem:[%s1 + $0x1f8] sm:$0xf]
  %v166 = vld [vmem:[%s1 + $0x1fc] sm:$0xf]
  %v183 = vunpack.c.l.b16 %v23
  %v184 = vunpack.c.h.b16 %v23
  %v185 = vunpack.c.l.b16 %v24
  %v186 = vunpack.c.h.b16 %v24
  %v187 = vunpack.c.l.b16 %v25
  %v188 = vunpack.c.h.b16 %v25
  %v189 = vunpack.c.l.b16 %v26
  %v190 = vunpack.c.h.b16 %v26
  %v191 = vunpack.c.l.b16 %v27
  %v192 = vunpack.c.h.b16 %v27
  %v193 = vunpack.c.l.b16 %v28
  %v194 = vunpack.c.h.b16 %v28
  %v195 = vunpack.c.l.b16 %v29
  %v196 = vunpack.c.h.b16 %v29
  %v197 = vunpack.c.l.b16 %v30
  %v198 = vunpack.c.h.b16 %v30
  %v199 = vunpack.c.l.b16 %v31
  %v200 = vunpack.c.h.b16 %v31
  %v201 = vunpack.c.l.b16 %v32
  %v202 = vunpack.c.h.b16 %v32
  %v203 = vunpack.c.l.b16 %v33
  %v204 = vunpack.c.h.b16 %v33
  %v205 = vunpack.c.l.b16 %v34
  %v206 = vunpack.c.h.b16 %v34
  %v207 = vunpack.c.l.b16 %v35
  %v208 = vunpack.c.h.b16 %v35
  %v209 = vunpack.c.l.b16 %v36
  %v210 = vunpack.c.h.b16 %v36
  %v211 = vunpack.c.l.b16 %v37
  %v212 = vunpack.c.h.b16 %v37
  %v213 = vunpack.c.l.b16 %v38
  %v214 = vunpack.c.h.b16 %v38
  %v215 = vpack.c.b16 %v191, %v183
  %v216 = vpack.c.b16 %v192, %v184
  %v217 = vpack.c.b16 %v193, %v185
  %v218 = vpack.c.b16 %v194, %v186
  %v219 = vpack.c.b16 %v195, %v187
  %v220 = vpack.c.b16 %v196, %v188
  %v221 = vpack.c.b16 %v197, %v189
  %v222 = vpack.c.b16 %v198, %v190
  %v223 = vpack.c.b16 %v207, %v199
  %v224 = vpack.c.b16 %v208, %v200
  %v225 = vpack.c.b16 %v209, %v201
  %v226 = vpack.c.b16 %v210, %v202
  %v227 = vpack.c.b16 %v211, %v203
  %v228 = vpack.c.b16 %v212, %v204
  %v229 = vpack.c.b16 %v213, %v205
  %v230 = vpack.c.b16 %v214, %v206
  %v375 = vunpack.c.l.b16 %v39
  %v376 = vunpack.c.l.b16 %v40
  %v377 = vunpack.c.l.b16 %v41
  %v378 = vunpack.c.l.b16 %v42
  %v379 = vunpack.c.l.b16 %v43
  %v380 = vunpack.c.l.b16 %v44
  %v381 = vunpack.c.l.b16 %v45
  %v382 = vunpack.c.l.b16 %v46
  %v383 = vunpack.c.l.b16 %v47
  %v384 = vunpack.c.l.b16 %v48
  %v385 = vunpack.c.l.b16 %v49
  %v386 = vunpack.c.l.b16 %v50
  %v387 = vunpack.c.l.b16 %v51
  %v388 = vunpack.c.l.b16 %v52
  %v389 = vunpack.c.l.b16 %v53
  %v390 = vunpack.c.l.b16 %v54
  %v391 = vunpack.c.l.b16 %v55
  %v392 = vunpack.c.l.b16 %v56
  %v393 = vunpack.c.l.b16 %v57
  %v394 = vunpack.c.l.b16 %v58
  %v395 = vunpack.c.l.b16 %v59
  %v396 = vunpack.c.l.b16 %v60
  %v397 = vunpack.c.l.b16 %v61
  %v398 = vunpack.c.l.b16 %v62
  %v399 = vunpack.c.l.b16 %v63
  %v400 = vunpack.c.l.b16 %v64
  %v401 = vunpack.c.l.b16 %v65
  %v402 = vunpack.c.l.b16 %v66
  %v403 = vunpack.c.l.b16 %v67
  %v404 = vunpack.c.l.b16 %v68
  %v405 = vunpack.c.l.b16 %v69
  %v406 = vunpack.c.l.b16 %v70
  %v407 = vunpack.c.l.b16 %v71
  %v408 = vunpack.c.l.b16 %v72
  %v409 = vunpack.c.l.b16 %v73
  %v410 = vunpack.c.l.b16 %v74
  %v411 = vunpack.c.l.b16 %v75
  %v412 = vunpack.c.l.b16 %v76
  %v413 = vunpack.c.l.b16 %v77
  %v414 = vunpack.c.l.b16 %v78
  %v415 = vunpack.c.l.b16 %v79
  %v416 = vunpack.c.l.b16 %v80
  %v417 = vunpack.c.l.b16 %v81
  %v418 = vunpack.c.l.b16 %v82
  %v419 = vunpack.c.l.b16 %v83
  %v420 = vunpack.c.l.b16 %v84
  %v421 = vunpack.c.l.b16 %v85
  %v422 = vunpack.c.l.b16 %v86
  %v423 = vunpack.c.l.b16 %v87
  %v424 = vunpack.c.l.b16 %v88
  %v425 = vunpack.c.l.b16 %v89
  %v426 = vunpack.c.l.b16 %v90
  %v427 = vunpack.c.l.b16 %v91
  %v428 = vunpack.c.l.b16 %v92
  %v429 = vunpack.c.l.b16 %v93
  %v430 = vunpack.c.l.b16 %v94
  %v431 = vunpack.c.l.b16 %v95
  %v432 = vunpack.c.l.b16 %v96
  %v433 = vunpack.c.l.b16 %v97
  %v434 = vunpack.c.l.b16 %v98
  %v435 = vunpack.c.l.b16 %v99
  %v436 = vunpack.c.l.b16 %v100
  %v437 = vunpack.c.l.b16 %v101
  %v438 = vunpack.c.l.b16 %v102
  %v439 = vunpack.c.l.b16 %v103
  %v440 = vunpack.c.l.b16 %v104
  %v441 = vunpack.c.l.b16 %v105
  %v442 = vunpack.c.l.b16 %v106
  %v443 = vunpack.c.l.b16 %v107
  %v444 = vunpack.c.l.b16 %v108
  %v445 = vunpack.c.l.b16 %v109
  %v446 = vunpack.c.l.b16 %v110
  %v447 = vunpack.c.l.b16 %v111
  %v448 = vunpack.c.l.b16 %v112
  %v449 = vunpack.c.l.b16 %v113
  %v450 = vunpack.c.l.b16 %v114
  %v451 = vunpack.c.l.b16 %v115
  %v452 = vunpack.c.l.b16 %v116
  %v453 = vunpack.c.l.b16 %v117
  %v454 = vunpack.c.l.b16 %v118
  %v455 = vunpack.c.l.b16 %v119
  %v456 = vunpack.c.l.b16 %v120
  %v457 = vunpack.c.l.b16 %v121
  %v458 = vunpack.c.l.b16 %v122
  %v459 = vunpack.c.l.b16 %v123
  %v460 = vunpack.c.l.b16 %v124
  %v461 = vunpack.c.l.b16 %v125
  %v462 = vunpack.c.l.b16 %v126
  %v463 = vunpack.c.l.b16 %v127
  %v464 = vunpack.c.l.b16 %v128
  %v465 = vunpack.c.l.b16 %v129
  %v466 = vunpack.c.l.b16 %v130
  %v467 = vunpack.c.l.b16 %v131
  %v468 = vunpack.c.l.b16 %v132
  %v469 = vunpack.c.l.b16 %v133
  %v470 = vunpack.c.l.b16 %v134
  %v471 = vunpack.c.l.b16 %v135
  %v472 = vunpack.c.l.b16 %v136
  %v473 = vunpack.c.l.b16 %v137
  %v474 = vunpack.c.l.b16 %v138
  %v475 = vunpack.c.l.b16 %v139
  %v476 = vunpack.c.l.b16 %v140
  %v477 = vunpack.c.l.b16 %v141
  %v478 = vunpack.c.l.b16 %v142
  %v479 = vunpack.c.l.b16 %v143
  %v480 = vunpack.c.l.b16 %v144
  %v481 = vunpack.c.l.b16 %v145
  %v482 = vunpack.c.l.b16 %v146
  %v483 = vunpack.c.l.b16 %v147
  %v484 = vunpack.c.l.b16 %v148
  %v485 = vunpack.c.l.b16 %v149
  %v486 = vunpack.c.l.b16 %v150
  %v487 = vunpack.c.l.b16 %v151
  %v488 = vunpack.c.l.b16 %v152
  %v489 = vunpack.c.l.b16 %v153
  %v490 = vunpack.c.l.b16 %v154
  %v491 = vunpack.c.l.b16 %v155
  %v492 = vunpack.c.l.b16 %v156
  %v493 = vunpack.c.l.b16 %v157
  %v494 = vunpack.c.l.b16 %v158
  %v495 = vunpack.c.l.b16 %v159
  %v496 = vunpack.c.l.b16 %v160
  %v497 = vunpack.c.l.b16 %v161
  %v498 = vunpack.c.l.b16 %v162
  %v499 = vunpack.c.l.b16 %v163
  %v500 = vunpack.c.l.b16 %v164
  %v501 = vunpack.c.l.b16 %v165
  %v502 = vunpack.c.l.b16 %v166
  %v503 = vpack.c.b16 %v376, %v375
  %v504 = vpack.c.b16 %v378, %v377
  %v505 = vpack.c.b16 %v380, %v379
  %v506 = vpack.c.b16 %v382, %v381
  %v507 = vpack.c.b16 %v384, %v383
  %v508 = vpack.c.b16 %v386, %v385
  %v509 = vpack.c.b16 %v388, %v387
  %v510 = vpack.c.b16 %v390, %v389
  %v511 = vpack.c.b16 %v392, %v391
  %v512 = vpack.c.b16 %v394, %v393
  %v513 = vpack.c.b16 %v396, %v395
  %v514 = vpack.c.b16 %v398, %v397
  %v515 = vpack.c.b16 %v400, %v399
  %v516 = vpack.c.b16 %v402, %v401
  %v517 = vpack.c.b16 %v404, %v403
  %v518 = vpack.c.b16 %v406, %v405
  %v519 = vpack.c.b16 %v408, %v407
  %v520 = vpack.c.b16 %v410, %v409
  %v521 = vpack.c.b16 %v412, %v411
  %v522 = vpack.c.b16 %v414, %v413
  %v523 = vpack.c.b16 %v416, %v415
  %v524 = vpack.c.b16 %v418, %v417
  %v525 = vpack.c.b16 %v420, %v419
  %v526 = vpack.c.b16 %v422, %v421
  %v527 = vpack.c.b16 %v424, %v423
  %v528 = vpack.c.b16 %v426, %v425
  %v529 = vpack.c.b16 %v428, %v427
  %v530 = vpack.c.b16 %v430, %v429
  %v531 = vpack.c.b16 %v432, %v431
  %v532 = vpack.c.b16 %v434, %v433
  %v533 = vpack.c.b16 %v436, %v435
  %v534 = vpack.c.b16 %v438, %v437
  %v535 = vpack.c.b16 %v440, %v439
  %v536 = vpack.c.b16 %v442, %v441
  %v537 = vpack.c.b16 %v444, %v443
  %v538 = vpack.c.b16 %v446, %v445
  %v539 = vpack.c.b16 %v448, %v447
  %v540 = vpack.c.b16 %v450, %v449
  %v541 = vpack.c.b16 %v452, %v451
  %v542 = vpack.c.b16 %v454, %v453
  %v543 = vpack.c.b16 %v456, %v455
  %v544 = vpack.c.b16 %v458, %v457
  %v545 = vpack.c.b16 %v460, %v459
  %v546 = vpack.c.b16 %v462, %v461
  %v547 = vpack.c.b16 %v464, %v463
  %v548 = vpack.c.b16 %v466, %v465
  %v549 = vpack.c.b16 %v468, %v467
  %v550 = vpack.c.b16 %v470, %v469
  %v551 = vpack.c.b16 %v472, %v471
  %v552 = vpack.c.b16 %v474, %v473
  %v553 = vpack.c.b16 %v476, %v475
  %v554 = vpack.c.b16 %v478, %v477
  %v555 = vpack.c.b16 %v480, %v479
  %v556 = vpack.c.b16 %v482, %v481
  %v557 = vpack.c.b16 %v484, %v483
  %v558 = vpack.c.b16 %v486, %v485
  %v559 = vpack.c.b16 %v488, %v487
  %v560 = vpack.c.b16 %v490, %v489
  %v561 = vpack.c.b16 %v492, %v491
  %v562 = vpack.c.b16 %v494, %v493
  %v563 = vpack.c.b16 %v496, %v495
  %v564 = vpack.c.b16 %v498, %v497
  %v565 = vpack.c.b16 %v500, %v499
  %v566 = vpack.c.b16 %v502, %v501
  %631 = vmatpush.bf16.msra.mxu0 %v510
  %632 = vmatpush.bf16.msra.mxu0 %v509
  %633 = vmatpush.bf16.msra.mxu0 %v508
  %634 = vmatpush.bf16.msra.mxu0 %v507
  %635 = vmatpush.bf16.msra.mxu0 %v506
  %636 = vmatpush.bf16.msra.mxu0 %v505
  %637 = vmatpush.bf16.msra.mxu0 %v504
  %638 = vmatpush.bf16.msra.mxu0 %v503
  %639 = vmatmul.bf16.gmra.mxu0 %v215
  %v640 = vpop.f32.mrf.mxu0
  %v641 = vadd.f32 0.0, %v640
  %v642 = vpop.f32.mrf.mxu0
  %v643 = vadd.f32 0.0, %v642
  %644 = vmatmul.bf16.gmra.mxu0 %v223
  %v645 = vpop.f32.mrf.mxu0
  %v646 = vadd.f32 0.0, %v645
  %v647 = vpop.f32.mrf.mxu0
  %v648 = vadd.f32 0.0, %v647
  %649 = vdwg.mxu0
  %650 = vmatpush.bf16.msra.mxu0 %v518
  %651 = vmatpush.bf16.msra.mxu0 %v517
  %652 = vmatpush.bf16.msra.mxu0 %v516
  %653 = vmatpush.bf16.msra.mxu0 %v515
  %654 = vmatpush.bf16.msra.mxu0 %v514
  %655 = vmatpush.bf16.msra.mxu0 %v513
  %656 = vmatpush.bf16.msra.mxu0 %v512
  %657 = vmatpush.bf16.msra.mxu0 %v511
  %658 = vmatmul.bf16.gmra.mxu0 %v216
  %v659 = vpop.f32.mrf.mxu0
  %v660 = vadd.f32 %v641, %v659
  %v661 = vpop.f32.mrf.mxu0
  %v662 = vadd.f32 %v643, %v661
  %663 = vmatmul.bf16.gmra.mxu0 %v224
  %v664 = vpop.f32.mrf.mxu0
  %v665 = vadd.f32 %v646, %v664
  %v666 = vpop.f32.mrf.mxu0
  %v667 = vadd.f32 %v648, %v666
  %668 = vdwg.mxu0
  %669 = vmatpush.bf16.msra.mxu0 %v526
  %670 = vmatpush.bf16.msra.mxu0 %v525
  %671 = vmatpush.bf16.msra.mxu0 %v524
  %672 = vmatpush.bf16.msra.mxu0 %v523
  %673 = vmatpush.bf16.msra.mxu0 %v522
  %674 = vmatpush.bf16.msra.mxu0 %v521
  %675 = vmatpush.bf16.msra.mxu0 %v520
  %676 = vmatpush.bf16.msra.mxu0 %v519
  %677 = vmatmul.bf16.gmra.mxu0 %v217
  %v678 = vpop.f32.mrf.mxu0
  %v679 = vadd.f32 %v660, %v678
  %v680 = vpop.f32.mrf.mxu0
  %v681 = vadd.f32 %v662, %v680
  %682 = vmatmul.bf16.gmra.mxu0 %v225
  %v683 = vpop.f32.mrf.mxu0
  %v684 = vadd.f32 %v665, %v683
  %v685 = vpop.f32.mrf.mxu0
  %v686 = vadd.f32 %v667, %v685
  %687 = vdwg.mxu0
  %688 = vmatpush.bf16.msra.mxu0 %v534
  %689 = vmatpush.bf16.msra.mxu0 %v533
  %690 = vmatpush.bf16.msra.mxu0 %v532
  %691 = vmatpush.bf16.msra.mxu0 %v531
  %692 = vmatpush.bf16.msra.mxu0 %v530
  %693 = vmatpush.bf16.msra.mxu0 %v529
  %694 = vmatpush.bf16.msra.mxu0 %v528
  %695 = vmatpush.bf16.msra.mxu0 %v527
  %696 = vmatmul.bf16.gmra.mxu0 %v218
  %v697 = vpop.f32.mrf.mxu0
  %v698 = vadd.f32 %v679, %v697
  %v699 = vpop.f32.mrf.mxu0
  %v700 = vadd.f32 %v681, %v699
  %701 = vmatmul.bf16.gmra.mxu0 %v226
  %v702 = vpop.f32.mrf.mxu0
  %v703 = vadd.f32 %v684, %v702
  %v704 = vpop.f32.mrf.mxu0
  %v705 = vadd.f32 %v686, %v704
  %706 = vdwg.mxu0
  %707 = vmatpush.bf16.msra.mxu0 %v542
  %708 = vmatpush.bf16.msra.mxu0 %v541
  %709 = vmatpush.bf16.msra.mxu0 %v540
  %710 = vmatpush.bf16.msra.mxu0 %v539
  %711 = vmatpush.bf16.msra.mxu0 %v538
  %712 = vmatpush.bf16.msra.mxu0 %v537
  %713 = vmatpush.bf16.msra.mxu0 %v536
  %714 = vmatpush.bf16.msra.mxu0 %v535
  %715 = vmatmul.bf16.gmra.mxu0 %v219
  %v716 = vpop.f32.mrf.mxu0
  %v717 = vadd.f32 %v698, %v716
  %v718 = vpop.f32.mrf.mxu0
  %v719 = vadd.f32 %v700, %v718
  %720 = vmatmul.bf16.gmra.mxu0 %v227
  %v721 = vpop.f32.mrf.mxu0
  %v722 = vadd.f32 %v703, %v721
  %v723 = vpop.f32.mrf.mxu0
  %v724 = vadd.f32 %v705, %v723
  %725 = vdwg.mxu0
  %726 = vmatpush.bf16.msra.mxu0 %v550
  %727 = vmatpush.bf16.msra.mxu0 %v549
  %728 = vmatpush.bf16.msra.mxu0 %v548
  %729 = vmatpush.bf16.msra.mxu0 %v547
  %730 = vmatpush.bf16.msra.mxu0 %v546
  %731 = vmatpush.bf16.msra.mxu0 %v545
  %732 = vmatpush.bf16.msra.mxu0 %v544
  %733 = vmatpush.bf16.msra.mxu0 %v543
  %734 = vmatmul.bf16.gmra.mxu0 %v220
  %v735 = vpop.f32.mrf.mxu0
  %v736 = vadd.f32 %v717, %v735
  %v737 = vpop.f32.mrf.mxu0
  %v738 = vadd.f32 %v719, %v737
  %739 = vmatmul.bf16.gmra.mxu0 %v228
  %v740 = vpop.f32.mrf.mxu0
  %v741 = vadd.f32 %v722, %v740
  %v742 = vpop.f32.mrf.mxu0
  %v743 = vadd.f32 %v724, %v742
  %744 = vdwg.mxu0
  %745 = vmatpush.bf16.msra.mxu0 %v558
  %746 = vmatpush.bf16.msra.mxu0 %v557
  %747 = vmatpush.bf16.msra.mxu0 %v556
  %748 = vmatpush.bf16.msra.mxu0 %v555
  %749 = vmatpush.bf16.msra.mxu0 %v554
  %750 = vmatpush.bf16.msra.mxu0 %v553
  %751 = vmatpush.bf16.msra.mxu0 %v552
  %752 = vmatpush.bf16.msra.mxu0 %v551
  %753 = vmatmul.bf16.gmra.mxu0 %v221
  %v754 = vpop.f32.mrf.mxu0
  %v755 = vadd.f32 %v736, %v754
  %v756 = vpop.f32.mrf.mxu0
  %v757 = vadd.f32 %v738, %v756
  %758 = vmatmul.bf16.gmra.mxu0 %v229
  %v759 = vpop.f32.mrf.mxu0
  %v760 = vadd.f32 %v741, %v759
  %v761 = vpop.f32.mrf.mxu0
  %v762 = vadd.f32 %v743, %v761
  %763 = vdwg.mxu0
  %764 = vmatpush.bf16.msra.mxu0 %v566
  %765 = vmatpush.bf16.msra.mxu0 %v565
  %766 = vmatpush.bf16.msra.mxu0 %v564
  %767 = vmatpush.bf16.msra.mxu0 %v563
  %768 = vmatpush.bf16.msra.mxu0 %v562
  %769 = vmatpush.bf16.msra.mxu0 %v561
  %770 = vmatpush.bf16.msra.mxu0 %v560
  %771 = vmatpush.bf16.msra.mxu0 %v559
  %772 = vmatmul.bf16.gmra.mxu0 %v222
  %v773 = vpop.f32.mrf.mxu0
  %v774 = vadd.f32 %v755, %v773
  %v775 = vpop.f32.mrf.mxu0
  %v776 = vadd.f32 %v757, %v775
  %777 = vmatmul.bf16.gmra.mxu0 %v230
  %v778 = vpop.f32.mrf.mxu0
  %v779 = vadd.f32 %v760, %v778
  %v780 = vpop.f32.mrf.mxu0
  %v781 = vadd.f32 %v762, %v780
  %782 = vdwg.mxu0
  %v783 = vadd.f32 %v19, %v774
  %v784 = vadd.f32 %v20, %v776
  %v785 = vadd.f32 %v21, %v779
  %v786 = vadd.f32 %v22, %v781
  %787 = vst [vmem:[#allocation2] sm:$0xff] %v783
  %788 = vst [vmem:[#allocation2 + $0x8] sm:$0xff] %v784
  %789 = vst [vmem:[#allocation2 + $0x10] sm:$0xff] %v785
  %790 = vst [vmem:[#allocation2 + $0x18] sm:$0xff] %v786
  // Predicated region
  $region14: #{vae_forward.32} parent=0 // pred_check
    %p791 = pneg %p11
  $region15: #{vae_forward.32} parent=0 // pred_check_branch
    %793 = sbr.rel (%p791) target = $region17
  $region16: #{vae_forward.32} parent=0 // pred_region
    %v794 = vld [vmem:[#allocation2] sm:$0xff]
    %v795 = vld [vmem:[#allocation2 + $0x8] sm:$0xff]
    %v796 = vld [vmem:[#allocation2 + $0x10] sm:$0xff]
    %v797 = vld [vmem:[#allocation2 + $0x18] sm:$0xff]
    %798 = vst [vmem:[%s2] sm:$0xff] %v794
    %799 = vst [vmem:[%s2 + $0x8] sm:$0xff] %v795
    %800 = vst [vmem:[%s2 + $0x10] sm:$0xff] %v796
    %801 = vst [vmem:[%s2 + $0x18] sm:$0xff] %v797
  $region17: #{vae_forward.32} parent=0 // pred_fallthru
    _
  // Predicated region
  $region18: #{vae_forward.32} parent=0 // pred_check
    _
  $region19: #{vae_forward.32} parent=0 // pred_check_branch
    %803 = sbr.rel (0) target = $region21
  $region20: #{vae_forward.32} parent=0 // pred_region
    _
  $region21: #{vae_forward.32} parent=0 // pred_fallthru
    _
  // Predicated region
  $region22: #{vae_forward.32} parent=0 // pred_check
    _
  $region23: #{vae_forward.32} parent=0 // pred_check_branch
    %805 = sbr.rel (0) target = $region25
  $region24: #{vae_forward.32} parent=0 // pred_region
    _
  $region25: #{vae_forward.32} parent=0 // pred_fallthru
    _

// kernel: vae_forward.44
$region0: #{vae_forward.44}
  #allocation0 [shape = 'u32[]', space=smem, size = 0x4, offset = 0x4, fixed_abs, tag = 'smem constant byte address 0x4 - core index']
  #allocation1 [shape = 'u32[72,128]{1,0:T(1,128)}', space=vmem, size = 0x9000, scoped, tag = 'internal scratch']
  #allocation2 [shape = 'f32[128,3]{1,0:T(8,128)}', space=vmem, size = 0x10000, scoped, tag = 'scratch operand']
  %s0 = inlined_call_operand.vmem [shape: bf16[128,512], index: 0, kind: input, shape index: {}]
  %s1 = inlined_call_operand.vmem [shape: bf16[512,3], index: 1, kind: input, shape index: {}]
  %s2 = inlined_call_operand.vmem [shape: f32[1,3], index: 2, kind: input, shape index: {}]
  %s3 = inlined_call_operand.vmem [shape: f32[128,3], index: 3, kind: output, shape index: {}]
  %s4 = sld [smem:[#allocation0]]
  $region30: #{vae_forward.44} parent=0
    _
  %s6 = ssub.s32 1, %s4
  %s7 = scalar_select 0, %s6, %s4
  // Predicated region
  $region2: #{vae_forward.44} parent=0 // pred_check
    _
  $region3: #{vae_forward.44} parent=0 // pred_check_branch
    %9 = sbr.rel (0) target = $region5
  $region4: #{vae_forward.44} parent=0 // pred_region
    _
  $region5: #{vae_forward.44} parent=0 // pred_fallthru
    _
  // Predicated region
  $region6: #{vae_forward.44} parent=0 // pred_check
    _
  $region7: #{vae_forward.44} parent=0 // pred_check_branch
    %11 = sbr.rel (0) target = $region9
  $region8: #{vae_forward.44} parent=0 // pred_region
    _
  $region9: #{vae_forward.44} parent=0 // pred_fallthru
    _
  // Predicated region
  $region10: #{vae_forward.44} parent=0 // pred_check
    _
  $region11: #{vae_forward.44} parent=0 // pred_check_branch
    %13 = sbr.rel (0) target = $region13
  $region12: #{vae_forward.44} parent=0 // pred_region
    _
  $region13: #{vae_forward.44} parent=0 // pred_fallthru
    _
  %p14 = scmp.eq.s32.totalorder 0, 0
  // Predicated region
  $region14: #{vae_forward.44} parent=0 // pred_check
    %p15 = pneg %p14
  $region15: #{vae_forward.44} parent=0 // pred_check_branch
    %17 = sbr.rel (%p15) target = $region17
  $region16: #{vae_forward.44} parent=0 // pred_region
    %vm18 = vcmask 23552
    %19 = vst.msk [vmem:[#allocation2] sm:$0xff] %vm18, 0.0
    %20 = vst.msk [vmem:[#allocation2 + $0x8] sm:$0xff] %vm18, 0.0
    %21 = vst.msk [vmem:[#allocation2 + $0x10] sm:$0xff] %vm18, 0.0
    %22 = vst.msk [vmem:[#allocation2 + $0x18] sm:$0xff] %vm18, 0.0
    %23 = vst.msk [vmem:[#allocation2 + $0x20] sm:$0xff] %vm18, 0.0
    %24 = vst.msk [vmem:[#allocation2 + $0x28] sm:$0xff] %vm18, 0.0
    %25 = vst.msk [vmem:[#allocation2 + $0x30] sm:$0xff] %vm18, 0.0
    %26 = vst.msk [vmem:[#allocation2 + $0x38] sm:$0xff] %vm18, 0.0
    %27 = vst.msk [vmem:[#allocation2 + $0x40] sm:$0xff] %vm18, 0.0
    %28 = vst.msk [vmem:[#allocation2 + $0x48] sm:$0xff] %vm18, 0.0
    %29 = vst.msk [vmem:[#allocation2 + $0x50] sm:$0xff] %vm18, 0.0
    %30 = vst.msk [vmem:[#allocation2 + $0x58] sm:$0xff] %vm18, 0.0
    %31 = vst.msk [vmem:[#allocation2 + $0x60] sm:$0xff] %vm18, 0.0
    %32 = vst.msk [vmem:[#allocation2 + $0x68] sm:$0xff] %vm18, 0.0
    %33 = vst.msk [vmem:[#allocation2 + $0x70] sm:$0xff] %vm18, 0.0
    %34 = vst.msk [vmem:[#allocation2 + $0x78] sm:$0xff] %vm18, 0.0
  $region17: #{vae_forward.44} parent=0 // pred_fallthru
    _
  %v35 = vld [vmem:[#allocation2] sm:$0xff]
  %v36 = vld [vmem:[#allocation2 + $0x8] sm:$0xff]
  %v37 = vld [vmem:[#allocation2 + $0x10] sm:$0xff]
  %v38 = vld [vmem:[#allocation2 + $0x18] sm:$0xff]
  %v39 = vld [vmem:[#allocation2 + $0x20] sm:$0xff]
  %v40 = vld [vmem:[#allocation2 + $0x28] sm:$0xff]
  %v41 = vld [vmem:[#allocation2 + $0x30] sm:$0xff]
  %v42 = vld [vmem:[#allocation2 + $0x38] sm:$0xff]
  %v43 = vld [vmem:[#allocation2 + $0x40] sm:$0xff]
  %v44 = vld [vmem:[#allocation2 + $0x48] sm:$0xff]
  %v45 = vld [vmem:[#allocation2 + $0x50] sm:$0xff]
  %v46 = vld [vmem:[#allocation2 + $0x58] sm:$0xff]
  %v47 = vld [vmem:[#allocation2 + $0x60] sm:$0xff]
  %v48 = vld [vmem:[#allocation2 + $0x68] sm:$0xff]
  %v49 = vld [vmem:[#allocation2 + $0x70] sm:$0xff]
  %v50 = vld [vmem:[#allocation2 + $0x78] sm:$0xff]
  %v51 = vld [vmem:[%s0] sm:$0xff]
  %v52 = vld [vmem:[%s0 + $0x8] sm:$0xff]
  %v53 = vld [vmem:[%s0 + $0x10] sm:$0xff]
  %v54 = vld [vmem:[%s0 + $0x18] sm:$0xff]
  %v55 = vld [vmem:[%s0 + $0x20] sm:$0xff]
  %v56 = vld [vmem:[%s0 + $0x28] sm:$0xff]
  %v57 = vld [vmem:[%s0 + $0x30] sm:$0xff]
  %v58 = vld [vmem:[%s0 + $0x38] sm:$0xff]
  %v59 = vld [vmem:[%s0 + $0x40] sm:$0xff]
  %v60 = vld [vmem:[%s0 + $0x48] sm:$0xff]
  %v61 = vld [vmem:[%s0 + $0x50] sm:$0xff]
  %v62 = vld [vmem:[%s0 + $0x58] sm:$0xff]
  %v63 = vld [vmem:[%s0 + $0x60] sm:$0xff]
  %v64 = vld [vmem:[%s0 + $0x68] sm:$0xff]
  %v65 = vld [vmem:[%s0 + $0x70] sm:$0xff]
  %v66 = vld [vmem:[%s0 + $0x78] sm:$0xff]
  %v67 = vld [vmem:[%s0 + $0x80] sm:$0xff]
  %v68 = vld [vmem:[%s0 + $0x88] sm:$0xff]
  %v69 = vld [vmem:[%s0 + $0x90] sm:$0xff]
  %v70 = vld [vmem:[%s0 + $0x98] sm:$0xff]
  %v71 = vld [vmem:[%s0 + $0xa0] sm:$0xff]
  %v72 = vld [vmem:[%s0 + $0xa8] sm:$0xff]
  %v73 = vld [vmem:[%s0 + $0xb0] sm:$0xff]
  %v74 = vld [vmem:[%s0 + $0xb8] sm:$0xff]
  %v75 = vld [vmem:[%s0 + $0xc0] sm:$0xff]
  %v76 = vld [vmem:[%s0 + $0xc8] sm:$0xff]
  %v77 = vld [vmem:[%s0 + $0xd0] sm:$0xff]
  %v78 = vld [vmem:[%s0 + $0xd8] sm:$0xff]
  %v79 = vld [vmem:[%s0 + $0xe0] sm:$0xff]
  %v80 = vld [vmem:[%s0 + $0xe8] sm:$0xff]
  %v81 = vld [vmem:[%s0 + $0xf0] sm:$0xff]
  %v82 = vld [vmem:[%s0 + $0xf8] sm:$0xff]
  %v83 = vld [vmem:[%s1] sm:$0xf]
  %v84 = vld [vmem:[%s1 + $0x4] sm:$0xf]
  %v85 = vld [vmem:[%s1 + $0x8] sm:$0xf]
  %v86 = vld [vmem:[%s1 + $0xc] sm:$0xf]
  %v87 = vld [vmem:[%s1 + $0x10] sm:$0xf]
  %v88 = vld [vmem:[%s1 + $0x14] sm:$0xf]
  %v89 = vld [vmem:[%s1 + $0x18] sm:$0xf]
  %v90 = vld [vmem:[%s1 + $0x1c] sm:$0xf]
  %v91 = vld [vmem:[%s1 + $0x20] sm:$0xf]
  %v92 = vld [vmem:[%s1 + $0x24] sm:$0xf]
  %v93 = vld [vmem:[%s1 + $0x28] sm:$0xf]
  %v94 = vld [vmem:[%s1 + $0x2c] sm:$0xf]
  %v95 = vld [vmem:[%s1 + $0x30] sm:$0xf]
  %v96 = vld [vmem:[%s1 + $0x34] sm:$0xf]
  %v97 = vld [vmem:[%s1 + $0x38] sm:$0xf]
  %v98 = vld [vmem:[%s1 + $0x3c] sm:$0xf]
  %v99 = vld [vmem:[%s1 + $0x40] sm:$0xf]
  %v100 = vld [vmem:[%s1 + $0x44] sm:$0xf]
  %v101 = vld [vmem:[%s1 + $0x48] sm:$0xf]
  %v102 = vld [vmem:[%s1 + $0x4c] sm:$0xf]
  %v103 = vld [vmem:[%s1 + $0x50] sm:$0xf]
  %v104 = vld [vmem:[%s1 + $0x54] sm:$0xf]
  %v105 = vld [vmem:[%s1 + $0x58] sm:$0xf]
  %v106 = vld [vmem:[%s1 + $0x5c] sm:$0xf]
  %v107 = vld [vmem:[%s1 + $0x60] sm:$0xf]
  %v108 = vld [vmem:[%s1 + $0x64] sm:$0xf]
  %v109 = vld [vmem:[%s1 + $0x68] sm:$0xf]
  %v110 = vld [vmem:[%s1 + $0x6c] sm:$0xf]
  %v111 = vld [vmem:[%s1 + $0x70] sm:$0xf]
  %v112 = vld [vmem:[%s1 + $0x74] sm:$0xf]
  %v113 = vld [vmem:[%s1 + $0x78] sm:$0xf]
  %v114 = vld [vmem:[%s1 + $0x7c] sm:$0xf]
  %v115 = vld [vmem:[%s1 + $0x80] sm:$0xf]
  %v116 = vld [vmem:[%s1 + $0x84] sm:$0xf]
  %v117 = vld [vmem:[%s1 + $0x88] sm:$0xf]
  %v118 = vld [vmem:[%s1 + $0x8c] sm:$0xf]
  %v119 = vld [vmem:[%s1 + $0x90] sm:$0xf]
  %v120 = vld [vmem:[%s1 + $0x94] sm:$0xf]
  %v121 = vld [vmem:[%s1 + $0x98] sm:$0xf]
  %v122 = vld [vmem:[%s1 + $0x9c] sm:$0xf]
  %v123 = vld [vmem:[%s1 + $0xa0] sm:$0xf]
  %v124 = vld [vmem:[%s1 + $0xa4] sm:$0xf]
  %v125 = vld [vmem:[%s1 + $0xa8] sm:$0xf]
  %v126 = vld [vmem:[%s1 + $0xac] sm:$0xf]
  %v127 = vld [vmem:[%s1 + $0xb0] sm:$0xf]
  %v128 = vld [vmem:[%s1 + $0xb4] sm:$0xf]
  %v129 = vld [vmem:[%s1 + $0xb8] sm:$0xf]
  %v130 = vld [vmem:[%s1 + $0xbc] sm:$0xf]
  %v131 = vld [vmem:[%s1 + $0xc0] sm:$0xf]
  %v132 = vld [vmem:[%s1 + $0xc4] sm:$0xf]
  %v133 = vld [vmem:[%s1 + $0xc8] sm:$0xf]
  %v134 = vld [vmem:[%s1 + $0xcc] sm:$0xf]
  %v135 = vld [vmem:[%s1 + $0xd0] sm:$0xf]
  %v136 = vld [vmem:[%s1 + $0xd4] sm:$0xf]
  %v137 = vld [vmem:[%s1 + $0xd8] sm:$0xf]
  %v138 = vld [vmem:[%s1 + $0xdc] sm:$0xf]
  %v139 = vld [vmem:[%s1 + $0xe0] sm:$0xf]
  %v140 = vld [vmem:[%s1 + $0xe4] sm:$0xf]
  %v141 = vld [vmem:[%s1 + $0xe8] sm:$0xf]
  %v142 = vld [vmem:[%s1 + $0xec] sm:$0xf]
  %v143 = vld [vmem:[%s1 + $0xf0] sm:$0xf]
  %v144 = vld [vmem:[%s1 + $0xf4] sm:$0xf]
  %v145 = vld [vmem:[%s1 + $0xf8] sm:$0xf]
  %v146 = vld [vmem:[%s1 + $0xfc] sm:$0xf]
  %v179 = vunpack.c.l.b16 %v51
  %v180 = vunpack.c.h.b16 %v51
  %v181 = vunpack.c.l.b16 %v52
  %v182 = vunpack.c.h.b16 %v52
  %v183 = vunpack.c.l.b16 %v53
  %v184 = vunpack.c.h.b16 %v53
  %v185 = vunpack.c.l.b16 %v54
  %v186 = vunpack.c.h.b16 %v54
  %v187 = vunpack.c.l.b16 %v55
  %v188 = vunpack.c.h.b16 %v55
  %v189 = vunpack.c.l.b16 %v56
  %v190 = vunpack.c.h.b16 %v56
  %v191 = vunpack.c.l.b16 %v57
  %v192 = vunpack.c.h.b16 %v57
  %v193 = vunpack.c.l.b16 %v58
  %v194 = vunpack.c.h.b16 %v58
  %v195 = vunpack.c.l.b16 %v59
  %v196 = vunpack.c.h.b16 %v59
  %v197 = vunpack.c.l.b16 %v60
  %v198 = vunpack.c.h.b16 %v60
  %v199 = vunpack.c.l.b16 %v61
  %v200 = vunpack.c.h.b16 %v61
  %v201 = vunpack.c.l.b16 %v62
  %v202 = vunpack.c.h.b16 %v62
  %v203 = vunpack.c.l.b16 %v63
  %v204 = vunpack.c.h.b16 %v63
  %v205 = vunpack.c.l.b16 %v64
  %v206 = vunpack.c.h.b16 %v64
  %v207 = vunpack.c.l.b16 %v65
  %v208 = vunpack.c.h.b16 %v65
  %v209 = vunpack.c.l.b16 %v66
  %v210 = vunpack.c.h.b16 %v66
  %v211 = vunpack.c.l.b16 %v67
  %v212 = vunpack.c.h.b16 %v67
  %v213 = vunpack.c.l.b16 %v68
  %v214 = vunpack.c.h.b16 %v68
  %v215 = vunpack.c.l.b16 %v69
  %v216 = vunpack.c.h.b16 %v69
  %v217 = vunpack.c.l.b16 %v70
  %v218 = vunpack.c.h.b16 %v70
  %v219 = vunpack.c.l.b16 %v71
  %v220 = vunpack.c.h.b16 %v71
  %v221 = vunpack.c.l.b16 %v72
  %v222 = vunpack.c.h.b16 %v72
  %v223 = vunpack.c.l.b16 %v73
  %v224 = vunpack.c.h.b16 %v73
  %v225 = vunpack.c.l.b16 %v74
  %v226 = vunpack.c.h.b16 %v74
  %v227 = vunpack.c.l.b16 %v75
  %v228 = vunpack.c.h.b16 %v75
  %v229 = vunpack.c.l.b16 %v76
  %v230 = vunpack.c.h.b16 %v76
  %v231 = vunpack.c.l.b16 %v77
  %v232 = vunpack.c.h.b16 %v77
  %v233 = vunpack.c.l.b16 %v78
  %v234 = vunpack.c.h.b16 %v78
  %v235 = vunpack.c.l.b16 %v79
  %v236 = vunpack.c.h.b16 %v79
  %v237 = vunpack.c.l.b16 %v80
  %v238 = vunpack.c.h.b16 %v80
  %v239 = vunpack.c.l.b16 %v81
  %v240 = vunpack.c.h.b16 %v81
  %v241 = vunpack.c.l.b16 %v82
  %v242 = vunpack.c.h.b16 %v82
  %v243 = vpack.c.b16 %v183, %v179
  %v244 = vpack.c.b16 %v184, %v180
  %v245 = vpack.c.b16 %v185, %v181
  %v246 = vpack.c.b16 %v186, %v182
  %v247 = vpack.c.b16 %v191, %v187
  %v248 = vpack.c.b16 %v192, %v188
  %v249 = vpack.c.b16 %v193, %v189
  %v250 = vpack.c.b16 %v194, %v190
  %v251 = vpack.c.b16 %v199, %v195
  %v252 = vpack.c.b16 %v200, %v196
  %v253 = vpack.c.b16 %v201, %v197
  %v254 = vpack.c.b16 %v202, %v198
  %v255 = vpack.c.b16 %v207, %v203
  %v256 = vpack.c.b16 %v208, %v204
  %v257 = vpack.c.b16 %v209, %v205
  %v258 = vpack.c.b16 %v210, %v206
  %v259 = vpack.c.b16 %v215, %v211
  %v260 = vpack.c.b16 %v216, %v212
  %v261 = vpack.c.b16 %v217, %v213
  %v262 = vpack.c.b16 %v218, %v214
  %v263 = vpack.c.b16 %v223, %v219
  %v264 = vpack.c.b16 %v224, %v220
  %v265 = vpack.c.b16 %v225, %v221
  %v266 = vpack.c.b16 %v226, %v222
  %v267 = vpack.c.b16 %v231, %v227
  %v268 = vpack.c.b16 %v232, %v228
  %v269 = vpack.c.b16 %v233, %v229
  %v270 = vpack.c.b16 %v234, %v230
  %v271 = vpack.c.b16 %v239, %v235
  %v272 = vpack.c.b16 %v240, %v236
  %v273 = vpack.c.b16 %v241, %v237
  %v274 = vpack.c.b16 %v242, %v238
  %v371 = vunpack.c.l.b16 %v83
  %v372 = vunpack.c.l.b16 %v84
  %v373 = vunpack.c.l.b16 %v85
  %v374 = vunpack.c.l.b16 %v86
  %v375 = vunpack.c.l.b16 %v87
  %v376 = vunpack.c.l.b16 %v88
  %v377 = vunpack.c.l.b16 %v89
  %v378 = vunpack.c.l.b16 %v90
  %v379 = vunpack.c.l.b16 %v91
  %v380 = vunpack.c.l.b16 %v92
  %v381 = vunpack.c.l.b16 %v93
  %v382 = vunpack.c.l.b16 %v94
  %v383 = vunpack.c.l.b16 %v95
  %v384 = vunpack.c.l.b16 %v96
  %v385 = vunpack.c.l.b16 %v97
  %v386 = vunpack.c.l.b16 %v98
  %v387 = vunpack.c.l.b16 %v99
  %v388 = vunpack.c.l.b16 %v100
  %v389 = vunpack.c.l.b16 %v101
  %v390 = vunpack.c.l.b16 %v102
  %v391 = vunpack.c.l.b16 %v103
  %v392 = vunpack.c.l.b16 %v104
  %v393 = vunpack.c.l.b16 %v105
  %v394 = vunpack.c.l.b16 %v106
  %v395 = vunpack.c.l.b16 %v107
  %v396 = vunpack.c.l.b16 %v108
  %v397 = vunpack.c.l.b16 %v109
  %v398 = vunpack.c.l.b16 %v110
  %v399 = vunpack.c.l.b16 %v111
  %v400 = vunpack.c.l.b16 %v112
  %v401 = vunpack.c.l.b16 %v113
  %v402 = vunpack.c.l.b16 %v114
  %v403 = vunpack.c.l.b16 %v115
  %v404 = vunpack.c.l.b16 %v116
  %v405 = vunpack.c.l.b16 %v117
  %v406 = vunpack.c.l.b16 %v118
  %v407 = vunpack.c.l.b16 %v119
  %v408 = vunpack.c.l.b16 %v120
  %v409 = vunpack.c.l.b16 %v121
  %v410 = vunpack.c.l.b16 %v122
  %v411 = vunpack.c.l.b16 %v123
  %v412 = vunpack.c.l.b16 %v124
  %v413 = vunpack.c.l.b16 %v125
  %v414 = vunpack.c.l.b16 %v126
  %v415 = vunpack.c.l.b16 %v127
  %v416 = vunpack.c.l.b16 %v128
  %v417 = vunpack.c.l.b16 %v129
  %v418 = vunpack.c.l.b16 %v130
  %v419 = vunpack.c.l.b16 %v131
  %v420 = vunpack.c.l.b16 %v132
  %v421 = vunpack.c.l.b16 %v133
  %v422 = vunpack.c.l.b16 %v134
  %v423 = vunpack.c.l.b16 %v135
  %v424 = vunpack.c.l.b16 %v136
  %v425 = vunpack.c.l.b16 %v137
  %v426 = vunpack.c.l.b16 %v138
  %v427 = vunpack.c.l.b16 %v139
  %v428 = vunpack.c.l.b16 %v140
  %v429 = vunpack.c.l.b16 %v141
  %v430 = vunpack.c.l.b16 %v142
  %v431 = vunpack.c.l.b16 %v143
  %v432 = vunpack.c.l.b16 %v144
  %v433 = vunpack.c.l.b16 %v145
  %v434 = vunpack.c.l.b16 %v146
  %v435 = vpack.c.b16 %v372, %v371
  %v436 = vpack.c.b16 %v374, %v373
  %v437 = vpack.c.b16 %v376, %v375
  %v438 = vpack.c.b16 %v378, %v377
  %v439 = vpack.c.b16 %v380, %v379
  %v440 = vpack.c.b16 %v382, %v381
  %v441 = vpack.c.b16 %v384, %v383
  %v442 = vpack.c.b16 %v386, %v385
  %v443 = vpack.c.b16 %v388, %v387
  %v444 = vpack.c.b16 %v390, %v389
  %v445 = vpack.c.b16 %v392, %v391
  %v446 = vpack.c.b16 %v394, %v393
  %v447 = vpack.c.b16 %v396, %v395
  %v448 = vpack.c.b16 %v398, %v397
  %v449 = vpack.c.b16 %v400, %v399
  %v450 = vpack.c.b16 %v402, %v401
  %v451 = vpack.c.b16 %v404, %v403
  %v452 = vpack.c.b16 %v406, %v405
  %v453 = vpack.c.b16 %v408, %v407
  %v454 = vpack.c.b16 %v410, %v409
  %v455 = vpack.c.b16 %v412, %v411
  %v456 = vpack.c.b16 %v414, %v413
  %v457 = vpack.c.b16 %v416, %v415
  %v458 = vpack.c.b16 %v418, %v417
  %v459 = vpack.c.b16 %v420, %v419
  %v460 = vpack.c.b16 %v422, %v421
  %v461 = vpack.c.b16 %v424, %v423
  %v462 = vpack.c.b16 %v426, %v425
  %v463 = vpack.c.b16 %v428, %v427
  %v464 = vpack.c.b16 %v430, %v429
  %v465 = vpack.c.b16 %v432, %v431
  %v466 = vpack.c.b16 %v434, %v433
  %499 = vmatpush.bf16.msra.mxu0 %v442
  %500 = vmatpush.bf16.msra.mxu0 %v441
  %501 = vmatpush.bf16.msra.mxu0 %v440
  %502 = vmatpush.bf16.msra.mxu0 %v439
  %503 = vmatpush.bf16.msra.mxu0 %v438
  %504 = vmatpush.bf16.msra.mxu0 %v437
  %505 = vmatpush.bf16.msra.mxu0 %v436
  %506 = vmatpush.bf16.msra.mxu0 %v435
  %507 = vmatmul.bf16.gmra.mxu0 %v243
  %v508 = vpop.f32.mrf.mxu0
  %v509 = vadd.f32 0.0, %v508
  %v510 = vpop.f32.mrf.mxu0
  %v511 = vadd.f32 0.0, %v510
  %512 = vmatmul.bf16.gmra.mxu0 %v247
  %v513 = vpop.f32.mrf.mxu0
  %v514 = vadd.f32 0.0, %v513
  %v515 = vpop.f32.mrf.mxu0
  %v516 = vadd.f32 0.0, %v515
  %517 = vmatmul.bf16.gmra.mxu0 %v251
  %v518 = vpop.f32.mrf.mxu0
  %v519 = vadd.f32 0.0, %v518
  %v520 = vpop.f32.mrf.mxu0
  %v521 = vadd.f32 0.0, %v520
  %522 = vmatmul.bf16.gmra.mxu0 %v255
  %v523 = vpop.f32.mrf.mxu0
  %v524 = vadd.f32 0.0, %v523
  %v525 = vpop.f32.mrf.mxu0
  %v526 = vadd.f32 0.0, %v525
  %527 = vmatmul.bf16.gmra.mxu0 %v259
  %v528 = vpop.f32.mrf.mxu0
  %v529 = vadd.f32 0.0, %v528
  %v530 = vpop.f32.mrf.mxu0
  %v531 = vadd.f32 0.0, %v530
  %532 = vmatmul.bf16.gmra.mxu0 %v263
  %v533 = vpop.f32.mrf.mxu0
  %v534 = vadd.f32 0.0, %v533
  %v535 = vpop.f32.mrf.mxu0
  %v536 = vadd.f32 0.0, %v535
  %537 = vmatmul.bf16.gmra.mxu0 %v267
  %v538 = vpop.f32.mrf.mxu0
  %v539 = vadd.f32 0.0, %v538
  %v540 = vpop.f32.mrf.mxu0
  %v541 = vadd.f32 0.0, %v540
  %542 = vmatmul.bf16.gmra.mxu0 %v271
  %v543 = vpop.f32.mrf.mxu0
  %v544 = vadd.f32 0.0, %v543
  %v545 = vpop.f32.mrf.mxu0
  %v546 = vadd.f32 0.0, %v545
  %547 = vdwg.mxu0
  %548 = vmatpush.bf16.msra.mxu0 %v450
  %549 = vmatpush.bf16.msra.mxu0 %v449
  %550 = vmatpush.bf16.msra.mxu0 %v448
  %551 = vmatpush.bf16.msra.mxu0 %v447
  %552 = vmatpush.bf16.msra.mxu0 %v446
  %553 = vmatpush.bf16.msra.mxu0 %v445
  %554 = vmatpush.bf16.msra.mxu0 %v444
  %555 = vmatpush.bf16.msra.mxu0 %v443
  %556 = vmatmul.bf16.gmra.mxu0 %v244
  %v557 = vpop.f32.mrf.mxu0
  %v558 = vadd.f32 %v509, %v557
  %v559 = vpop.f32.mrf.mxu0
  %v560 = vadd.f32 %v511, %v559
  %561 = vmatmul.bf16.gmra.mxu0 %v248
  %v562 = vpop.f32.mrf.mxu0
  %v563 = vadd.f32 %v514, %v562
  %v564 = vpop.f32.mrf.mxu0
  %v565 = vadd.f32 %v516, %v564
  %566 = vmatmul.bf16.gmra.mxu0 %v252
  %v567 = vpop.f32.mrf.mxu0
  %v568 = vadd.f32 %v519, %v567
  %v569 = vpop.f32.mrf.mxu0
  %v570 = vadd.f32 %v521, %v569
  %571 = vmatmul.bf16.gmra.mxu0 %v256
  %v572 = vpop.f32.mrf.mxu0
  %v573 = vadd.f32 %v524, %v572
  %v574 = vpop.f32.mrf.mxu0
  %v575 = vadd.f32 %v526, %v574
  %576 = vmatmul.bf16.gmra.mxu0 %v260
  %v577 = vpop.f32.mrf.mxu0
  %v578 = vadd.f32 %v529, %v577
  %v579 = vpop.f32.mrf.mxu0
  %v580 = vadd.f32 %v531, %v579
  %581 = vmatmul.bf16.gmra.mxu0 %v264
  %v582 = vpop.f32.mrf.mxu0
  %v583 = vadd.f32 %v534, %v582
  %v584 = vpop.f32.mrf.mxu0
  %v585 = vadd.f32 %v536, %v584
  %586 = vmatmul.bf16.gmra.mxu0 %v268
  %v587 = vpop.f32.mrf.mxu0
  %v588 = vadd.f32 %v539, %v587
  %v589 = vpop.f32.mrf.mxu0
  %v590 = vadd.f32 %v541, %v589
  %591 = vmatmul.bf16.gmra.mxu0 %v272
  %v592 = vpop.f32.mrf.mxu0
  %v593 = vadd.f32 %v544, %v592
  %v594 = vpop.f32.mrf.mxu0
  %v595 = vadd.f32 %v546, %v594
  %596 = vdwg.mxu0
  %597 = vmatpush.bf16.msra.mxu0 %v458
  %598 = vmatpush.bf16.msra.mxu0 %v457
  %599 = vmatpush.bf16.msra.mxu0 %v456
  %600 = vmatpush.bf16.msra.mxu0 %v455
  %601 = vmatpush.bf16.msra.mxu0 %v454
  %602 = vmatpush.bf16.msra.mxu0 %v453
  %603 = vmatpush.bf16.msra.mxu0 %v452
  %604 = vmatpush.bf16.msra.mxu0 %v451
  %605 = vmatmul.bf16.gmra.mxu0 %v245
  %v606 = vpop.f32.mrf.mxu0
  %v607 = vadd.f32 %v558, %v606
  %v608 = vpop.f32.mrf.mxu0
  %v609 = vadd.f32 %v560, %v608
  %610 = vmatmul.bf16.gmra.mxu0 %v249
  %v611 = vpop.f32.mrf.mxu0
  %v612 = vadd.f32 %v563, %v611
  %v613 = vpop.f32.mrf.mxu0
  %v614 = vadd.f32 %v565, %v613
  %615 = vmatmul.bf16.gmra.mxu0 %v253
  %v616 = vpop.f32.mrf.mxu0
  %v617 = vadd.f32 %v568, %v616
  %v618 = vpop.f32.mrf.mxu0
  %v619 = vadd.f32 %v570, %v618
  %620 = vmatmul.bf16.gmra.mxu0 %v257
  %v621 = vpop.f32.mrf.mxu0
  %v622 = vadd.f32 %v573, %v621
  %v623 = vpop.f32.mrf.mxu0
  %v624 = vadd.f32 %v575, %v623
  %625 = vmatmul.bf16.gmra.mxu0 %v261
  %v626 = vpop.f32.mrf.mxu0
  %v627 = vadd.f32 %v578, %v626
  %v628 = vpop.f32.mrf.mxu0
  %v629 = vadd.f32 %v580, %v628
  %630 = vmatmul.bf16.gmra.mxu0 %v265
  %v631 = vpop.f32.mrf.mxu0
  %v632 = vadd.f32 %v583, %v631
  %v633 = vpop.f32.mrf.mxu0
  %v634 = vadd.f32 %v585, %v633
  %635 = vmatmul.bf16.gmra.mxu0 %v269
  %v636 = vpop.f32.mrf.mxu0
  %v637 = vadd.f32 %v588, %v636
  %v638 = vpop.f32.mrf.mxu0
  %v639 = vadd.f32 %v590, %v638
  %640 = vmatmul.bf16.gmra.mxu0 %v273
  %v641 = vpop.f32.mrf.mxu0
  %v642 = vadd.f32 %v593, %v641
  %v643 = vpop.f32.mrf.mxu0
  %v644 = vadd.f32 %v595, %v643
  %645 = vdwg.mxu0
  %646 = vmatpush.bf16.msra.mxu0 %v466
  %647 = vmatpush.bf16.msra.mxu0 %v465
  %648 = vmatpush.bf16.msra.mxu0 %v464
  %649 = vmatpush.bf16.msra.mxu0 %v463
  %650 = vmatpush.bf16.msra.mxu0 %v462
  %651 = vmatpush.bf16.msra.mxu0 %v461
  %652 = vmatpush.bf16.msra.mxu0 %v460
  %653 = vmatpush.bf16.msra.mxu0 %v459
  %654 = vmatmul.bf16.gmra.mxu0 %v246
  %v655 = vpop.f32.mrf.mxu0
  %v656 = vadd.f32 %v607, %v655
  %v657 = vpop.f32.mrf.mxu0
  %v658 = vadd.f32 %v609, %v657
  %659 = vmatmul.bf16.gmra.mxu0 %v250
  %v660 = vpop.f32.mrf.mxu0
  %v661 = vadd.f32 %v612, %v660
  %v662 = vpop.f32.mrf.mxu0
  %v663 = vadd.f32 %v614, %v662
  %664 = vmatmul.bf16.gmra.mxu0 %v254
  %v665 = vpop.f32.mrf.mxu0
  %v666 = vadd.f32 %v617, %v665
  %v667 = vpop.f32.mrf.mxu0
  %v668 = vadd.f32 %v619, %v667
  %669 = vmatmul.bf16.gmra.mxu0 %v258
  %v670 = vpop.f32.mrf.mxu0
  %v671 = vadd.f32 %v622, %v670
  %v672 = vpop.f32.mrf.mxu0
  %v673 = vadd.f32 %v624, %v672
  %674 = vmatmul.bf16.gmra.mxu0 %v262
  %v675 = vpop.f32.mrf.mxu0
  %v676 = vadd.f32 %v627, %v675
  %v677 = vpop.f32.mrf.mxu0
  %v678 = vadd.f32 %v629, %v677
  %679 = vmatmul.bf16.gmra.mxu0 %v266
  %v680 = vpop.f32.mrf.mxu0
  %v681 = vadd.f32 %v632, %v680
  %v682 = vpop.f32.mrf.mxu0
  %v683 = vadd.f32 %v634, %v682
  %684 = vmatmul.bf16.gmra.mxu0 %v270
  %v685 = vpop.f32.mrf.mxu0
  %v686 = vadd.f32 %v637, %v685
  %v687 = vpop.f32.mrf.mxu0
  %v688 = vadd.f32 %v639, %v687
  %689 = vmatmul.bf16.gmra.mxu0 %v274
  %v690 = vpop.f32.mrf.mxu0
  %v691 = vadd.f32 %v642, %v690
  %v692 = vpop.f32.mrf.mxu0
  %v693 = vadd.f32 %v644, %v692
  %694 = vdwg.mxu0
  %v695 = vadd.f32 %v35, %v656
  %v696 = vadd.f32 %v36, %v658
  %v697 = vadd.f32 %v37, %v661
  %v698 = vadd.f32 %v38, %v663
  %v699 = vadd.f32 %v39, %v666
  %v700 = vadd.f32 %v40, %v668
  %v701 = vadd.f32 %v41, %v671
  %v702 = vadd.f32 %v42, %v673
  %v703 = vadd.f32 %v43, %v676
  %v704 = vadd.f32 %v44, %v678
  %v705 = vadd.f32 %v45, %v681
  %v706 = vadd.f32 %v46, %v683
  %v707 = vadd.f32 %v47, %v686
  %v708 = vadd.f32 %v48, %v688
  %v709 = vadd.f32 %v49, %v691
  %v710 = vadd.f32 %v50, %v693
  %vm711 = vcmask 23552
  %712 = vst.msk [vmem:[#allocation2] sm:$0xff] %vm711, %v695
  %713 = vst.msk [vmem:[#allocation2 + $0x8] sm:$0xff] %vm711, %v696
  %714 = vst.msk [vmem:[#allocation2 + $0x10] sm:$0xff] %vm711, %v697
  %715 = vst.msk [vmem:[#allocation2 + $0x18] sm:$0xff] %vm711, %v698
  %716 = vst.msk [vmem:[#allocation2 + $0x20] sm:$0xff] %vm711, %v699
  %717 = vst.msk [vmem:[#allocation2 + $0x28] sm:$0xff] %vm711, %v700
  %718 = vst.msk [vmem:[#allocation2 + $0x30] sm:$0xff] %vm711, %v701
  %719 = vst.msk [vmem:[#allocation2 + $0x38] sm:$0xff] %vm711, %v702
  %720 = vst.msk [vmem:[#allocation2 + $0x40] sm:$0xff] %vm711, %v703
  %721 = vst.msk [vmem:[#allocation2 + $0x48] sm:$0xff] %vm711, %v704
  %722 = vst.msk [vmem:[#allocation2 + $0x50] sm:$0xff] %vm711, %v705
  %723 = vst.msk [vmem:[#allocation2 + $0x58] sm:$0xff] %vm711, %v706
  %724 = vst.msk [vmem:[#allocation2 + $0x60] sm:$0xff] %vm711, %v707
  %725 = vst.msk [vmem:[#allocation2 + $0x68] sm:$0xff] %vm711, %v708
  %726 = vst.msk [vmem:[#allocation2 + $0x70] sm:$0xff] %vm711, %v709
  %727 = vst.msk [vmem:[#allocation2 + $0x78] sm:$0xff] %vm711, %v710
  // Predicated region
  $region18: #{vae_forward.44} parent=0 // pred_check
    %p728 = pneg %p14
  $region19: #{vae_forward.44} parent=0 // pred_check_branch
    %730 = sbr.rel (%p728) target = $region21
  $region20: #{vae_forward.44} parent=0 // pred_region
    %v731 = vld [vmem:[#allocation2] sm:$0xff]
    %v732 = vld [vmem:[#allocation2 + $0x8] sm:$0xff]
    %v733 = vld [vmem:[#allocation2 + $0x10] sm:$0xff]
    %v734 = vld [vmem:[#allocation2 + $0x18] sm:$0xff]
    %v735 = vld [vmem:[#allocation2 + $0x20] sm:$0xff]
    %v736 = vld [vmem:[#allocation2 + $0x28] sm:$0xff]
    %v737 = vld [vmem:[#allocation2 + $0x30] sm:$0xff]
    %v738 = vld [vmem:[#allocation2 + $0x38] sm:$0xff]
    %v739 = vld [vmem:[#allocation2 + $0x40] sm:$0xff]
    %v740 = vld [vmem:[#allocation2 + $0x48] sm:$0xff]
    %v741 = vld [vmem:[#allocation2 + $0x50] sm:$0xff]
    %v742 = vld [vmem:[#allocation2 + $0x58] sm:$0xff]
    %v743 = vld [vmem:[#allocation2 + $0x60] sm:$0xff]
    %v744 = vld [vmem:[#allocation2 + $0x68] sm:$0xff]
    %v745 = vld [vmem:[#allocation2 + $0x70] sm:$0xff]
    %v746 = vld [vmem:[#allocation2 + $0x78] sm:$0xff]
    %v747 = vld [vmem:[%s2] sm:$0x1]
    %v749 = vperm.slane %v747, 0
    %v751 = vadd.f32 %v731, %v749
    %v752 = vadd.f32 %v732, %v749
    %v753 = vadd.f32 %v733, %v749
    %v754 = vadd.f32 %v734, %v749
    %v755 = vadd.f32 %v735, %v749
    %v756 = vadd.f32 %v736, %v749
    %v757 = vadd.f32 %v737, %v749
    %v758 = vadd.f32 %v738, %v749
    %v759 = vadd.f32 %v739, %v749
    %v760 = vadd.f32 %v740, %v749
    %v761 = vadd.f32 %v741, %v749
    %v762 = vadd.f32 %v742, %v749
    %v763 = vadd.f32 %v743, %v749
    %v764 = vadd.f32 %v744, %v749
    %v765 = vadd.f32 %v745, %v749
    %v766 = vadd.f32 %v746, %v749
    %v767 = vtanh.pop %v751
    %v768 = vtanh.pop %v752
    %v769 = vtanh.pop %v753
    %v770 = vtanh.pop %v754
    %v771 = vtanh.pop %v755
    %v772 = vtanh.pop %v756
    %v773 = vtanh.pop %v757
    %v774 = vtanh.pop %v758
    %v775 = vtanh.pop %v759
    %v776 = vtanh.pop %v760
    %v777 = vtanh.pop %v761
    %v778 = vtanh.pop %v762
    %v779 = vtanh.pop %v763
    %v780 = vtanh.pop %v764
    %v781 = vtanh.pop %v765
    %v782 = vtanh.pop %v766
    %783 = vst.msk [vmem:[%s3] sm:$0xff] %vm711, %v767
    %784 = vst.msk [vmem:[%s3 + $0x8] sm:$0xff] %vm711, %v768
    %785 = vst.msk [vmem:[%s3 + $0x10] sm:$0xff] %vm711, %v769
    %786 = vst.msk [vmem:[%s3 + $0x18] sm:$0xff] %vm711, %v770
    %787 = vst.msk [vmem:[%s3 + $0x20] sm:$0xff] %vm711, %v771
    %788 = vst.msk [vmem:[%s3 + $0x28] sm:$0xff] %vm711, %v772
    %789 = vst.msk [vmem:[%s3 + $0x30] sm:$0xff] %vm711, %v773
    %790 = vst.msk [vmem:[%s3 + $0x38] sm:$0xff] %vm711, %v774
    %791 = vst.msk [vmem:[%s3 + $0x40] sm:$0xff] %vm711, %v775
    %792 = vst.msk [vmem:[%s3 + $0x48] sm:$0xff] %vm711, %v776
    %793 = vst.msk [vmem:[%s3 + $0x50] sm:$0xff] %vm711, %v777
    %794 = vst.msk [vmem:[%s3 + $0x58] sm:$0xff] %vm711, %v778
    %795 = vst.msk [vmem:[%s3 + $0x60] sm:$0xff] %vm711, %v779
    %796 = vst.msk [vmem:[%s3 + $0x68] sm:$0xff] %vm711, %v780
    %797 = vst.msk [vmem:[%s3 + $0x70] sm:$0xff] %vm711, %v781
    %798 = vst.msk [vmem:[%s3 + $0x78] sm:$0xff] %vm711, %v782
  $region21: #{vae_forward.44} parent=0 // pred_fallthru
    _
  // Predicated region
  $region22: #{vae_forward.44} parent=0 // pred_check
    _
  $region23: #{vae_forward.44} parent=0 // pred_check_branch
    %800 = sbr.rel (0) target = $region25
  $region24: #{vae_forward.44} parent=0 // pred_region
    _
  $region25: #{vae_forward.44} parent=0 // pred_fallthru
    _
  // Predicated region
  $region26: #{vae_forward.44} parent=0 // pred_check
    _
  $region27: #{vae_forward.44} parent=0 // pred_check_branch
    %802 = sbr.rel (0) target = $region29
  $region28: #{vae_forward.44} parent=0 // pred_region
    _
  $region29: #{vae_forward.44} parent=0 // pred_fallthru
    _

</llo_original>
